<compile_context>
chip_gen: v7x
topology: tpu7x:2x2x1
jax: 0.10.0
libtpu: 0.0.40
codegen_flags: <defaults>
</compile_context>

<pallas_src>
import functools

import jax
import jax.numpy as jnp
from jax.experimental import pallas as pl
from jax.experimental.pallas import tpu as pltpu

EPS = 1e-5                       # nn.BatchNorm2d default eps
CPAD = 128                       # lane-dense output width for every kernel
_ACT_DTYPE = jnp.bfloat16        # MXU operand dtype (activations / weights); stats stay f32
_VMEM_LIMIT = 48 * 1024 * 1024   # <= ~48 MiB so it also fits v7x's 64 MiB VMEM
_CONV_COUT = (16, 32, 32)        # real output channels of conv1/2/3 (fixed DQN architecture)
_K, _S = 5, 2                    # conv kernel size / stride


def _round_up(x, m):
    return (x + m - 1) // m * m


def _vmem():
    return pl.BlockSpec(memory_space=pltpu.MemorySpace.VMEM)


def _cparams(dims=None):
    if dims is None:
        return pltpu.CompilerParams(vmem_limit_bytes=_VMEM_LIMIT)
    return pltpu.CompilerParams(dimension_semantics=dims,
                                vmem_limit_bytes=_VMEM_LIMIT)


def conv_size_out(size, k=_K, s=_S):
    return (size - (k - 1) - 1) // s + 1


# ---------------------------------------------------------------------------
# Pallas kernels
# ---------------------------------------------------------------------------
def _conv1_stats_kernel(x_ref, w_ref, raw_ref, stats_ref):
    """conv1 pass A: one K=75 im2col matmul per M-tile + per-tile partial BN stats.

    Grid axis is "arbitrary": stats_ref's block is revisited every step (P3 accumulator).
    x_ref: (TM, 25*Cin) bf16   w_ref: (25*Cin, 128) bf16
    raw_ref: (TM, 128) f32     stats_ref: (2, 128) f32  [sum; sum of squares]
    """
    acc = jnp.dot(x_ref[...], w_ref[...], preferred_element_type=jnp.float32)
    raw_ref[...] = acc
    s1 = jnp.sum(acc, axis=0, keepdims=True)
    s2 = jnp.sum(acc * acc, axis=0, keepdims=True)

    @pl.when(pl.program_id(0) == 0)
    def _():
        stats_ref[...] = jnp.zeros_like(stats_ref)

    stats_ref[...] += jnp.concatenate([s1, s2], axis=0)


def _bn_relu_kernel(raw_ref, stats_ref, gb_ref, o_ref, *, inv_m):
    """conv1 pass B: normalize + ReLU one M-tile with the global batch statistics.

    Grid axis is "parallel" -> the two v7x TensorCores split the row tiles.
    """
    mean = stats_ref[0:1, :] * inv_m
    var = jnp.maximum(stats_ref[1:2, :] * inv_m - mean * mean, 0.0)
    scale = gb_ref[0:1, :] * jax.lax.rsqrt(var + EPS)
    shift = gb_ref[1:2, :] - mean * scale
    o_ref[...] = jnp.maximum(raw_ref[...] * scale + shift, 0.0).astype(o_ref.dtype)


def _conv_bn_relu_kernel(x_ref, w_ref, gb_ref, o_ref, *, m_rows, rbp, inv_m):
    """Fused 5x5/stride-2 conv (5 shifted matmuls over row-parity slabs) + train BN + ReLU.

    x_ref : (2, (Ho+2)*rbp, 5*Cin) bf16  width taps unrolled into lanes, rbp multiple of 8
            so every tap slice below starts on a sublane boundary.
    w_ref : (5, 5*Cin, 128) bf16         per-row-tap weights, lanes zero-padded to 128.
    gb_ref: (2, 128) f32                 packed (gamma, beta); padded channels are 0.
    o_ref : (m_rows, 128) bf16           rows ordered (ho, inner-block), lane-dense store.
    Zero-padded inner rows give zero conv output -> contribute 0 to sum/sumsq, so one-pass
    stats with inv_m = 1/real_rows stay exact.  (One-pass E[x^2]-E[x]^2 in f32; slight drift
    vs torch possible when |mean| >> std.)
    """
    acc = jnp.zeros((m_rows, o_ref.shape[1]), jnp.float32)
    for i in range(_K):                        # conv row taps
        p, a = i % _S, i // _S                 # input-row parity / slab row offset
        start = a * rbp                        # multiple of 8 -> aligned sublane window
        xs = x_ref[p, start:start + m_rows, :]
        acc = acc + jnp.dot(xs, w_ref[i], preferred_element_type=jnp.float32)
    s1 = jnp.sum(acc, axis=0, keepdims=True)
    s2 = jnp.sum(acc * acc, axis=0, keepdims=True)
    mean = s1 * inv_m
    var = jnp.maximum(s2 * inv_m - mean * mean, 0.0)
    scale = gb_ref[0:1, :] * jax.lax.rsqrt(var + EPS)
    shift = gb_ref[1:2, :] - mean * scale
    o_ref[...] = jnp.maximum(acc * scale + shift, 0.0).astype(o_ref.dtype)


def _conv_bn_relu_head_kernel(x_ref, w_ref, gb_ref, wh_ref, bh_ref, o_ref, *,
                              m_rows, rbp, inv_m, n_batch, ho, wo):
    """conv3 + BN + ReLU + linear head in one kernel.

    conv3's output rows are ordered (ho, [wo, n] padded to rbp), so each (ho, wo) spatial
    position is a contiguous block of n_batch rows -> the head is a sum of small 128x128
    matmuls over VMEM-resident data, no HBM round trip / transpose in between.
    wh_ref: (ho*wo, 128, 128) bf16   bh_ref: (1, 128) f32   o_ref: (n_batch, 128) f32
    """
    acc = jnp.zeros((m_rows, CPAD), jnp.float32)
    for i in range(_K):
        p, a = i % _S, i // _S
        xs = x_ref[p, a * rbp:a * rbp + m_rows, :]
        acc = acc + jnp.dot(xs, w_ref[i], preferred_element_type=jnp.float32)
    s1 = jnp.sum(acc, axis=0, keepdims=True)
    s2 = jnp.sum(acc * acc, axis=0, keepdims=True)
    mean = s1 * inv_m
    var = jnp.maximum(s2 * inv_m - mean * mean, 0.0)
    scale = gb_ref[0:1, :] * jax.lax.rsqrt(var + EPS)
    shift = gb_ref[1:2, :] - mean * scale
    y = jnp.maximum(acc * scale + shift, 0.0).astype(wh_ref.dtype)   # (m_rows, 128) bf16

    out = jnp.zeros((n_batch, o_ref.shape[1]), jnp.float32)
    for hh in range(ho):                      # torch flatten folded into wh_ref at pack time
        for ww in range(wo):
            start = hh * rbp + ww * n_batch   # real rows only; padded junk rows never read
            rows = y[start:start + n_batch, :]
            out = out + jnp.dot(rows, wh_ref[hh * wo + ww],
                                preferred_element_type=jnp.float32)
    o_ref[...] = out + bh_ref[...]


# ---------------------------------------------------------------------------
# pallas_call wrappers
# ---------------------------------------------------------------------------
def conv1_gridded(im2col, w1, gb1, real_rows, tile_m):
    rows_p, kdim = im2col.shape
    grid = rows_p // tile_m
    raw, stats = pl.pallas_call(
        _conv1_stats_kernel,
        out_shape=(jax.ShapeDtypeStruct((rows_p, CPAD), jnp.float32),
                   jax.ShapeDtypeStruct((2, CPAD), jnp.float32)),
        grid=(grid,),
        in_specs=[pl.BlockSpec((tile_m, kdim), lambda i: (i, 0)),
                  pl.BlockSpec((kdim, CPAD), lambda i: (0, 0))],
        out_specs=(pl.BlockSpec((tile_m, CPAD), lambda i: (i, 0)),
                   pl.BlockSpec((2, CPAD), lambda i: (0, 0))),
        compiler_params=_cparams(("arbitrary",)),
    )(im2col, w1)
    out = pl.pallas_call(
        functools.partial(_bn_relu_kernel, inv_m=1.0 / real_rows),
        out_shape=jax.ShapeDtypeStruct((rows_p, CPAD), _ACT_DTYPE),
        grid=(grid,),
        in_specs=[pl.BlockSpec((tile_m, CPAD), lambda i: (i, 0)),
                  pl.BlockSpec((2, CPAD), lambda i: (0, 0)),
                  pl.BlockSpec((2, CPAD), lambda i: (0, 0))],
        out_specs=pl.BlockSpec((tile_m, CPAD), lambda i: (i, 0)),
        compiler_params=_cparams(("parallel",)),
    )(raw, stats, gb1)
    return out


def conv_bn_relu(slab, w_taps, gb, m_rows, rbp, inv_m):
    kern = functools.partial(_conv_bn_relu_kernel, m_rows=m_rows, rbp=rbp, inv_m=inv_m)
    return pl.pallas_call(
        kern,
        out_shape=jax.ShapeDtypeStruct((m_rows, CPAD), _ACT_DTYPE),
        in_specs=[_vmem(), _vmem(), _vmem()],
        out_specs=_vmem(),
        compiler_params=_cparams(),
    )(slab, w_taps, gb)


def conv_bn_relu_head(slab, w_taps, gb, wh, bh, *, m_rows, rbp, inv_m, n_batch, ho, wo):
    kern = functools.partial(_conv_bn_relu_head_kernel, m_rows=m_rows, rbp=rbp,
                             inv_m=inv_m, n_batch=n_batch, ho=ho, wo=wo)
    return pl.pallas_call(
        kern,
        out_shape=jax.ShapeDtypeStruct((n_batch, CPAD), jnp.float32),
        in_specs=[_vmem(), _vmem(), _vmem(), _vmem(), _vmem()],
        out_specs=_vmem(),
        compiler_params=_cparams(),
    )(slab, w_taps, gb, wh, bh)


# ---------------------------------------------------------------------------
# Host glue: im2col / slab building, parameter init & packing, forward
# ---------------------------------------------------------------------------
def build_conv1_im2col(x_nhwc, tile_m):
    """(N,H,W,C) -> (rows_p, 25*C) bf16 full im2col, rows ordered (ho, n, wo), zero-padded to
    a multiple of tile_m (zero rows contribute 0 to the BN sums -> stats stay exact)."""
    N, H, W, C = x_nhwc.shape
    Ho, Wo = conv_size_out(H), conv_size_out(W)
    cols = jnp.concatenate(
        [x_nhwc[:, i:i + _S * (Ho - 1) + 1:_S, j:j + _S * (Wo - 1) + 1:_S, :]
         for i in range(_K) for j in range(_K)], axis=-1)           # (N, Ho, Wo, 25*C)
    rows = jnp.transpose(cols, (1, 0, 2, 3)).reshape(Ho * N * Wo, _K * _K * C)
    real = rows.shape[0]
    rows_p = _round_up(real, tile_m)
    rows = jnp.pad(rows, ((0, rows_p - real), (0, 0)))
    return rows.astype(_ACT_DTYPE), Ho, Wo, real


def build_row_slabs(x_hnwc, inner_order="nw"):
    """(H,N,W,C) -> (2, (Ho+2)*rbp, 5*C) bf16 stride-2 row-parity slabs.

    Only the 5 width taps are unrolled into lanes (~2.5x bytes, not 25x); the per-row inner
    block (N*Wo) is zero-padded to rbp = multiple of 8 so in-kernel tap slices are
    sublane-aligned and stores unmasked.  inner_order "wn" puts (wo, n) innermost, which the
    fused conv3+head kernel needs (contiguous per-position rows)."""
    H, N, W, C = x_hnwc.shape
    Ho, Wo = conv_size_out(H), conv_size_out(W)
    Hh = Ho + 2                                  # == ceil(H/2) for k=5, s=2
    cols = jnp.concatenate(
        [x_hnwc[:, :, j:j + _S * (Wo - 1) + 1:_S, :] for j in range(_K)], axis=-1)
    if inner_order == "wn":
        cols = jnp.transpose(cols, (0, 2, 1, 3))                    # (H, Wo, N, 5*C)
    inner = N * Wo
    rbp = _round_up(inner, 8)
    cols = jnp.pad(cols.reshape(H, inner, _K * C), ((0, 0), (0, rbp - inner), (0, 0)))
    slabs = []
    for p in range(_S):
        xp = cols[p::_S]                         # rows of parity p
        if xp.shape[0] < Hh:                     # odd H: pad the short parity (never read)
            xp = jnp.pad(xp, ((0, Hh - xp.shape[0]), (0, 0), (0, 0)))
        slabs.append(xp.reshape(Hh * rbp, _K * C))
    return jnp.stack(slabs).astype(_ACT_DTYPE), Ho, Wo, rbp


def init_params(key, h, w, outputs):
    convw = conv_size_out(conv_size_out(conv_size_out(w)))
    convh = conv_size_out(conv_size_out(conv_size_out(h)))
    lin_in = convw * convh * 32

    keys = jax.random.split(key, 16)
    params = {}
    specs = [("c1", 3, 16), ("c2", 16, 32), ("c3", 32, 32)]
    ki = 0
    for name, cin, cout in specs:
        wconv = 0.05 * jax.random.normal(keys[ki], (cout, cin, _K, _K), jnp.float32)
        # Conv bias mirrors nn.Conv2d but is never used: train-mode BN subtracts the batch
        # mean per channel, which cancels a bias exactly.
        bconv = 0.05 * jax.random.normal(keys[ki + 1], (cout,), jnp.float32)
        gamma = 1.0 + 0.1 * jax.random.normal(keys[ki + 2], (cout,), jnp.float32)
        beta = 0.1 * jax.random.normal(keys[ki + 3], (cout,), jnp.float32)
        params[name] = (wconv, bconv, gamma, beta)
        ki += 4
    w_head = 0.05 * jax.random.normal(keys[ki], (lin_in, outputs), jnp.float32)
    b_head = 0.05 * jax.random.normal(keys[ki + 1], (outputs,), jnp.float32)
    params["head"] = (w_head, b_head)
    return params


def pack_params(params, h, w):
    """One-time repack of torch-layout params into bf16, padded, kernel-friendly layout."""
    packed = {}
    # conv1: full 25-tap im2col weight (75, 128), row order (kh, kw, cin) to match the im2col.
    w1, _b1, g1, be1 = params["c1"]
    cout1, cin1 = w1.shape[0], w1.shape[1]
    w1k = jnp.transpose(w1, (2, 3, 1, 0)).reshape(_K * _K * cin1, cout1)
    w1k = jnp.pad(w1k, ((0, 0), (0, CPAD - cout1))).astype(_ACT_DTYPE)
    gb1 = jnp.stack([jnp.pad(g1, (0, CPAD - cout1)), jnp.pad(be1, (0, CPAD - cout1))])
    packed["c1"] = (w1k, gb1)
    # conv2/conv3: per-row-tap weights (5, 5*cin, 128), rows ordered (kw, cin) = slab lanes.
    for name in ("c2", "c3"):
        wconv, _b, gamma, beta = params[name]
        cout, cin = wconv.shape[0], wconv.shape[1]
        w_taps = jnp.transpose(wconv, (2, 3, 1, 0)).reshape(_K, _K * cin, cout)
        w_taps = jnp.pad(w_taps, ((0, 0), (0, 0), (0, CPAD - cout))).astype(_ACT_DTYPE)
        gb = jnp.stack([jnp.pad(gamma, (0, CPAD - cout)), jnp.pad(beta, (0, CPAD - cout))])
        packed[name] = (w_taps, gb)
    # Head: fold torch's NCHW channel-major flatten (x.view(N,-1), index = c*H*W + ho*W + wo)
    # into per-(ho,wo) 128x128 blocks consumed directly by the fused conv3+head kernel.
    w_head, b_head = params["head"]
    convw = conv_size_out(conv_size_out(conv_size_out(w)))
    convh = conv_size_out(conv_size_out(conv_size_out(h)))
    c3 = _CONV_COUT[-1]
    outs = w_head.shape[1]
    w3d = w_head.reshape(c3, convh, convw, outs)
    blocks = []
    for ho in range(convh):
        for wo in range(convw):
            blocks.append(jnp.pad(w3d[:, ho, wo, :], ((0, CPAD - c3), (0, CPAD - outs))))
    wh = jnp.stack(blocks).astype(_ACT_DTYPE)            # (convh*convw, 128, 128)
    bh = jnp.pad(b_head, (0, CPAD - outs)).reshape(1, CPAD)
    packed["head"] = (wh, bh)
    return packed


def dqn_forward(packed, x_nchw, num_outputs):
    n, _, h, w = x_nchw.shape
    x_nhwc = jnp.transpose(x_nchw, (0, 2, 3, 1)).astype(jnp.float32)

    # ---- conv1: M-gridded full-im2col conv + two-pass train-mode BN + ReLU ----
    ho1, wo1 = conv_size_out(h), conv_size_out(w)
    real1 = ho1 * n * wo1
    tile_m = min(512, _round_up(real1, 8))
    im2col, _, _, _ = build_conv1_im2col(x_nhwc, tile_m)
    w1k, gb1 = packed["c1"]
    y1 = conv1_gridded(im2col, w1k, gb1, real1, tile_m)           # (rows_p, 128) bf16
    x1 = y1[:real1].reshape(ho1, n, wo1, CPAD)[..., :_CONV_COUT[0]]

    # ---- conv2: fused conv + BN + ReLU (ungridded; rows shrink 16x after two stride-2s) ----
    w2t, gb2 = packed["c2"]
    slab2, ho2, wo2, rbp2 = build_row_slabs(x1, "nw")
    m2 = ho2 * rbp2
    y2 = conv_bn_relu(slab2, w2t, gb2, m2, rbp2, 1.0 / (ho2 * n * wo2))
    x2 = (y2.reshape(ho2, rbp2, CPAD)[:, :n * wo2, :]
            .reshape(ho2, n, wo2, CPAD)[..., :_CONV_COUT[1]])

    # ---- conv3 + head fused in one kernel: conv3's output never leaves VMEM ----
    w3t, gb3 = packed["c3"]
    wh, bh = packed["head"]
    slab3, ho3, wo3, rbp3 = build_row_slabs(x2, "wn")
    m3 = ho3 * rbp3
    out = conv_bn_relu_head(slab3, w3t, gb3, wh, bh, m_rows=m3, rbp=rbp3,
                            inv_m=1.0 / (ho3 * n * wo3), n_batch=n, ho=ho3, wo=wo3)
    return out[:, :num_outputs]


if __name__ == "__main__":
    key = jax.random.PRNGKey(0)
    h, w, outputs, batch = 40, 40, 4, 2
    pkey, xkey = jax.random.split(key)
    params = init_params(pkey, h, w, outputs)
    packed = pack_params(params, h, w)
    x = jax.random.normal(xkey, (batch, 3, h, w), jnp.float32)    # NCHW input, like PyTorch

    fwd = jax.jit(dqn_forward, static_argnames=("num_outputs",))
    out = fwd(packed, x, num_outputs=outputs)
    jax.block_until_ready(out)
    assert out.shape == (batch, outputs), out.shape
    print("KERNEL_OK")
</pallas_src>

<mosaic_0001>
module attributes {stable_mosaic.version = 11 : i64} {
  func.func @_conv1_stats_kernel(%arg0: i32, %arg1: memref<512x75xbf16, #tpu.memory_space<vmem>>, %arg2: memref<75x128xbf16, #tpu.memory_space<vmem>>, %arg3: memref<512x128xf32, #tpu.memory_space<vmem>>, %arg4: memref<2x128xf32, #tpu.memory_space<vmem>>) attributes {dimension_semantics = [#tpu.dimension_semantics<arbitrary>], iteration_bounds = array<i64: 2>, scalar_prefetch = 0 : i64, scratch_operands = 0 : i64, tpu.core_type = #tpu.core_type<tc>, window_params = [{transform_indices = @transform_0, window_bounds = array<i64: 512, 75>}, {pipeline_mode = #tpu.pipeline_mode<synchronous>, transform_indices = @transform_1, window_bounds = array<i64: 75, 128>}, {transform_indices = @transform_2, window_bounds = array<i64: 512, 128>}, {pipeline_mode = #tpu.pipeline_mode<synchronous>, transform_indices = @transform_3, window_bounds = array<i64: 2, 128>}]} {
    %c0 = arith.constant 0 : index
    %c0_0 = arith.constant 0 : index
    %0 = vector.load %arg1[%c0, %c0_0] : memref<512x75xbf16, #tpu.memory_space<vmem>>, vector<512x75xbf16>
    %c0_1 = arith.constant 0 : index
    %c0_2 = arith.constant 0 : index
    %1 = vector.load %arg2[%c0_1, %c0_2] : memref<75x128xbf16, #tpu.memory_space<vmem>>, vector<75x128xbf16>
    %cst = arith.constant dense<0.000000e+00> : vector<512x128xf32>
    %2 = tpu.matmul %0, %1, %cst {dimension_numbers = #tpu.dot_dimension_numbers<[1], [0], [0], [1], [0, 0, 1, 1], [], []>} : vector<512x75xbf16>, vector<75x128xbf16>, vector<512x128xf32> -> vector<512x128xf32>
    %c0_3 = arith.constant 0 : index
    %c0_4 = arith.constant 0 : index
    %3 = vector.load %arg3[%c0_3, %c0_4] : memref<512x128xf32, #tpu.memory_space<vmem>>, vector<512x128xf32>
    tpu.vector_store %arg3[%c0_3, %c0_4], %2 {strides = array<i32>} : memref<512x128xf32, #tpu.memory_space<vmem>>, vector<512x128xf32>,
    %cst_5 = arith.constant dense<0.000000e+00> : vector<128xf32>
    %4 = vector.multi_reduction <add>, %2, %cst_5 [0] : vector<512x128xf32> to vector<128xf32>
    %5 = vector.shape_cast %4 : vector<128xf32> to vector<1x128xf32>
    %6 = arith.mulf %2, %2 : vector<512x128xf32>
    %cst_6 = arith.constant dense<0.000000e+00> : vector<128xf32>
    %7 = vector.multi_reduction <add>, %6, %cst_6 [0] : vector<512x128xf32> to vector<128xf32>
    %8 = vector.shape_cast %7 : vector<128xf32> to vector<1x128xf32>
    %c0_i32 = arith.constant 0 : i32
    %9 = arith.cmpi eq, %arg0, %c0_i32 : i32
    %10 = arith.extui %9 : i1 to i32
    %c0_i32_7 = arith.constant 0 : i32
    %11 = arith.cmpi ne, %10, %c0_i32_7 : i32
    scf.if %11 {
      %cst_12 = arith.constant 0.000000e+00 : f32
      %16 = vector.broadcast %cst_12 : f32 to vector<2x128xf32>
      %c0_13 = arith.constant 0 : index
      %c0_14 = arith.constant 0 : index
      %17 = vector.load %arg4[%c0_13, %c0_14] : memref<2x128xf32, #tpu.memory_space<vmem>>, vector<2x128xf32>
      tpu.vector_store %arg4[%c0_13, %c0_14], %16 {strides = array<i32>} : memref<2x128xf32, #tpu.memory_space<vmem>>, vector<2x128xf32>,
    } else {
    }
    %c0_8 = arith.constant 0 : index
    %c0_9 = arith.constant 0 : index
    %12 = vector.load %arg4[%c0_8, %c0_9] : memref<2x128xf32, #tpu.memory_space<vmem>>, vector<2x128xf32>
    %13 = tpu.concatenate %5, %8 in 0 : vector<1x128xf32>, vector<1x128xf32> -> vector<2x128xf32>
    %14 = arith.addf %12, %13 : vector<2x128xf32>
    %c0_10 = arith.constant 0 : index
    %c0_11 = arith.constant 0 : index
    %15 = vector.load %arg4[%c0_10, %c0_11] : memref<2x128xf32, #tpu.memory_space<vmem>>, vector<2x128xf32>
    tpu.vector_store %arg4[%c0_10, %c0_11], %14 {strides = array<i32>} : memref<2x128xf32, #tpu.memory_space<vmem>>, vector<2x128xf32>,
    return
  }
  func.func @transform_0(%arg0: i32) -> (i32, i32) {
    %c0_i32 = arith.constant 0 : i32
    %c0_i32_0 = arith.constant 0 : i32
    return %arg0, %c0_i32 : i32, i32
  }
  func.func @transform_1(%arg0: i32) -> (i32, i32) {
    %c0_i32 = arith.constant 0 : i32
    %c0_i32_0 = arith.constant 0 : i32
    %c0_i32_1 = arith.constant 0 : i32
    return %c0_i32, %c0_i32_0 : i32, i32
  }
  func.func @transform_2(%arg0: i32) -> (i32, i32) {
    %c0_i32 = arith.constant 0 : i32
    %c0_i32_0 = arith.constant 0 : i32
    return %arg0, %c0_i32 : i32, i32
  }
  func.func @transform_3(%arg0: i32) -> (i32, i32) {
    %c0_i32 = arith.constant 0 : i32
    %c0_i32_0 = arith.constant 0 : i32
    %c0_i32_1 = arith.constant 0 : i32
    return %c0_i32, %c0_i32_0 : i32, i32
  }
}

module attributes {stable_mosaic.version = 11 : i64} {
  func.func @_bn_relu_kernel(%arg0: i32, %arg1: memref<512x128xf32, #tpu.memory_space<vmem>>, %arg2: memref<2x128xf32, #tpu.memory_space<vmem>>, %arg3: memref<2x128xf32, #tpu.memory_space<vmem>>, %arg4: memref<512x128xbf16, #tpu.memory_space<vmem>>) attributes {dimension_semantics = [#tpu.dimension_semantics<parallel>], iteration_bounds = array<i64: 2>, scalar_prefetch = 0 : i64, scratch_operands = 0 : i64, tpu.core_type = #tpu.core_type<tc>, window_params = [{transform_indices = @transform_0, window_bounds = array<i64: 512, 128>}, {pipeline_mode = #tpu.pipeline_mode<synchronous>, transform_indices = @transform_1, window_bounds = array<i64: 2, 128>}, {pipeline_mode = #tpu.pipeline_mode<synchronous>, transform_indices = @transform_2, window_bounds = array<i64: 2, 128>}, {transform_indices = @transform_3, window_bounds = array<i64: 512, 128>}]} {
    %c0 = arith.constant 0 : index
    %c0_0 = arith.constant 0 : index
    %0 = vector.load %arg2[%c0, %c0_0] : memref<2x128xf32, #tpu.memory_space<vmem>>, vector<1x128xf32>
    %cst = arith.constant 0.00154320989 : f32
    %1 = vector.broadcast %cst : f32 to vector<1x128xf32>
    %2 = arith.mulf %0, %1 : vector<1x128xf32>
    %c1 = arith.constant 1 : index
    %c0_1 = arith.constant 0 : index
    %3 = vector.load %arg2[%c1, %c0_1] : memref<2x128xf32, #tpu.memory_space<vmem>>, vector<1x128xf32>
    %cst_2 = arith.constant 0.00154320989 : f32
    %4 = vector.broadcast %cst_2 : f32 to vector<1x128xf32>
    %5 = arith.mulf %3, %4 : vector<1x128xf32>
    %6 = arith.mulf %2, %2 : vector<1x128xf32>
    %7 = arith.subf %5, %6 : vector<1x128xf32>
    %cst_3 = arith.constant 0.000000e+00 : f32
    %8 = vector.broadcast %cst_3 : f32 to vector<1x128xf32>
    %9 = arith.maximumf %7, %8 : vector<1x128xf32>
    %c0_4 = arith.constant 0 : index
    %c0_5 = arith.constant 0 : index
    %10 = vector.load %arg3[%c0_4, %c0_5] : memref<2x128xf32, #tpu.memory_space<vmem>>, vector<1x128xf32>
    %cst_6 = arith.constant 9.99999974E-6 : f32
    %11 = vector.broadcast %cst_6 : f32 to vector<1x128xf32>
    %12 = arith.addf %9, %11 : vector<1x128xf32>
    %13 = math.rsqrt %12 : vector<1x128xf32>
    %14 = arith.mulf %10, %13 : vector<1x128xf32>
    %c1_7 = arith.constant 1 : index
    %c0_8 = arith.constant 0 : index
    %15 = vector.load %arg3[%c1_7, %c0_8] : memref<2x128xf32, #tpu.memory_space<vmem>>, vector<1x128xf32>
    %16 = arith.mulf %2, %14 : vector<1x128xf32>
    %17 = arith.subf %15, %16 : vector<1x128xf32>
    %c0_9 = arith.constant 0 : index
    %c0_10 = arith.constant 0 : index
    %18 = vector.load %arg1[%c0_9, %c0_10] : memref<512x128xf32, #tpu.memory_space<vmem>>, vector<512x128xf32>
    %19 = vector.broadcast %14 : vector<1x128xf32> to vector<512x128xf32>
    %20 = arith.mulf %18, %19 : vector<512x128xf32>
    %21 = vector.broadcast %17 : vector<1x128xf32> to vector<512x128xf32>
    %22 = arith.addf %20, %21 : vector<512x128xf32>
    %cst_11 = arith.constant 0.000000e+00 : f32
    %23 = vector.broadcast %cst_11 : f32 to vector<512x128xf32>
    %24 = arith.maximumf %22, %23 : vector<512x128xf32>
    %25 = arith.truncf %24 : vector<512x128xf32> to vector<512x128xbf16>
    %c0_12 = arith.constant 0 : index
    %c0_13 = arith.constant 0 : index
    %26 = vector.load %arg4[%c0_12, %c0_13] : memref<512x128xbf16, #tpu.memory_space<vmem>>, vector<512x128xbf16>
    tpu.vector_store %arg4[%c0_12, %c0_13], %25 {strides = array<i32>} : memref<512x128xbf16, #tpu.memory_space<vmem>>, vector<512x128xbf16>,
    return
  }
  func.func @transform_0(%arg0: i32) -> (i32, i32) {
    %c0_i32 = arith.constant 0 : i32
    %c0_i32_0 = arith.constant 0 : i32
    return %arg0, %c0_i32 : i32, i32
  }
  func.func @transform_1(%arg0: i32) -> (i32, i32) {
    %c0_i32 = arith.constant 0 : i32
    %c0_i32_0 = arith.constant 0 : i32
    %c0_i32_1 = arith.constant 0 : i32
    return %c0_i32, %c0_i32_0 : i32, i32
  }
  func.func @transform_2(%arg0: i32) -> (i32, i32) {
    %c0_i32 = arith.constant 0 : i32
    %c0_i32_0 = arith.constant 0 : i32
    %c0_i32_1 = arith.constant 0 : i32
    return %c0_i32, %c0_i32_0 : i32, i32
  }
  func.func @transform_3(%arg0: i32) -> (i32, i32) {
    %c0_i32 = arith.constant 0 : i32
    %c0_i32_0 = arith.constant 0 : i32
    return %arg0, %c0_i32 : i32, i32
  }
}

module attributes {stable_mosaic.version = 11 : i64} {
  func.func @_conv_bn_relu_kernel(%arg0: memref<2x144x80xbf16, #tpu.memory_space<vmem>>, %arg1: memref<5x80x128xbf16, #tpu.memory_space<vmem>>, %arg2: memref<2x128xf32, #tpu.memory_space<vmem>>, %arg3: memref<112x128xbf16, #tpu.memory_space<vmem>>) attributes {dimension_semantics = [], scalar_prefetch = 0 : i64, scratch_operands = 0 : i64, tpu.core_type = #tpu.core_type<tc>} {
    %cst = arith.constant 0.000000e+00 : f32
    %0 = vector.broadcast %cst : f32 to vector<112x128xf32>
    %c0 = arith.constant 0 : index
    %c0_0 = arith.constant 0 : index
    %c0_1 = arith.constant 0 : index
    %1 = vector.load %arg0[%c0, %c0_0, %c0_1] : memref<2x144x80xbf16, #tpu.memory_space<vmem>>, vector<1x112x80xbf16>
    %2 = vector.shape_cast %1 : vector<1x112x80xbf16> to vector<112x80xbf16>
    %c0_2 = arith.constant 0 : index
    %c0_3 = arith.constant 0 : index
    %c0_4 = arith.constant 0 : index
    %3 = vector.load %arg1[%c0_2, %c0_3, %c0_4] : memref<5x80x128xbf16, #tpu.memory_space<vmem>>, vector<1x80x128xbf16>
    %4 = vector.shape_cast %3 : vector<1x80x128xbf16> to vector<80x128xbf16>
    %cst_5 = arith.constant dense<0.000000e+00> : vector<112x128xf32>
    %5 = tpu.matmul %2, %4, %cst_5 {dimension_numbers = #tpu.dot_dimension_numbers<[1], [0], [0], [1], [0, 0, 1, 1], [], []>} : vector<112x80xbf16>, vector<80x128xbf16>, vector<112x128xf32> -> vector<112x128xf32>
    %6 = arith.addf %0, %5 : vector<112x128xf32>
    %c1 = arith.constant 1 : index
    %c0_6 = arith.constant 0 : index
    %c0_7 = arith.constant 0 : index
    %7 = vector.load %arg0[%c1, %c0_6, %c0_7] : memref<2x144x80xbf16, #tpu.memory_space<vmem>>, vector<1x112x80xbf16>
    %8 = vector.shape_cast %7 : vector<1x112x80xbf16> to vector<112x80xbf16>
    %c1_8 = arith.constant 1 : index
    %c0_9 = arith.constant 0 : index
    %c0_10 = arith.constant 0 : index
    %9 = vector.load %arg1[%c1_8, %c0_9, %c0_10] : memref<5x80x128xbf16, #tpu.memory_space<vmem>>, vector<1x80x128xbf16>
    %10 = vector.shape_cast %9 : vector<1x80x128xbf16> to vector<80x128xbf16>
    %cst_11 = arith.constant dense<0.000000e+00> : vector<112x128xf32>
    %11 = tpu.matmul %8, %10, %cst_11 {dimension_numbers = #tpu.dot_dimension_numbers<[1], [0], [0], [1], [0, 0, 1, 1], [], []>} : vector<112x80xbf16>, vector<80x128xbf16>, vector<112x128xf32> -> vector<112x128xf32>
    %12 = arith.addf %6, %11 : vector<112x128xf32>
    %c0_12 = arith.constant 0 : index
    %c16 = arith.constant 16 : index
    %c0_13 = arith.constant 0 : index
    %13 = vector.load %arg0[%c0_12, %c16, %c0_13] : memref<2x144x80xbf16, #tpu.memory_space<vmem>>, vector<1x112x80xbf16>
    %14 = vector.shape_cast %13 : vector<1x112x80xbf16> to vector<112x80xbf16>
    %c2 = arith.constant 2 : index
    %c0_14 = arith.constant 0 : index
    %c0_15 = arith.constant 0 : index
    %15 = vector.load %arg1[%c2, %c0_14, %c0_15] : memref<5x80x128xbf16, #tpu.memory_space<vmem>>, vector<1x80x128xbf16>
    %16 = vector.shape_cast %15 : vector<1x80x128xbf16> to vector<80x128xbf16>
    %cst_16 = arith.constant dense<0.000000e+00> : vector<112x128xf32>
    %17 = tpu.matmul %14, %16, %cst_16 {dimension_numbers = #tpu.dot_dimension_numbers<[1], [0], [0], [1], [0, 0, 1, 1], [], []>} : vector<112x80xbf16>, vector<80x128xbf16>, vector<112x128xf32> -> vector<112x128xf32>
    %18 = arith.addf %12, %17 : vector<112x128xf32>
    %c1_17 = arith.constant 1 : index
    %c16_18 = arith.constant 16 : index
    %c0_19 = arith.constant 0 : index
    %19 = vector.load %arg0[%c1_17, %c16_18, %c0_19] : memref<2x144x80xbf16, #tpu.memory_space<vmem>>, vector<1x112x80xbf16>
    %20 = vector.shape_cast %19 : vector<1x112x80xbf16> to vector<112x80xbf16>
    %c3 = arith.constant 3 : index
    %c0_20 = arith.constant 0 : index
    %c0_21 = arith.constant 0 : index
    %21 = vector.load %arg1[%c3, %c0_20, %c0_21] : memref<5x80x128xbf16, #tpu.memory_space<vmem>>, vector<1x80x128xbf16>
    %22 = vector.shape_cast %21 : vector<1x80x128xbf16> to vector<80x128xbf16>
    %cst_22 = arith.constant dense<0.000000e+00> : vector<112x128xf32>
    %23 = tpu.matmul %20, %22, %cst_22 {dimension_numbers = #tpu.dot_dimension_numbers<[1], [0], [0], [1], [0, 0, 1, 1], [], []>} : vector<112x80xbf16>, vector<80x128xbf16>, vector<112x128xf32> -> vector<112x128xf32>
    %24 = arith.addf %18, %23 : vector<112x128xf32>
    %c0_23 = arith.constant 0 : index
    %c32 = arith.constant 32 : index
    %c0_24 = arith.constant 0 : index
    %25 = vector.load %arg0[%c0_23, %c32, %c0_24] : memref<2x144x80xbf16, #tpu.memory_space<vmem>>, vector<1x112x80xbf16>
    %26 = vector.shape_cast %25 : vector<1x112x80xbf16> to vector<112x80xbf16>
    %c4 = arith.constant 4 : index
    %c0_25 = arith.constant 0 : index
    %c0_26 = arith.constant 0 : index
    %27 = vector.load %arg1[%c4, %c0_25, %c0_26] : memref<5x80x128xbf16, #tpu.memory_space<vmem>>, vector<1x80x128xbf16>
    %28 = vector.shape_cast %27 : vector<1x80x128xbf16> to vector<80x128xbf16>
    %cst_27 = arith.constant dense<0.000000e+00> : vector<112x128xf32>
    %29 = tpu.matmul %26, %28, %cst_27 {dimension_numbers = #tpu.dot_dimension_numbers<[1], [0], [0], [1], [0, 0, 1, 1], [], []>} : vector<112x80xbf16>, vector<80x128xbf16>, vector<112x128xf32> -> vector<112x128xf32>
    %30 = arith.addf %24, %29 : vector<112x128xf32>
    %cst_28 = arith.constant dense<0.000000e+00> : vector<128xf32>
    %31 = vector.multi_reduction <add>, %30, %cst_28 [0] : vector<112x128xf32> to vector<128xf32>
    %32 = vector.shape_cast %31 : vector<128xf32> to vector<1x128xf32>
    %33 = arith.mulf %30, %30 : vector<112x128xf32>
    %cst_29 = arith.constant dense<0.000000e+00> : vector<128xf32>
    %34 = vector.multi_reduction <add>, %33, %cst_29 [0] : vector<112x128xf32> to vector<128xf32>
    %35 = vector.shape_cast %34 : vector<128xf32> to vector<1x128xf32>
    %cst_30 = arith.constant 0.0102040814 : f32
    %36 = vector.broadcast %cst_30 : f32 to vector<1x128xf32>
    %37 = arith.mulf %32, %36 : vector<1x128xf32>
    %cst_31 = arith.constant 0.0102040814 : f32
    %38 = vector.broadcast %cst_31 : f32 to vector<1x128xf32>
    %39 = arith.mulf %35, %38 : vector<1x128xf32>
    %40 = arith.mulf %37, %37 : vector<1x128xf32>
    %41 = arith.subf %39, %40 : vector<1x128xf32>
    %cst_32 = arith.constant 0.000000e+00 : f32
    %42 = vector.broadcast %cst_32 : f32 to vector<1x128xf32>
    %43 = arith.maximumf %41, %42 : vector<1x128xf32>
    %c0_33 = arith.constant 0 : index
    %c0_34 = arith.constant 0 : index
    %44 = vector.load %arg2[%c0_33, %c0_34] : memref<2x128xf32, #tpu.memory_space<vmem>>, vector<1x128xf32>
    %cst_35 = arith.constant 9.99999974E-6 : f32
    %45 = vector.broadcast %cst_35 : f32 to vector<1x128xf32>
    %46 = arith.addf %43, %45 : vector<1x128xf32>
    %47 = math.rsqrt %46 : vector<1x128xf32>
    %48 = arith.mulf %44, %47 : vector<1x128xf32>
    %c1_36 = arith.constant 1 : index
    %c0_37 = arith.constant 0 : index
    %49 = vector.load %arg2[%c1_36, %c0_37] : memref<2x128xf32, #tpu.memory_space<vmem>>, vector<1x128xf32>
    %50 = arith.mulf %37, %48 : vector<1x128xf32>
    %51 = arith.subf %49, %50 : vector<1x128xf32>
    %52 = vector.broadcast %48 : vector<1x128xf32> to vector<112x128xf32>
    %53 = arith.mulf %30, %52 : vector<112x128xf32>
    %54 = vector.broadcast %51 : vector<1x128xf32> to vector<112x128xf32>
    %55 = arith.addf %53, %54 : vector<112x128xf32>
    %cst_38 = arith.constant 0.000000e+00 : f32
    %56 = vector.broadcast %cst_38 : f32 to vector<112x128xf32>
    %57 = arith.maximumf %55, %56 : vector<112x128xf32>
    %58 = arith.truncf %57 : vector<112x128xf32> to vector<112x128xbf16>
    %c0_39 = arith.constant 0 : index
    %c0_40 = arith.constant 0 : index
    %59 = vector.load %arg3[%c0_39, %c0_40] : memref<112x128xbf16, #tpu.memory_space<vmem>>, vector<112x128xbf16>
    tpu.vector_store %arg3[%c0_39, %c0_40], %58 {strides = array<i32>} : memref<112x128xbf16, #tpu.memory_space<vmem>>, vector<112x128xbf16>,
    return
  }
}

module attributes {stable_mosaic.version = 11 : i64} {
  func.func @_conv_bn_relu_head_kernel(%arg0: memref<2x32x160xbf16, #tpu.memory_space<vmem>>, %arg1: memref<5x160x128xbf16, #tpu.memory_space<vmem>>, %arg2: memref<2x128xf32, #tpu.memory_space<vmem>>, %arg3: memref<4x128x128xbf16, #tpu.memory_space<vmem>>, %arg4: memref<1x128xf32, #tpu.memory_space<vmem>>, %arg5: memref<2x128xf32, #tpu.memory_space<vmem>>) attributes {dimension_semantics = [], scalar_prefetch = 0 : i64, scratch_operands = 0 : i64, tpu.core_type = #tpu.core_type<tc>} {
    %cst = arith.constant 0.000000e+00 : f32
    %0 = vector.broadcast %cst : f32 to vector<16x128xf32>
    %c0 = arith.constant 0 : index
    %c0_0 = arith.constant 0 : index
    %c0_1 = arith.constant 0 : index
    %1 = vector.load %arg0[%c0, %c0_0, %c0_1] : memref<2x32x160xbf16, #tpu.memory_space<vmem>>, vector<1x16x160xbf16>
    %2 = vector.shape_cast %1 : vector<1x16x160xbf16> to vector<16x160xbf16>
    %c0_2 = arith.constant 0 : index
    %c0_3 = arith.constant 0 : index
    %c0_4 = arith.constant 0 : index
    %3 = vector.load %arg1[%c0_2, %c0_3, %c0_4] : memref<5x160x128xbf16, #tpu.memory_space<vmem>>, vector<1x160x128xbf16>
    %4 = vector.shape_cast %3 : vector<1x160x128xbf16> to vector<160x128xbf16>
    %cst_5 = arith.constant dense<0.000000e+00> : vector<16x128xf32>
    %5 = tpu.matmul %2, %4, %cst_5 {dimension_numbers = #tpu.dot_dimension_numbers<[1], [0], [0], [1], [0, 0, 1, 1], [], []>} : vector<16x160xbf16>, vector<160x128xbf16>, vector<16x128xf32> -> vector<16x128xf32>
    %6 = arith.addf %0, %5 : vector<16x128xf32>
    %c1 = arith.constant 1 : index
    %c0_6 = arith.constant 0 : index
    %c0_7 = arith.constant 0 : index
    %7 = vector.load %arg0[%c1, %c0_6, %c0_7] : memref<2x32x160xbf16, #tpu.memory_space<vmem>>, vector<1x16x160xbf16>
    %8 = vector.shape_cast %7 : vector<1x16x160xbf16> to vector<16x160xbf16>
    %c1_8 = arith.constant 1 : index
    %c0_9 = arith.constant 0 : index
    %c0_10 = arith.constant 0 : index
    %9 = vector.load %arg1[%c1_8, %c0_9, %c0_10] : memref<5x160x128xbf16, #tpu.memory_space<vmem>>, vector<1x160x128xbf16>
    %10 = vector.shape_cast %9 : vector<1x160x128xbf16> to vector<160x128xbf16>
    %cst_11 = arith.constant dense<0.000000e+00> : vector<16x128xf32>
    %11 = tpu.matmul %8, %10, %cst_11 {dimension_numbers = #tpu.dot_dimension_numbers<[1], [0], [0], [1], [0, 0, 1, 1], [], []>} : vector<16x160xbf16>, vector<160x128xbf16>, vector<16x128xf32> -> vector<16x128xf32>
    %12 = arith.addf %6, %11 : vector<16x128xf32>
    %c0_12 = arith.constant 0 : index
    %c8 = arith.constant 8 : index
    %c0_13 = arith.constant 0 : index
    %13 = vector.load %arg0[%c0_12, %c8, %c0_13] : memref<2x32x160xbf16, #tpu.memory_space<vmem>>, vector<1x16x160xbf16>
    %14 = vector.shape_cast %13 : vector<1x16x160xbf16> to vector<16x160xbf16>
    %c2 = arith.constant 2 : index
    %c0_14 = arith.constant 0 : index
    %c0_15 = arith.constant 0 : index
    %15 = vector.load %arg1[%c2, %c0_14, %c0_15] : memref<5x160x128xbf16, #tpu.memory_space<vmem>>, vector<1x160x128xbf16>
    %16 = vector.shape_cast %15 : vector<1x160x128xbf16> to vector<160x128xbf16>
    %cst_16 = arith.constant dense<0.000000e+00> : vector<16x128xf32>
    %17 = tpu.matmul %14, %16, %cst_16 {dimension_numbers = #tpu.dot_dimension_numbers<[1], [0], [0], [1], [0, 0, 1, 1], [], []>} : vector<16x160xbf16>, vector<160x128xbf16>, vector<16x128xf32> -> vector<16x128xf32>
    %18 = arith.addf %12, %17 : vector<16x128xf32>
    %c1_17 = arith.constant 1 : index
    %c8_18 = arith.constant 8 : index
    %c0_19 = arith.constant 0 : index
    %19 = vector.load %arg0[%c1_17, %c8_18, %c0_19] : memref<2x32x160xbf16, #tpu.memory_space<vmem>>, vector<1x16x160xbf16>
    %20 = vector.shape_cast %19 : vector<1x16x160xbf16> to vector<16x160xbf16>
    %c3 = arith.constant 3 : index
    %c0_20 = arith.constant 0 : index
    %c0_21 = arith.constant 0 : index
    %21 = vector.load %arg1[%c3, %c0_20, %c0_21] : memref<5x160x128xbf16, #tpu.memory_space<vmem>>, vector<1x160x128xbf16>
    %22 = vector.shape_cast %21 : vector<1x160x128xbf16> to vector<160x128xbf16>
    %cst_22 = arith.constant dense<0.000000e+00> : vector<16x128xf32>
    %23 = tpu.matmul %20, %22, %cst_22 {dimension_numbers = #tpu.dot_dimension_numbers<[1], [0], [0], [1], [0, 0, 1, 1], [], []>} : vector<16x160xbf16>, vector<160x128xbf16>, vector<16x128xf32> -> vector<16x128xf32>
    %24 = arith.addf %18, %23 : vector<16x128xf32>
    %c0_23 = arith.constant 0 : index
    %c16 = arith.constant 16 : index
    %c0_24 = arith.constant 0 : index
    %25 = vector.load %arg0[%c0_23, %c16, %c0_24] : memref<2x32x160xbf16, #tpu.memory_space<vmem>>, vector<1x16x160xbf16>
    %26 = vector.shape_cast %25 : vector<1x16x160xbf16> to vector<16x160xbf16>
    %c4 = arith.constant 4 : index
    %c0_25 = arith.constant 0 : index
    %c0_26 = arith.constant 0 : index
    %27 = vector.load %arg1[%c4, %c0_25, %c0_26] : memref<5x160x128xbf16, #tpu.memory_space<vmem>>, vector<1x160x128xbf16>
    %28 = vector.shape_cast %27 : vector<1x160x128xbf16> to vector<160x128xbf16>
    %cst_27 = arith.constant dense<0.000000e+00> : vector<16x128xf32>
    %29 = tpu.matmul %26, %28, %cst_27 {dimension_numbers = #tpu.dot_dimension_numbers<[1], [0], [0], [1], [0, 0, 1, 1], [], []>} : vector<16x160xbf16>, vector<160x128xbf16>, vector<16x128xf32> -> vector<16x128xf32>
    %30 = arith.addf %24, %29 : vector<16x128xf32>
    %cst_28 = arith.constant dense<0.000000e+00> : vector<128xf32>
    %31 = vector.multi_reduction <add>, %30, %cst_28 [0] : vector<16x128xf32> to vector<128xf32>
    %32 = vector.shape_cast %31 : vector<128xf32> to vector<1x128xf32>
    %33 = arith.mulf %30, %30 : vector<16x128xf32>
    %cst_29 = arith.constant dense<0.000000e+00> : vector<128xf32>
    %34 = vector.multi_reduction <add>, %33, %cst_29 [0] : vector<16x128xf32> to vector<128xf32>
    %35 = vector.shape_cast %34 : vector<128xf32> to vector<1x128xf32>
    %cst_30 = arith.constant 1.250000e-01 : f32
    %36 = vector.broadcast %cst_30 : f32 to vector<1x128xf32>
    %37 = arith.mulf %32, %36 : vector<1x128xf32>
    %cst_31 = arith.constant 1.250000e-01 : f32
    %38 = vector.broadcast %cst_31 : f32 to vector<1x128xf32>
    %39 = arith.mulf %35, %38 : vector<1x128xf32>
    %40 = arith.mulf %37, %37 : vector<1x128xf32>
    %41 = arith.subf %39, %40 : vector<1x128xf32>
    %cst_32 = arith.constant 0.000000e+00 : f32
    %42 = vector.broadcast %cst_32 : f32 to vector<1x128xf32>
    %43 = arith.maximumf %41, %42 : vector<1x128xf32>
    %c0_33 = arith.constant 0 : index
    %c0_34 = arith.constant 0 : index
    %44 = vector.load %arg2[%c0_33, %c0_34] : memref<2x128xf32, #tpu.memory_space<vmem>>, vector<1x128xf32>
    %cst_35 = arith.constant 9.99999974E-6 : f32
    %45 = vector.broadcast %cst_35 : f32 to vector<1x128xf32>
    %46 = arith.addf %43, %45 : vector<1x128xf32>
    %47 = math.rsqrt %46 : vector<1x128xf32>
    %48 = arith.mulf %44, %47 : vector<1x128xf32>
    %c1_36 = arith.constant 1 : index
    %c0_37 = arith.constant 0 : index
    %49 = vector.load %arg2[%c1_36, %c0_37] : memref<2x128xf32, #tpu.memory_space<vmem>>, vector<1x128xf32>
    %50 = arith.mulf %37, %48 : vector<1x128xf32>
    %51 = arith.subf %49, %50 : vector<1x128xf32>
    %52 = vector.broadcast %48 : vector<1x128xf32> to vector<16x128xf32>
    %53 = arith.mulf %30, %52 : vector<16x128xf32>
    %54 = vector.broadcast %51 : vector<1x128xf32> to vector<16x128xf32>
    %55 = arith.addf %53, %54 : vector<16x128xf32>
    %cst_38 = arith.constant 0.000000e+00 : f32
    %56 = vector.broadcast %cst_38 : f32 to vector<16x128xf32>
    %57 = arith.maximumf %55, %56 : vector<16x128xf32>
    %58 = arith.truncf %57 : vector<16x128xf32> to vector<16x128xbf16>
    %cst_39 = arith.constant 0.000000e+00 : f32
    %59 = vector.broadcast %cst_39 : f32 to vector<2x128xf32>
    %60 = vector.extract_strided_slice %58 {offsets = [0, 0], sizes = [2, 128], strides = [1, 1]} : vector<16x128xbf16> to vector<2x128xbf16>
    %c0_40 = arith.constant 0 : index
    %c0_41 = arith.constant 0 : index
    %c0_42 = arith.constant 0 : index
    %61 = vector.load %arg3[%c0_40, %c0_41, %c0_42] : memref<4x128x128xbf16, #tpu.memory_space<vmem>>, vector<1x128x128xbf16>
    %62 = vector.shape_cast %61 : vector<1x128x128xbf16> to vector<128x128xbf16>
    %cst_43 = arith.constant dense<0.000000e+00> : vector<2x128xf32>
    %63 = tpu.matmul %60, %62, %cst_43 {dimension_numbers = #tpu.dot_dimension_numbers<[1], [0], [0], [1], [0, 0, 1, 1], [], []>} : vector<2x128xbf16>, vector<128x128xbf16>, vector<2x128xf32> -> vector<2x128xf32>
    %64 = arith.addf %59, %63 : vector<2x128xf32>
    %65 = vector.extract_strided_slice %58 {offsets = [2, 0], sizes = [2, 128], strides = [1, 1]} : vector<16x128xbf16> to vector<2x128xbf16>
    %c1_44 = arith.constant 1 : index
    %c0_45 = arith.constant 0 : index
    %c0_46 = arith.constant 0 : index
    %66 = vector.load %arg3[%c1_44, %c0_45, %c0_46] : memref<4x128x128xbf16, #tpu.memory_space<vmem>>, vector<1x128x128xbf16>
    %67 = vector.shape_cast %66 : vector<1x128x128xbf16> to vector<128x128xbf16>
    %cst_47 = arith.constant dense<0.000000e+00> : vector<2x128xf32>
    %68 = tpu.matmul %65, %67, %cst_47 {dimension_numbers = #tpu.dot_dimension_numbers<[1], [0], [0], [1], [0, 0, 1, 1], [], []>} : vector<2x128xbf16>, vector<128x128xbf16>, vector<2x128xf32> -> vector<2x128xf32>
    %69 = arith.addf %64, %68 : vector<2x128xf32>
    %70 = vector.extract_strided_slice %58 {offsets = [8, 0], sizes = [2, 128], strides = [1, 1]} : vector<16x128xbf16> to vector<2x128xbf16>
    %c2_48 = arith.constant 2 : index
    %c0_49 = arith.constant 0 : index
    %c0_50 = arith.constant 0 : index
    %71 = vector.load %arg3[%c2_48, %c0_49, %c0_50] : memref<4x128x128xbf16, #tpu.memory_space<vmem>>, vector<1x128x128xbf16>
    %72 = vector.shape_cast %71 : vector<1x128x128xbf16> to vector<128x128xbf16>
    %cst_51 = arith.constant dense<0.000000e+00> : vector<2x128xf32>
    %73 = tpu.matmul %70, %72, %cst_51 {dimension_numbers = #tpu.dot_dimension_numbers<[1], [0], [0], [1], [0, 0, 1, 1], [], []>} : vector<2x128xbf16>, vector<128x128xbf16>, vector<2x128xf32> -> vector<2x128xf32>
    %74 = arith.addf %69, %73 : vector<2x128xf32>
    %75 = vector.extract_strided_slice %58 {offsets = [10, 0], sizes = [2, 128], strides = [1, 1]} : vector<16x128xbf16> to vector<2x128xbf16>
    %c3_52 = arith.constant 3 : index
    %c0_53 = arith.constant 0 : index
    %c0_54 = arith.constant 0 : index
    %76 = vector.load %arg3[%c3_52, %c0_53, %c0_54] : memref<4x128x128xbf16, #tpu.memory_space<vmem>>, vector<1x128x128xbf16>
    %77 = vector.shape_cast %76 : vector<1x128x128xbf16> to vector<128x128xbf16>
    %cst_55 = arith.constant dense<0.000000e+00> : vector<2x128xf32>
    %78 = tpu.matmul %75, %77, %cst_55 {dimension_numbers = #tpu.dot_dimension_numbers<[1], [0], [0], [1], [0, 0, 1, 1], [], []>} : vector<2x128xbf16>, vector<128x128xbf16>, vector<2x128xf32> -> vector<2x128xf32>
    %79 = arith.addf %74, %78 : vector<2x128xf32>
    %c0_56 = arith.constant 0 : index
    %c0_57 = arith.constant 0 : index
    %80 = vector.load %arg4[%c0_56, %c0_57] : memref<1x128xf32, #tpu.memory_space<vmem>>, vector<1x128xf32>
    %81 = vector.broadcast %80 : vector<1x128xf32> to vector<2x128xf32>
    %82 = arith.addf %79, %81 : vector<2x128xf32>
    %c0_58 = arith.constant 0 : index
    %c0_59 = arith.constant 0 : index
    %83 = vector.load %arg5[%c0_58, %c0_59] : memref<2x128xf32, #tpu.memory_space<vmem>>, vector<2x128xf32>
    tpu.vector_store %arg5[%c0_58, %c0_59], %82 {strides = array<i32>} : memref<2x128xf32, #tpu.memory_space<vmem>>, vector<2x128xf32>,
    return
  }
}

</mosaic_0001>

<llo_original>
// kernel: dqn_forward.4
$region0: #{dqn_forward.4}
  #allocation0 [shape = 'u32[]', space=smem, size = 0x4, offset = 0x4, fixed_abs, tag = 'smem constant byte address 0x4 - core index']
  #allocation1 [shape = 'u32[144,128]{1,0:T(1,128)}', space=vmem, size = 0x12000, scoped, tag = 'internal scratch']
  %s0 = inlined_call_operand.vmem [shape: bf16[1024,75], index: 0, kind: input, shape index: {}]
  %s1 = inlined_call_operand.vmem [shape: bf16[75,128], index: 1, kind: input, shape index: {}]
  %s2 = inlined_call_operand.vmem [shape: f32[1024,128], index: 2, kind: output, shape index: {0}]
  %s3 = inlined_call_operand.vmem [shape: f32[2,128], index: 3, kind: output, shape index: {1}]
  %4 = xla_tuple %s2, %s3
  %s5 = sld [smem:[#allocation0]]
  $region53: #{dqn_forward.4} parent=0
    _
  %s7 = ssub.s32 1, %s5
  %s8 = scalar_select 0, %s7, %s5
  loop: start=0, step=1, limit=4
  $region2: #{dqn_forward.4} parent=0 // loop_pre_header
    _
  $region3: #{dqn_forward.4} parent=0 // loop_header
    %s10 = sphi 0, %s14
    %p11 = scmp.ge.s32.totalorder %s10, 4
    %s20 = sphi 0, %s22
    %s23 = sphi 0, %s20
    %s24 = sphi 0, %s23
    %s40 = sphi 0, %s24
    %s44 = sphi 0, %s44
    %s46 = sphi 0, %s44
    %s47 = sphi 0, %s46
    %s61 = sphi 0, %s47
    %s67 = sphi 0, %s69
    %s70 = sphi 0, %s67
    %s71 = sphi 0, %s70
    %s87 = sphi 0, %s71
    %s91 = sphi 0, %s91
    %s93 = sphi 0, %s91
    %s94 = sphi 0, %s93
    %s108 = sphi 0, %s94
  $region4: #{dqn_forward.4} parent=0 // loop_header_branch
    %13 = sbr.rel (%p11) target = $region8
  $region5: #{dqn_forward.4} parent=0 // loop_body
    %s15 = ssub.s32 %s10, 1
    %s16 = ssub.s32 %s10, 2
    %s17 = sadd.s32 %s10, 1
    %s18 = ssub.s32 %s10, %s17
    %p19 = scmp.eq.s32.totalorder %s18, 0
    %s21 = sadd.s32 %s20, 1
    %s22 = scalar_select %p19, %s20, %s21
    %p25 = pneg %p19
    %p26 = scmp.eq.s32.totalorder %s10, 1
    %p27 = por %p25, %p26
    %p28 = scmp.ne.s32.totalorder %s20, %s23
    %p29 = scmp.eq.s32.totalorder %s10, 0
    %p30 = por %p28, %p29
    %p31 = scmp.ne.s32.totalorder %s20, %s23
    %p32 = scmp.eq.s32.totalorder %s15, 1
    %p33 = por %p31, %p32
    %p34 = scmp.ne.s32.totalorder %s23, %s24
    %p35 = scmp.eq.s32.totalorder %s15, 0
    %p36 = por %p34, %p35
    %p37 = scmp.ne.s32.totalorder %s23, %s24
    %p38 = scmp.eq.s32.totalorder %s16, 1
    %p39 = por %p37, %p38
    %p41 = scmp.ne.s32.totalorder %s24, %s40
    %p42 = scmp.eq.s32.totalorder %s16, 0
    %p43 = por %p41, %p42
    %s45 = sadd.s32 %s44, 1
    %p48 = scmp.eq.s32.totalorder %s10, 1
    %p49 = scmp.ne.s32.totalorder %s44, %s46
    %p50 = scmp.eq.s32.totalorder %s10, 0
    %p51 = por %p49, %p50
    %p52 = scmp.ne.s32.totalorder %s44, %s46
    %p53 = scmp.eq.s32.totalorder %s15, 1
    %p54 = por %p52, %p53
    %p55 = scmp.ne.s32.totalorder %s46, %s47
    %p56 = scmp.eq.s32.totalorder %s15, 0
    %p57 = por %p55, %p56
    %p58 = scmp.ne.s32.totalorder %s46, %s47
    %p59 = scmp.eq.s32.totalorder %s16, 1
    %p60 = por %p58, %p59
    %p62 = scmp.ne.s32.totalorder %s47, %s61
    %p63 = scmp.eq.s32.totalorder %s16, 0
    %p64 = por %p62, %p63
    %s65 = ssub.s32 %s10, %s17
    %p66 = scmp.eq.s32.totalorder %s65, 0
    %s68 = sadd.s32 %s67, 1
    %s69 = scalar_select %p66, %s67, %s68
    %p72 = pneg %p66
    %p73 = scmp.eq.s32.totalorder %s10, 1
    %p74 = por %p72, %p73
    %p75 = scmp.ne.s32.totalorder %s67, %s70
    %p76 = scmp.eq.s32.totalorder %s10, 0
    %p77 = por %p75, %p76
    %p78 = scmp.ne.s32.totalorder %s67, %s70
    %p79 = scmp.eq.s32.totalorder %s15, 1
    %p80 = por %p78, %p79
    %p81 = scmp.ne.s32.totalorder %s70, %s71
    %p82 = scmp.eq.s32.totalorder %s15, 0
    %p83 = por %p81, %p82
    %p84 = scmp.ne.s32.totalorder %s70, %s71
    %p85 = scmp.eq.s32.totalorder %s16, 1
    %p86 = por %p84, %p85
    %p88 = scmp.ne.s32.totalorder %s71, %s87
    %p89 = scmp.eq.s32.totalorder %s16, 0
    %p90 = por %p88, %p89
    %s92 = sadd.s32 %s91, 1
    %p95 = scmp.eq.s32.totalorder %s10, 1
    %p96 = scmp.ne.s32.totalorder %s91, %s93
    %p97 = scmp.eq.s32.totalorder %s10, 0
    %p98 = por %p96, %p97
    %p99 = scmp.ne.s32.totalorder %s91, %s93
    %p100 = scmp.eq.s32.totalorder %s15, 1
    %p101 = por %p99, %p100
    %p102 = scmp.ne.s32.totalorder %s93, %s94
    %p103 = scmp.eq.s32.totalorder %s15, 0
    %p104 = por %p102, %p103
    %p105 = scmp.ne.s32.totalorder %s93, %s94
    %p106 = scmp.eq.s32.totalorder %s16, 1
    %p107 = por %p105, %p106
    %p109 = scmp.ne.s32.totalorder %s94, %s108
    %p110 = scmp.eq.s32.totalorder %s16, 0
    %p111 = por %p109, %p110
    %p112 = scmp.le.s32.totalorder 1, %s10
    %p113 = scmp.lt.s32.totalorder %s10, 3
    %p114 = pnand %p112, %p113
    %p115 = pneg %p114
    // Predicated region
    $region9: #{dqn_forward.4} parent=5 // pred_check
      _
    $region10: #{dqn_forward.4} parent=5 // pred_check_branch
      %117 = sbr.rel (%p114) target = $region12
    $region11: #{dqn_forward.4} parent=5 // pred_region
      %s118 = ssub.s32 %s10, 1
      // Predicated region
      $region13: #{dqn_forward.4} parent=11 // pred_check
        %p119 = pneg %p57
      $region14: #{dqn_forward.4} parent=11 // pred_check_branch
        %121 = sbr.rel (%p119) target = $region16
      $region15: #{dqn_forward.4} parent=11 // pred_region
        _
      $region16: #{dqn_forward.4} parent=11 // pred_fallthru
        _
    $region12: #{dqn_forward.4} parent=5 // pred_fallthru
      _
    %p122 = scmp.lt.s32.totalorder %s10, 2
    // Predicated region
    $region17: #{dqn_forward.4} parent=5 // pred_check
      %p123 = pneg %p122
    $region18: #{dqn_forward.4} parent=5 // pred_check_branch
      %125 = sbr.rel (%p123) target = $region20
    $region19: #{dqn_forward.4} parent=5 // pred_region
      // Predicated region
      $region21: #{dqn_forward.4} parent=19 // pred_check
        %p126 = pneg %p30
      $region22: #{dqn_forward.4} parent=19 // pred_check_branch
        %128 = sbr.rel (%p126) target = $region24
      $region23: #{dqn_forward.4} parent=19 // pred_region
        %s129 = smul.u32 64, %s10
        %p130 = scmp.lt.s32.totalorder %s129, 127
        %s131 = scalar_select %p130, %s129, 127
        %s132 = smul.addr %s131, 4
        %s133 = scalar_lea.vmem %s0, %s132
        %s134 = smul.u32 64, %s10
      $region24: #{dqn_forward.4} parent=19 // pred_fallthru
        _
    $region20: #{dqn_forward.4} parent=5 // pred_fallthru
      _
    %p135 = scmp.le.s32.totalorder 1, %s10
    %p136 = scmp.lt.s32.totalorder %s10, 3
    %p137 = pnand %p135, %p136
    %p138 = pneg %p137
    // Predicated region
    $region25: #{dqn_forward.4} parent=5 // pred_check
      _
    $region26: #{dqn_forward.4} parent=5 // pred_check_branch
      %140 = sbr.rel (%p137) target = $region28
    $region27: #{dqn_forward.4} parent=5 // pred_region
      %s141 = ssub.s32 %s10, 1
      %s142 = smul.u32 64, %s15
      %p143 = scmp.lt.s32.totalorder %s142, 127
      %s144 = scalar_select %p143, %s142, 127
      %s145 = smul.addr %s144, 4
      %s146 = scalar_lea.vmem %s0, %s145
      %p147 = pneg %p36
      %p148 = pneg %p33
      %p149 = pneg %p57
      %p150 = pneg %p54
      %p151 = pneg %p83
      %p152 = pneg %p80
      %s153 = smul.u32 64, %s15
      %p154 = scmp.lt.s32.totalorder %s153, 127
      %s155 = scalar_select %p154, %s153, 127
      %s156 = smul.addr %s155, 8
      %s157 = scalar_lea.vmem %s2, %s156
      %p158 = pneg %p104
      %p159 = pneg %p101
      %s160 = smul.u32 64, %s15
      %p161 = scmp.lt.s32.totalorder %s160, 127
      %s162 = scalar_select %p161, %s160, 127
      %s163 = smul.addr %s162, 4
      %s164 = scalar_lea.vmem %s0, %s163
      %s165 = smul.u32 64, %s15
      %s166 = smul.u32 64, %s15
      %p167 = scmp.lt.s32.totalorder %s166, 127
      %s168 = scalar_select %p167, %s166, 127
      %s169 = smul.addr %s168, 8
      %s170 = scalar_lea.vmem %s2, %s169
      %s171 = smul.u32 64, %s15
      %v173 = vld [vmem:[%s164] sm:$0xf]
      %v174 = vld [vmem:[%s164 + $0x4] sm:$0xf]
      %v175 = vld [vmem:[%s164 + $0x8] sm:$0xf]
      %v176 = vld [vmem:[%s164 + $0xc] sm:$0xf]
      %v177 = vld [vmem:[%s164 + $0x10] sm:$0xf]
      %v178 = vld [vmem:[%s164 + $0x14] sm:$0xf]
      %v179 = vld [vmem:[%s164 + $0x18] sm:$0xf]
      %v180 = vld [vmem:[%s164 + $0x1c] sm:$0xf]
      %v181 = vld [vmem:[%s164 + $0x20] sm:$0xf]
      %v182 = vld [vmem:[%s164 + $0x24] sm:$0xf]
      %v183 = vld [vmem:[%s164 + $0x28] sm:$0xf]
      %v184 = vld [vmem:[%s164 + $0x2c] sm:$0xf]
      %v185 = vld [vmem:[%s164 + $0x30] sm:$0xf]
      %v186 = vld [vmem:[%s164 + $0x34] sm:$0xf]
      %v187 = vld [vmem:[%s164 + $0x38] sm:$0xf]
      %v188 = vld [vmem:[%s164 + $0x3c] sm:$0xf]
      %v189 = vld [vmem:[%s164 + $0x40] sm:$0xf]
      %v190 = vld [vmem:[%s164 + $0x44] sm:$0xf]
      %v191 = vld [vmem:[%s164 + $0x48] sm:$0xf]
      %v192 = vld [vmem:[%s164 + $0x4c] sm:$0xf]
      %v193 = vld [vmem:[%s164 + $0x50] sm:$0xf]
      %v194 = vld [vmem:[%s164 + $0x54] sm:$0xf]
      %v195 = vld [vmem:[%s164 + $0x58] sm:$0xf]
      %v196 = vld [vmem:[%s164 + $0x5c] sm:$0xf]
      %v197 = vld [vmem:[%s164 + $0x60] sm:$0xf]
      %v198 = vld [vmem:[%s164 + $0x64] sm:$0xf]
      %v199 = vld [vmem:[%s164 + $0x68] sm:$0xf]
      %v200 = vld [vmem:[%s164 + $0x6c] sm:$0xf]
      %v201 = vld [vmem:[%s164 + $0x70] sm:$0xf]
      %v202 = vld [vmem:[%s164 + $0x74] sm:$0xf]
      %v203 = vld [vmem:[%s164 + $0x78] sm:$0xf]
      %v204 = vld [vmem:[%s164 + $0x7c] sm:$0xf]
      %v205 = vld [vmem:[%s164 + $0x80] sm:$0xf]
      %v206 = vld [vmem:[%s164 + $0x84] sm:$0xf]
      %v207 = vld [vmem:[%s164 + $0x88] sm:$0xf]
      %v208 = vld [vmem:[%s164 + $0x8c] sm:$0xf]
      %v209 = vld [vmem:[%s164 + $0x90] sm:$0xf]
      %v210 = vld [vmem:[%s164 + $0x94] sm:$0xf]
      %v211 = vld [vmem:[%s164 + $0x98] sm:$0xf]
      %v212 = vld [vmem:[%s164 + $0x9c] sm:$0xf]
      %v213 = vld [vmem:[%s164 + $0xa0] sm:$0xf]
      %v214 = vld [vmem:[%s164 + $0xa4] sm:$0xf]
      %v215 = vld [vmem:[%s164 + $0xa8] sm:$0xf]
      %v216 = vld [vmem:[%s164 + $0xac] sm:$0xf]
      %v217 = vld [vmem:[%s164 + $0xb0] sm:$0xf]
      %v218 = vld [vmem:[%s164 + $0xb4] sm:$0xf]
      %v219 = vld [vmem:[%s164 + $0xb8] sm:$0xf]
      %v220 = vld [vmem:[%s164 + $0xbc] sm:$0xf]
      %v221 = vld [vmem:[%s164 + $0xc0] sm:$0xf]
      %v222 = vld [vmem:[%s164 + $0xc4] sm:$0xf]
      %v223 = vld [vmem:[%s164 + $0xc8] sm:$0xf]
      %v224 = vld [vmem:[%s164 + $0xcc] sm:$0xf]
      %v225 = vld [vmem:[%s164 + $0xd0] sm:$0xf]
      %v226 = vld [vmem:[%s164 + $0xd4] sm:$0xf]
      %v227 = vld [vmem:[%s164 + $0xd8] sm:$0xf]
      %v228 = vld [vmem:[%s164 + $0xdc] sm:$0xf]
      %v229 = vld [vmem:[%s164 + $0xe0] sm:$0xf]
      %v230 = vld [vmem:[%s164 + $0xe4] sm:$0xf]
      %v231 = vld [vmem:[%s164 + $0xe8] sm:$0xf]
      %v232 = vld [vmem:[%s164 + $0xec] sm:$0xf]
      %v233 = vld [vmem:[%s164 + $0xf0] sm:$0xf]
      %v234 = vld [vmem:[%s164 + $0xf4] sm:$0xf]
      %v235 = vld [vmem:[%s164 + $0xf8] sm:$0xf]
      %v236 = vld [vmem:[%s164 + $0xfc] sm:$0xf]
      %v237 = vld [vmem:[%s1] sm:$0xf]
      %v238 = vld [vmem:[%s1 + $0x4] sm:$0xf]
      %v239 = vld [vmem:[%s1 + $0x8] sm:$0xf]
      %v240 = vld [vmem:[%s1 + $0xc] sm:$0xf]
      %v241 = vld [vmem:[%s1 + $0x10] sm:$0xf]
      %v242 = vld [vmem:[%s1 + $0x14] sm:$0xf]
      %v243 = vld [vmem:[%s1 + $0x18] sm:$0xf]
      %v244 = vld [vmem:[%s1 + $0x1c] sm:$0xf]
      %v245 = vld [vmem:[%s1 + $0x20] sm:$0xf]
      %v246 = vld [vmem:[%s1 + $0x24] sm:$0x3]
      %v311 = vunpack.c.l.b16 %v173
      %v312 = vunpack.c.l.b16 %v174
      %v313 = vunpack.c.l.b16 %v175
      %v314 = vunpack.c.l.b16 %v176
      %v315 = vunpack.c.l.b16 %v177
      %v316 = vunpack.c.l.b16 %v178
      %v317 = vunpack.c.l.b16 %v179
      %v318 = vunpack.c.l.b16 %v180
      %v319 = vunpack.c.l.b16 %v181
      %v320 = vunpack.c.l.b16 %v182
      %v321 = vunpack.c.l.b16 %v183
      %v322 = vunpack.c.l.b16 %v184
      %v323 = vunpack.c.l.b16 %v185
      %v324 = vunpack.c.l.b16 %v186
      %v325 = vunpack.c.l.b16 %v187
      %v326 = vunpack.c.l.b16 %v188
      %v327 = vunpack.c.l.b16 %v189
      %v328 = vunpack.c.l.b16 %v190
      %v329 = vunpack.c.l.b16 %v191
      %v330 = vunpack.c.l.b16 %v192
      %v331 = vunpack.c.l.b16 %v193
      %v332 = vunpack.c.l.b16 %v194
      %v333 = vunpack.c.l.b16 %v195
      %v334 = vunpack.c.l.b16 %v196
      %v335 = vunpack.c.l.b16 %v197
      %v336 = vunpack.c.l.b16 %v198
      %v337 = vunpack.c.l.b16 %v199
      %v338 = vunpack.c.l.b16 %v200
      %v339 = vunpack.c.l.b16 %v201
      %v340 = vunpack.c.l.b16 %v202
      %v341 = vunpack.c.l.b16 %v203
      %v342 = vunpack.c.l.b16 %v204
      %v343 = vunpack.c.l.b16 %v205
      %v344 = vunpack.c.l.b16 %v206
      %v345 = vunpack.c.l.b16 %v207
      %v346 = vunpack.c.l.b16 %v208
      %v347 = vunpack.c.l.b16 %v209
      %v348 = vunpack.c.l.b16 %v210
      %v349 = vunpack.c.l.b16 %v211
      %v350 = vunpack.c.l.b16 %v212
      %v351 = vunpack.c.l.b16 %v213
      %v352 = vunpack.c.l.b16 %v214
      %v353 = vunpack.c.l.b16 %v215
      %v354 = vunpack.c.l.b16 %v216
      %v355 = vunpack.c.l.b16 %v217
      %v356 = vunpack.c.l.b16 %v218
      %v357 = vunpack.c.l.b16 %v219
      %v358 = vunpack.c.l.b16 %v220
      %v359 = vunpack.c.l.b16 %v221
      %v360 = vunpack.c.l.b16 %v222
      %v361 = vunpack.c.l.b16 %v223
      %v362 = vunpack.c.l.b16 %v224
      %v363 = vunpack.c.l.b16 %v225
      %v364 = vunpack.c.l.b16 %v226
      %v365 = vunpack.c.l.b16 %v227
      %v366 = vunpack.c.l.b16 %v228
      %v367 = vunpack.c.l.b16 %v229
      %v368 = vunpack.c.l.b16 %v230
      %v369 = vunpack.c.l.b16 %v231
      %v370 = vunpack.c.l.b16 %v232
      %v371 = vunpack.c.l.b16 %v233
      %v372 = vunpack.c.l.b16 %v234
      %v373 = vunpack.c.l.b16 %v235
      %v374 = vunpack.c.l.b16 %v236
      %v375 = vpack.c.b16 %v312, %v311
      %v376 = vpack.c.b16 %v314, %v313
      %v377 = vpack.c.b16 %v316, %v315
      %v378 = vpack.c.b16 %v318, %v317
      %v379 = vpack.c.b16 %v320, %v319
      %v380 = vpack.c.b16 %v322, %v321
      %v381 = vpack.c.b16 %v324, %v323
      %v382 = vpack.c.b16 %v326, %v325
      %v383 = vpack.c.b16 %v328, %v327
      %v384 = vpack.c.b16 %v330, %v329
      %v385 = vpack.c.b16 %v332, %v331
      %v386 = vpack.c.b16 %v334, %v333
      %v387 = vpack.c.b16 %v336, %v335
      %v388 = vpack.c.b16 %v338, %v337
      %v389 = vpack.c.b16 %v340, %v339
      %v390 = vpack.c.b16 %v342, %v341
      %v391 = vpack.c.b16 %v344, %v343
      %v392 = vpack.c.b16 %v346, %v345
      %v393 = vpack.c.b16 %v348, %v347
      %v394 = vpack.c.b16 %v350, %v349
      %v395 = vpack.c.b16 %v352, %v351
      %v396 = vpack.c.b16 %v354, %v353
      %v397 = vpack.c.b16 %v356, %v355
      %v398 = vpack.c.b16 %v358, %v357
      %v399 = vpack.c.b16 %v360, %v359
      %v400 = vpack.c.b16 %v362, %v361
      %v401 = vpack.c.b16 %v364, %v363
      %v402 = vpack.c.b16 %v366, %v365
      %v403 = vpack.c.b16 %v368, %v367
      %v404 = vpack.c.b16 %v370, %v369
      %v405 = vpack.c.b16 %v372, %v371
      %v406 = vpack.c.b16 %v374, %v373
      %v417 = vunpack.c.l.b16 %v237
      %v418 = vunpack.c.l.b16 %v238
      %v419 = vunpack.c.l.b16 %v239
      %v420 = vunpack.c.l.b16 %v240
      %v421 = vunpack.c.l.b16 %v241
      %v422 = vunpack.c.l.b16 %v242
      %v423 = vunpack.c.l.b16 %v243
      %v424 = vunpack.c.l.b16 %v244
      %v425 = vunpack.c.l.b16 %v245
      %v426 = vunpack.c.l.b16 %v246
      %v427 = vpack.c.b16 %v418, %v417
      %v428 = vpack.c.b16 %v420, %v419
      %v429 = vpack.c.b16 %v422, %v421
      %v430 = vpack.c.b16 %v424, %v423
      %v431 = vpack.c.b16 %v426, %v425
      %vm436 = vcmask 613376
      %v438 = vsel %vm436, %v375, 0
      %v441 = vsel %vm436, %v376, 0
      %v444 = vsel %vm436, %v377, 0
      %v447 = vsel %vm436, %v378, 0
      %v450 = vsel %vm436, %v379, 0
      %v453 = vsel %vm436, %v380, 0
      %v456 = vsel %vm436, %v381, 0
      %v459 = vsel %vm436, %v382, 0
      %v462 = vsel %vm436, %v383, 0
      %v465 = vsel %vm436, %v384, 0
      %v468 = vsel %vm436, %v385, 0
      %v471 = vsel %vm436, %v386, 0
      %v474 = vsel %vm436, %v387, 0
      %v477 = vsel %vm436, %v388, 0
      %v480 = vsel %vm436, %v389, 0
      %v483 = vsel %vm436, %v390, 0
      %v486 = vsel %vm436, %v391, 0
      %v489 = vsel %vm436, %v392, 0
      %v492 = vsel %vm436, %v393, 0
      %v495 = vsel %vm436, %v394, 0
      %v498 = vsel %vm436, %v395, 0
      %v501 = vsel %vm436, %v396, 0
      %v504 = vsel %vm436, %v397, 0
      %v507 = vsel %vm436, %v398, 0
      %v510 = vsel %vm436, %v399, 0
      %v513 = vsel %vm436, %v400, 0
      %v516 = vsel %vm436, %v401, 0
      %v519 = vsel %vm436, %v402, 0
      %v522 = vsel %vm436, %v403, 0
      %v525 = vsel %vm436, %v404, 0
      %v528 = vsel %vm436, %v405, 0
      %v531 = vsel %vm436, %v406, 0
      %vm533 = vcmask 1044480
      %vm534 = vcmask 1045504
      %v535 = vsel %vm533, 4294967295, 65535
      %v536 = vsel %vm534, %v535, 0
      %v538 = vand.u32 %v431, %v536
      %540 = vmatprep.subr.bf16.mxu0 0
      %541 = vmatpush1.bf16.msra.mxu0 %v427
      %542 = vmatprep.subr.bf16.mxu0 0
      %543 = vmatpush1.bf16.msra.mxu0 %v428
      %544 = vmatprep.subr.bf16.mxu0 0
      %545 = vmatpush1.bf16.msra.mxu0 %v429
      %546 = vmatprep.subr.bf16.mxu0 0
      %547 = vmatpush1.bf16.msra.mxu0 %v430
      %548 = vmatprep.subr.bf16.mxu0 0
      %549 = vmatpush1.bf16.msra.mxu0 %v538
      %550 = vmatprep.subr.bf16.mxu0 0
      %551 = vmatpush1.bf16.msra.mxu0 0
      %552 = vmatprep.subr.bf16.mxu0 0
      %553 = vmatpush1.bf16.msra.mxu0 0
      %554 = vmatprep.subr.bf16.mxu0 0
      %555 = vmatpush1.bf16.msra.mxu0 0
      %556 = vmatprep.subr.bf16.mxu0 0
      %557 = vmatpush1.bf16.msra.mxu0 0
      %558 = vmatprep.subr.bf16.mxu0 0
      %559 = vmatpush1.bf16.msra.mxu0 0
      %560 = vmatprep.subr.bf16.mxu0 0
      %561 = vmatpush1.bf16.msra.mxu0 0
      %562 = vmatprep.subr.bf16.mxu0 0
      %563 = vmatpush1.bf16.msra.mxu0 0
      %564 = vmatprep.subr.bf16.mxu0 0
      %565 = vmatpush1.bf16.msra.mxu0 0
      %566 = vmatprep.subr.bf16.mxu0 0
      %567 = vmatpush1.bf16.msra.mxu0 0
      %568 = vmatprep.subr.bf16.mxu0 0
      %569 = vmatpush1.bf16.msra.mxu0 0
      %570 = vmatprep.subr.bf16.mxu0 0
      %571 = vmatpush1.bf16.msra.mxu0 0
      %572 = vmatprep.mubr.bf16.mxu0 0
      %573 = vmatmul.mubr.bf16.gmra.mrb[0].mxu0 %v438
      %v574 = vpop.f32.mrb[0].mxu0
      %v575 = vadd.f32 0.0, %v574
      %v576 = vpop.f32.mrb[0].mxu0
      %v577 = vpop.f32.mrb[0].mxu0
      %v578 = vadd.f32 0.0, %v577
      %v579 = vpop.f32.mrb[0].mxu0
      %580 = vmatprep.mubr.bf16.mxu0 0
      %581 = vmatmul.mubr.bf16.gmra.mrb[0].mxu0 %v441
      %v582 = vpop.f32.mrb[0].mxu0
      %v583 = vadd.f32 0.0, %v582
      %v584 = vpop.f32.mrb[0].mxu0
      %v585 = vpop.f32.mrb[0].mxu0
      %v586 = vadd.f32 0.0, %v585
      %v587 = vpop.f32.mrb[0].mxu0
      %588 = vmatprep.mubr.bf16.mxu0 0
      %589 = vmatmul.mubr.bf16.gmra.mrb[0].mxu0 %v444
      %v590 = vpop.f32.mrb[0].mxu0
      %v591 = vadd.f32 0.0, %v590
      %v592 = vpop.f32.mrb[0].mxu0
      %v593 = vpop.f32.mrb[0].mxu0
      %v594 = vadd.f32 0.0, %v593
      %v595 = vpop.f32.mrb[0].mxu0
      %596 = vmatprep.mubr.bf16.mxu0 0
      %597 = vmatmul.mubr.bf16.gmra.mrb[0].mxu0 %v447
      %v598 = vpop.f32.mrb[0].mxu0
      %v599 = vadd.f32 0.0, %v598
      %v600 = vpop.f32.mrb[0].mxu0
      %v601 = vpop.f32.mrb[0].mxu0
      %v602 = vadd.f32 0.0, %v601
      %v603 = vpop.f32.mrb[0].mxu0
      %604 = vmatprep.mubr.bf16.mxu0 0
      %605 = vmatmul.mubr.bf16.gmra.mrb[0].mxu0 %v450
      %v606 = vpop.f32.mrb[0].mxu0
      %v607 = vadd.f32 0.0, %v606
      %v608 = vpop.f32.mrb[0].mxu0
      %v609 = vpop.f32.mrb[0].mxu0
      %v610 = vadd.f32 0.0, %v609
      %v611 = vpop.f32.mrb[0].mxu0
      %612 = vmatprep.mubr.bf16.mxu0 0
      %613 = vmatmul.mubr.bf16.gmra.mrb[0].mxu0 %v453
      %v614 = vpop.f32.mrb[0].mxu0
      %v615 = vadd.f32 0.0, %v614
      %v616 = vpop.f32.mrb[0].mxu0
      %v617 = vpop.f32.mrb[0].mxu0
      %v618 = vadd.f32 0.0, %v617
      %v619 = vpop.f32.mrb[0].mxu0
      %620 = vmatprep.mubr.bf16.mxu0 0
      %621 = vmatmul.mubr.bf16.gmra.mrb[0].mxu0 %v456
      %v622 = vpop.f32.mrb[0].mxu0
      %v623 = vadd.f32 0.0, %v622
      %v624 = vpop.f32.mrb[0].mxu0
      %v625 = vpop.f32.mrb[0].mxu0
      %v626 = vadd.f32 0.0, %v625
      %v627 = vpop.f32.mrb[0].mxu0
      %628 = vmatprep.mubr.bf16.mxu0 0
      %629 = vmatmul.mubr.bf16.gmra.mrb[0].mxu0 %v459
      %v630 = vpop.f32.mrb[0].mxu0
      %v631 = vadd.f32 0.0, %v630
      %v632 = vpop.f32.mrb[0].mxu0
      %v633 = vpop.f32.mrb[0].mxu0
      %v634 = vadd.f32 0.0, %v633
      %v635 = vpop.f32.mrb[0].mxu0
      %636 = vmatprep.mubr.bf16.mxu0 0
      %637 = vmatmul.mubr.bf16.gmra.mrb[0].mxu0 %v462
      %v638 = vpop.f32.mrb[0].mxu0
      %v639 = vadd.f32 0.0, %v638
      %v640 = vpop.f32.mrb[0].mxu0
      %v641 = vpop.f32.mrb[0].mxu0
      %v642 = vadd.f32 0.0, %v641
      %v643 = vpop.f32.mrb[0].mxu0
      %644 = vmatprep.mubr.bf16.mxu0 0
      %645 = vmatmul.mubr.bf16.gmra.mrb[0].mxu0 %v465
      %v646 = vpop.f32.mrb[0].mxu0
      %v647 = vadd.f32 0.0, %v646
      %v648 = vpop.f32.mrb[0].mxu0
      %v649 = vpop.f32.mrb[0].mxu0
      %v650 = vadd.f32 0.0, %v649
      %v651 = vpop.f32.mrb[0].mxu0
      %652 = vmatprep.mubr.bf16.mxu0 0
      %653 = vmatmul.mubr.bf16.gmra.mrb[0].mxu0 %v468
      %v654 = vpop.f32.mrb[0].mxu0
      %v655 = vadd.f32 0.0, %v654
      %v656 = vpop.f32.mrb[0].mxu0
      %v657 = vpop.f32.mrb[0].mxu0
      %v658 = vadd.f32 0.0, %v657
      %v659 = vpop.f32.mrb[0].mxu0
      %660 = vmatprep.mubr.bf16.mxu0 0
      %661 = vmatmul.mubr.bf16.gmra.mrb[0].mxu0 %v471
      %v662 = vpop.f32.mrb[0].mxu0
      %v663 = vadd.f32 0.0, %v662
      %v664 = vpop.f32.mrb[0].mxu0
      %v665 = vpop.f32.mrb[0].mxu0
      %v666 = vadd.f32 0.0, %v665
      %v667 = vpop.f32.mrb[0].mxu0
      %668 = vmatprep.mubr.bf16.mxu0 0
      %669 = vmatmul.mubr.bf16.gmra.mrb[0].mxu0 %v474
      %v670 = vpop.f32.mrb[0].mxu0
      %v671 = vadd.f32 0.0, %v670
      %v672 = vpop.f32.mrb[0].mxu0
      %v673 = vpop.f32.mrb[0].mxu0
      %v674 = vadd.f32 0.0, %v673
      %v675 = vpop.f32.mrb[0].mxu0
      %676 = vmatprep.mubr.bf16.mxu0 0
      %677 = vmatmul.mubr.bf16.gmra.mrb[0].mxu0 %v477
      %v678 = vpop.f32.mrb[0].mxu0
      %v679 = vadd.f32 0.0, %v678
      %v680 = vpop.f32.mrb[0].mxu0
      %v681 = vpop.f32.mrb[0].mxu0
      %v682 = vadd.f32 0.0, %v681
      %v683 = vpop.f32.mrb[0].mxu0
      %684 = vmatprep.mubr.bf16.mxu0 0
      %685 = vmatmul.mubr.bf16.gmra.mrb[0].mxu0 %v480
      %v686 = vpop.f32.mrb[0].mxu0
      %v687 = vadd.f32 0.0, %v686
      %v688 = vpop.f32.mrb[0].mxu0
      %v689 = vpop.f32.mrb[0].mxu0
      %v690 = vadd.f32 0.0, %v689
      %v691 = vpop.f32.mrb[0].mxu0
      %692 = vmatprep.mubr.bf16.mxu0 0
      %693 = vmatmul.mubr.bf16.gmra.mrb[0].mxu0 %v483
      %v694 = vpop.f32.mrb[0].mxu0
      %v695 = vadd.f32 0.0, %v694
      %v696 = vpop.f32.mrb[0].mxu0
      %v697 = vpop.f32.mrb[0].mxu0
      %v698 = vadd.f32 0.0, %v697
      %v699 = vpop.f32.mrb[0].mxu0
      %700 = vmatprep.mubr.bf16.mxu0 0
      %701 = vmatmul.mubr.bf16.gmra.mrb[0].mxu0 %v486
      %v702 = vpop.f32.mrb[0].mxu0
      %v703 = vadd.f32 0.0, %v702
      %v704 = vpop.f32.mrb[0].mxu0
      %v705 = vpop.f32.mrb[0].mxu0
      %v706 = vadd.f32 0.0, %v705
      %v707 = vpop.f32.mrb[0].mxu0
      %708 = vmatprep.mubr.bf16.mxu0 0
      %709 = vmatmul.mubr.bf16.gmra.mrb[0].mxu0 %v489
      %v710 = vpop.f32.mrb[0].mxu0
      %v711 = vadd.f32 0.0, %v710
      %v712 = vpop.f32.mrb[0].mxu0
      %v713 = vpop.f32.mrb[0].mxu0
      %v714 = vadd.f32 0.0, %v713
      %v715 = vpop.f32.mrb[0].mxu0
      %716 = vmatprep.mubr.bf16.mxu0 0
      %717 = vmatmul.mubr.bf16.gmra.mrb[0].mxu0 %v492
      %v718 = vpop.f32.mrb[0].mxu0
      %v719 = vadd.f32 0.0, %v718
      %v720 = vpop.f32.mrb[0].mxu0
      %v721 = vpop.f32.mrb[0].mxu0
      %v722 = vadd.f32 0.0, %v721
      %v723 = vpop.f32.mrb[0].mxu0
      %724 = vmatprep.mubr.bf16.mxu0 0
      %725 = vmatmul.mubr.bf16.gmra.mrb[0].mxu0 %v495
      %v726 = vpop.f32.mrb[0].mxu0
      %v727 = vadd.f32 0.0, %v726
      %v728 = vpop.f32.mrb[0].mxu0
      %v729 = vpop.f32.mrb[0].mxu0
      %v730 = vadd.f32 0.0, %v729
      %v731 = vpop.f32.mrb[0].mxu0
      %732 = vmatprep.mubr.bf16.mxu0 0
      %733 = vmatmul.mubr.bf16.gmra.mrb[0].mxu0 %v498
      %v734 = vpop.f32.mrb[0].mxu0
      %v735 = vadd.f32 0.0, %v734
      %v736 = vpop.f32.mrb[0].mxu0
      %v737 = vpop.f32.mrb[0].mxu0
      %v738 = vadd.f32 0.0, %v737
      %v739 = vpop.f32.mrb[0].mxu0
      %740 = vmatprep.mubr.bf16.mxu0 0
      %741 = vmatmul.mubr.bf16.gmra.mrb[0].mxu0 %v501
      %v742 = vpop.f32.mrb[0].mxu0
      %v743 = vadd.f32 0.0, %v742
      %v744 = vpop.f32.mrb[0].mxu0
      %v745 = vpop.f32.mrb[0].mxu0
      %v746 = vadd.f32 0.0, %v745
      %v747 = vpop.f32.mrb[0].mxu0
      %748 = vmatprep.mubr.bf16.mxu0 0
      %749 = vmatmul.mubr.bf16.gmra.mrb[0].mxu0 %v504
      %v750 = vpop.f32.mrb[0].mxu0
      %v751 = vadd.f32 0.0, %v750
      %v752 = vpop.f32.mrb[0].mxu0
      %v753 = vpop.f32.mrb[0].mxu0
      %v754 = vadd.f32 0.0, %v753
      %v755 = vpop.f32.mrb[0].mxu0
      %756 = vmatprep.mubr.bf16.mxu0 0
      %757 = vmatmul.mubr.bf16.gmra.mrb[0].mxu0 %v507
      %v758 = vpop.f32.mrb[0].mxu0
      %v759 = vadd.f32 0.0, %v758
      %v760 = vpop.f32.mrb[0].mxu0
      %v761 = vpop.f32.mrb[0].mxu0
      %v762 = vadd.f32 0.0, %v761
      %v763 = vpop.f32.mrb[0].mxu0
      %764 = vmatprep.mubr.bf16.mxu0 0
      %765 = vmatmul.mubr.bf16.gmra.mrb[0].mxu0 %v510
      %v766 = vpop.f32.mrb[0].mxu0
      %v767 = vadd.f32 0.0, %v766
      %v768 = vpop.f32.mrb[0].mxu0
      %v769 = vpop.f32.mrb[0].mxu0
      %v770 = vadd.f32 0.0, %v769
      %v771 = vpop.f32.mrb[0].mxu0
      %772 = vmatprep.mubr.bf16.mxu0 0
      %773 = vmatmul.mubr.bf16.gmra.mrb[0].mxu0 %v513
      %v774 = vpop.f32.mrb[0].mxu0
      %v775 = vadd.f32 0.0, %v774
      %v776 = vpop.f32.mrb[0].mxu0
      %v777 = vpop.f32.mrb[0].mxu0
      %v778 = vadd.f32 0.0, %v777
      %v779 = vpop.f32.mrb[0].mxu0
      %780 = vmatprep.mubr.bf16.mxu0 0
      %781 = vmatmul.mubr.bf16.gmra.mrb[0].mxu0 %v516
      %v782 = vpop.f32.mrb[0].mxu0
      %v783 = vadd.f32 0.0, %v782
      %v784 = vpop.f32.mrb[0].mxu0
      %v785 = vpop.f32.mrb[0].mxu0
      %v786 = vadd.f32 0.0, %v785
      %v787 = vpop.f32.mrb[0].mxu0
      %788 = vmatprep.mubr.bf16.mxu0 0
      %789 = vmatmul.mubr.bf16.gmra.mrb[0].mxu0 %v519
      %v790 = vpop.f32.mrb[0].mxu0
      %v791 = vadd.f32 0.0, %v790
      %v792 = vpop.f32.mrb[0].mxu0
      %v793 = vpop.f32.mrb[0].mxu0
      %v794 = vadd.f32 0.0, %v793
      %v795 = vpop.f32.mrb[0].mxu0
      %796 = vmatprep.mubr.bf16.mxu0 0
      %797 = vmatmul.mubr.bf16.gmra.mrb[0].mxu0 %v522
      %v798 = vpop.f32.mrb[0].mxu0
      %v799 = vadd.f32 0.0, %v798
      %v800 = vpop.f32.mrb[0].mxu0
      %v801 = vpop.f32.mrb[0].mxu0
      %v802 = vadd.f32 0.0, %v801
      %v803 = vpop.f32.mrb[0].mxu0
      %804 = vmatprep.mubr.bf16.mxu0 0
      %805 = vmatmul.mubr.bf16.gmra.mrb[0].mxu0 %v525
      %v806 = vpop.f32.mrb[0].mxu0
      %v807 = vadd.f32 0.0, %v806
      %v808 = vpop.f32.mrb[0].mxu0
      %v809 = vpop.f32.mrb[0].mxu0
      %v810 = vadd.f32 0.0, %v809
      %v811 = vpop.f32.mrb[0].mxu0
      %812 = vmatprep.mubr.bf16.mxu0 0
      %813 = vmatmul.mubr.bf16.gmra.mrb[0].mxu0 %v528
      %v814 = vpop.f32.mrb[0].mxu0
      %v815 = vadd.f32 0.0, %v814
      %v816 = vpop.f32.mrb[0].mxu0
      %v817 = vpop.f32.mrb[0].mxu0
      %v818 = vadd.f32 0.0, %v817
      %v819 = vpop.f32.mrb[0].mxu0
      %820 = vmatprep.mubr.bf16.mxu0 0
      %821 = vmatmul.mubr.bf16.gmra.mrb[0].mxu0 %v531
      %v822 = vpop.f32.mrb[0].mxu0
      %v823 = vadd.f32 0.0, %v822
      %v824 = vpop.f32.mrb[0].mxu0
      %v825 = vpop.f32.mrb[0].mxu0
      %v826 = vadd.f32 0.0, %v825
      %v827 = vpop.f32.mrb[0].mxu0
      %828 = vdwg.mxu0
      %829 = vst [vmem:[%s170] sm:$0xff] %v575
      %830 = vst [vmem:[%s170 + $0x8] sm:$0xff] %v578
      %831 = vst [vmem:[%s170 + $0x10] sm:$0xff] %v583
      %832 = vst [vmem:[%s170 + $0x18] sm:$0xff] %v586
      %833 = vst [vmem:[%s170 + $0x20] sm:$0xff] %v591
      %834 = vst [vmem:[%s170 + $0x28] sm:$0xff] %v594
      %835 = vst [vmem:[%s170 + $0x30] sm:$0xff] %v599
      %836 = vst [vmem:[%s170 + $0x38] sm:$0xff] %v602
      %837 = vst [vmem:[%s170 + $0x40] sm:$0xff] %v607
      %838 = vst [vmem:[%s170 + $0x48] sm:$0xff] %v610
      %839 = vst [vmem:[%s170 + $0x50] sm:$0xff] %v615
      %840 = vst [vmem:[%s170 + $0x58] sm:$0xff] %v618
      %841 = vst [vmem:[%s170 + $0x60] sm:$0xff] %v623
      %842 = vst [vmem:[%s170 + $0x68] sm:$0xff] %v626
      %843 = vst [vmem:[%s170 + $0x70] sm:$0xff] %v631
      %844 = vst [vmem:[%s170 + $0x78] sm:$0xff] %v634
      %845 = vst [vmem:[%s170 + $0x80] sm:$0xff] %v639
      %846 = vst [vmem:[%s170 + $0x88] sm:$0xff] %v642
      %847 = vst [vmem:[%s170 + $0x90] sm:$0xff] %v647
      %848 = vst [vmem:[%s170 + $0x98] sm:$0xff] %v650
      %849 = vst [vmem:[%s170 + $0xa0] sm:$0xff] %v655
      %850 = vst [vmem:[%s170 + $0xa8] sm:$0xff] %v658
      %851 = vst [vmem:[%s170 + $0xb0] sm:$0xff] %v663
      %852 = vst [vmem:[%s170 + $0xb8] sm:$0xff] %v666
      %853 = vst [vmem:[%s170 + $0xc0] sm:$0xff] %v671
      %854 = vst [vmem:[%s170 + $0xc8] sm:$0xff] %v674
      %855 = vst [vmem:[%s170 + $0xd0] sm:$0xff] %v679
      %856 = vst [vmem:[%s170 + $0xd8] sm:$0xff] %v682
      %857 = vst [vmem:[%s170 + $0xe0] sm:$0xff] %v687
      %858 = vst [vmem:[%s170 + $0xe8] sm:$0xff] %v690
      %859 = vst [vmem:[%s170 + $0xf0] sm:$0xff] %v695
      %860 = vst [vmem:[%s170 + $0xf8] sm:$0xff] %v698
      %861 = vst [vmem:[%s170 + $0x100] sm:$0xff] %v703
      %862 = vst [vmem:[%s170 + $0x108] sm:$0xff] %v706
      %863 = vst [vmem:[%s170 + $0x110] sm:$0xff] %v711
      %864 = vst [vmem:[%s170 + $0x118] sm:$0xff] %v714
      %865 = vst [vmem:[%s170 + $0x120] sm:$0xff] %v719
      %866 = vst [vmem:[%s170 + $0x128] sm:$0xff] %v722
      %867 = vst [vmem:[%s170 + $0x130] sm:$0xff] %v727
      %868 = vst [vmem:[%s170 + $0x138] sm:$0xff] %v730
      %869 = vst [vmem:[%s170 + $0x140] sm:$0xff] %v735
      %870 = vst [vmem:[%s170 + $0x148] sm:$0xff] %v738
      %871 = vst [vmem:[%s170 + $0x150] sm:$0xff] %v743
      %872 = vst [vmem:[%s170 + $0x158] sm:$0xff] %v746
      %873 = vst [vmem:[%s170 + $0x160] sm:$0xff] %v751
      %874 = vst [vmem:[%s170 + $0x168] sm:$0xff] %v754
      %875 = vst [vmem:[%s170 + $0x170] sm:$0xff] %v759
      %876 = vst [vmem:[%s170 + $0x178] sm:$0xff] %v762
      %877 = vst [vmem:[%s170 + $0x180] sm:$0xff] %v767
      %878 = vst [vmem:[%s170 + $0x188] sm:$0xff] %v770
      %879 = vst [vmem:[%s170 + $0x190] sm:$0xff] %v775
      %880 = vst [vmem:[%s170 + $0x198] sm:$0xff] %v778
      %881 = vst [vmem:[%s170 + $0x1a0] sm:$0xff] %v783
      %882 = vst [vmem:[%s170 + $0x1a8] sm:$0xff] %v786
      %883 = vst [vmem:[%s170 + $0x1b0] sm:$0xff] %v791
      %884 = vst [vmem:[%s170 + $0x1b8] sm:$0xff] %v794
      %885 = vst [vmem:[%s170 + $0x1c0] sm:$0xff] %v799
      %886 = vst [vmem:[%s170 + $0x1c8] sm:$0xff] %v802
      %887 = vst [vmem:[%s170 + $0x1d0] sm:$0xff] %v807
      %888 = vst [vmem:[%s170 + $0x1d8] sm:$0xff] %v810
      %889 = vst [vmem:[%s170 + $0x1e0] sm:$0xff] %v815
      %890 = vst [vmem:[%s170 + $0x1e8] sm:$0xff] %v818
      %891 = vst [vmem:[%s170 + $0x1f0] sm:$0xff] %v823
      %892 = vst [vmem:[%s170 + $0x1f8] sm:$0xff] %v826
      %v893 = vadd.f32 %v575, %v578
      %v894 = vadd.f32 %v893, %v583
      %v895 = vadd.f32 %v894, %v586
      %v896 = vadd.f32 %v895, %v591
      %v897 = vadd.f32 %v896, %v594
      %v898 = vadd.f32 %v897, %v599
      %v899 = vadd.f32 %v898, %v602
      %v900 = vadd.f32 %v899, %v607
      %v901 = vadd.f32 %v900, %v610
      %v902 = vadd.f32 %v901, %v615
      %v903 = vadd.f32 %v902, %v618
      %v904 = vadd.f32 %v903, %v623
      %v905 = vadd.f32 %v904, %v626
      %v906 = vadd.f32 %v905, %v631
      %v907 = vadd.f32 %v906, %v634
      %v908 = vadd.f32 %v907, %v639
      %v909 = vadd.f32 %v908, %v642
      %v910 = vadd.f32 %v909, %v647
      %v911 = vadd.f32 %v910, %v650
      %v912 = vadd.f32 %v911, %v655
      %v913 = vadd.f32 %v912, %v658
      %v914 = vadd.f32 %v913, %v663
      %v915 = vadd.f32 %v914, %v666
      %v916 = vadd.f32 %v915, %v671
      %v917 = vadd.f32 %v916, %v674
      %v918 = vadd.f32 %v917, %v679
      %v919 = vadd.f32 %v918, %v682
      %v920 = vadd.f32 %v919, %v687
      %v921 = vadd.f32 %v920, %v690
      %v922 = vadd.f32 %v921, %v695
      %v923 = vadd.f32 %v922, %v698
      %v924 = vadd.f32 %v923, %v703
      %v925 = vadd.f32 %v924, %v706
      %v926 = vadd.f32 %v925, %v711
      %v927 = vadd.f32 %v926, %v714
      %v928 = vadd.f32 %v927, %v719
      %v929 = vadd.f32 %v928, %v722
      %v930 = vadd.f32 %v929, %v727
      %v931 = vadd.f32 %v930, %v730
      %v932 = vadd.f32 %v931, %v735
      %v933 = vadd.f32 %v932, %v738
      %v934 = vadd.f32 %v933, %v743
      %v935 = vadd.f32 %v934, %v746
      %v936 = vadd.f32 %v935, %v751
      %v937 = vadd.f32 %v936, %v754
      %v938 = vadd.f32 %v937, %v759
      %v939 = vadd.f32 %v938, %v762
      %v940 = vadd.f32 %v939, %v767
      %v941 = vadd.f32 %v940, %v770
      %v942 = vadd.f32 %v941, %v775
      %v943 = vadd.f32 %v942, %v778
      %v944 = vadd.f32 %v943, %v783
      %v945 = vadd.f32 %v944, %v786
      %v946 = vadd.f32 %v945, %v791
      %v947 = vadd.f32 %v946, %v794
      %v948 = vadd.f32 %v947, %v799
      %v949 = vadd.f32 %v948, %v802
      %v950 = vadd.f32 %v949, %v807
      %v951 = vadd.f32 %v950, %v810
      %v952 = vadd.f32 %v951, %v815
      %v953 = vadd.f32 %v952, %v818
      %v954 = vadd.f32 %v953, %v823
      %v955 = vadd.f32 %v954, %v826
      %v956 = vrot.slane %v955, 4
      %v957 = vadd.f32 %v955, %v956
      %v958 = vrot.slane %v957, 2
      %v959 = vadd.f32 %v957, %v958
      %v960 = vrot.slane %v959, 1
      %v961 = vadd.f32 %v959, %v960
      %v962 = vmul.f32 %v575, %v575
      %v963 = vmul.f32 %v578, %v578
      %v964 = vmul.f32 %v583, %v583
      %v965 = vmul.f32 %v586, %v586
      %v966 = vmul.f32 %v591, %v591
      %v967 = vmul.f32 %v594, %v594
      %v968 = vmul.f32 %v599, %v599
      %v969 = vmul.f32 %v602, %v602
      %v970 = vmul.f32 %v607, %v607
      %v971 = vmul.f32 %v610, %v610
      %v972 = vmul.f32 %v615, %v615
      %v973 = vmul.f32 %v618, %v618
      %v974 = vmul.f32 %v623, %v623
      %v975 = vmul.f32 %v626, %v626
      %v976 = vmul.f32 %v631, %v631
      %v977 = vmul.f32 %v634, %v634
      %v978 = vmul.f32 %v639, %v639
      %v979 = vmul.f32 %v642, %v642
      %v980 = vmul.f32 %v647, %v647
      %v981 = vmul.f32 %v650, %v650
      %v982 = vmul.f32 %v655, %v655
      %v983 = vmul.f32 %v658, %v658
      %v984 = vmul.f32 %v663, %v663
      %v985 = vmul.f32 %v666, %v666
      %v986 = vmul.f32 %v671, %v671
      %v987 = vmul.f32 %v674, %v674
      %v988 = vmul.f32 %v679, %v679
      %v989 = vmul.f32 %v682, %v682
      %v990 = vmul.f32 %v687, %v687
      %v991 = vmul.f32 %v690, %v690
      %v992 = vmul.f32 %v695, %v695
      %v993 = vmul.f32 %v698, %v698
      %v994 = vmul.f32 %v703, %v703
      %v995 = vmul.f32 %v706, %v706
      %v996 = vmul.f32 %v711, %v711
      %v997 = vmul.f32 %v714, %v714
      %v998 = vmul.f32 %v719, %v719
      %v999 = vmul.f32 %v722, %v722
      %v1000 = vmul.f32 %v727, %v727
      %v1001 = vmul.f32 %v730, %v730
      %v1002 = vmul.f32 %v735, %v735
      %v1003 = vmul.f32 %v738, %v738
      %v1004 = vmul.f32 %v743, %v743
      %v1005 = vmul.f32 %v746, %v746
      %v1006 = vmul.f32 %v751, %v751
      %v1007 = vmul.f32 %v754, %v754
      %v1008 = vmul.f32 %v759, %v759
      %v1009 = vmul.f32 %v762, %v762
      %v1010 = vmul.f32 %v767, %v767
      %v1011 = vmul.f32 %v770, %v770
      %v1012 = vmul.f32 %v775, %v775
      %v1013 = vmul.f32 %v778, %v778
      %v1014 = vmul.f32 %v783, %v783
      %v1015 = vmul.f32 %v786, %v786
      %v1016 = vmul.f32 %v791, %v791
      %v1017 = vmul.f32 %v794, %v794
      %v1018 = vmul.f32 %v799, %v799
      %v1019 = vmul.f32 %v802, %v802
      %v1020 = vmul.f32 %v807, %v807
      %v1021 = vmul.f32 %v810, %v810
      %v1022 = vmul.f32 %v815, %v815
      %v1023 = vmul.f32 %v818, %v818
      %v1024 = vmul.f32 %v823, %v823
      %v1025 = vmul.f32 %v826, %v826
      %v1026 = vadd.f32 %v962, %v963
      %v1027 = vadd.f32 %v1026, %v964
      %v1028 = vadd.f32 %v1027, %v965
      %v1029 = vadd.f32 %v1028, %v966
      %v1030 = vadd.f32 %v1029, %v967
      %v1031 = vadd.f32 %v1030, %v968
      %v1032 = vadd.f32 %v1031, %v969
      %v1033 = vadd.f32 %v1032, %v970
      %v1034 = vadd.f32 %v1033, %v971
      %v1035 = vadd.f32 %v1034, %v972
      %v1036 = vadd.f32 %v1035, %v973
      %v1037 = vadd.f32 %v1036, %v974
      %v1038 = vadd.f32 %v1037, %v975
      %v1039 = vadd.f32 %v1038, %v976
      %v1040 = vadd.f32 %v1039, %v977
      %v1041 = vadd.f32 %v1040, %v978
      %v1042 = vadd.f32 %v1041, %v979
      %v1043 = vadd.f32 %v1042, %v980
      %v1044 = vadd.f32 %v1043, %v981
      %v1045 = vadd.f32 %v1044, %v982
      %v1046 = vadd.f32 %v1045, %v983
      %v1047 = vadd.f32 %v1046, %v984
      %v1048 = vadd.f32 %v1047, %v985
      %v1049 = vadd.f32 %v1048, %v986
      %v1050 = vadd.f32 %v1049, %v987
      %v1051 = vadd.f32 %v1050, %v988
      %v1052 = vadd.f32 %v1051, %v989
      %v1053 = vadd.f32 %v1052, %v990
      %v1054 = vadd.f32 %v1053, %v991
      %v1055 = vadd.f32 %v1054, %v992
      %v1056 = vadd.f32 %v1055, %v993
      %v1057 = vadd.f32 %v1056, %v994
      %v1058 = vadd.f32 %v1057, %v995
      %v1059 = vadd.f32 %v1058, %v996
      %v1060 = vadd.f32 %v1059, %v997
      %v1061 = vadd.f32 %v1060, %v998
      %v1062 = vadd.f32 %v1061, %v999
      %v1063 = vadd.f32 %v1062, %v1000
      %v1064 = vadd.f32 %v1063, %v1001
      %v1065 = vadd.f32 %v1064, %v1002
      %v1066 = vadd.f32 %v1065, %v1003
      %v1067 = vadd.f32 %v1066, %v1004
      %v1068 = vadd.f32 %v1067, %v1005
      %v1069 = vadd.f32 %v1068, %v1006
      %v1070 = vadd.f32 %v1069, %v1007
      %v1071 = vadd.f32 %v1070, %v1008
      %v1072 = vadd.f32 %v1071, %v1009
      %v1073 = vadd.f32 %v1072, %v1010
      %v1074 = vadd.f32 %v1073, %v1011
      %v1075 = vadd.f32 %v1074, %v1012
      %v1076 = vadd.f32 %v1075, %v1013
      %v1077 = vadd.f32 %v1076, %v1014
      %v1078 = vadd.f32 %v1077, %v1015
      %v1079 = vadd.f32 %v1078, %v1016
      %v1080 = vadd.f32 %v1079, %v1017
      %v1081 = vadd.f32 %v1080, %v1018
      %v1082 = vadd.f32 %v1081, %v1019
      %v1083 = vadd.f32 %v1082, %v1020
      %v1084 = vadd.f32 %v1083, %v1021
      %v1085 = vadd.f32 %v1084, %v1022
      %v1086 = vadd.f32 %v1085, %v1023
      %v1087 = vadd.f32 %v1086, %v1024
      %v1088 = vadd.f32 %v1087, %v1025
      %v1089 = vrot.slane %v1088, 4
      %v1090 = vadd.f32 %v1088, %v1089
      %v1091 = vrot.slane %v1090, 2
      %v1092 = vadd.f32 %v1090, %v1091
      %v1093 = vrot.slane %v1092, 1
      %v1094 = vadd.f32 %v1092, %v1093
      %p1095 = scmp.eq.s32.totalorder %s15, 0
      // Predicated region
      $region29: #{dqn_forward.4} parent=27 // pred_check
        %p1096 = pneg %p1095
      $region30: #{dqn_forward.4} parent=27 // pred_check_branch
        %1098 = sbr.rel (%p1096) target = $region32
      $region31: #{dqn_forward.4} parent=27 // pred_region
        %1099 = vst [vmem:[%s3] sm:$0x3] 0.0
      $region32: #{dqn_forward.4} parent=27 // pred_fallthru
        _
      %v1100 = vld [vmem:[%s3] sm:$0x3]
      %vm1101 = vcmask 1040384
      %v1102 = vsel %vm1101, %v961, %v1094
      %v1103 = vadd.f32 %v1100, %v1102
      %1104 = vst [vmem:[%s3] sm:$0x3] %v1103
      %s1105 = smul.u32 64, %s15
      %p1106 = scmp.lt.s32.totalorder %s1105, 127
      %s1107 = scalar_select %p1106, %s1105, 127
      %s1108 = smul.addr %s1107, 8
      %s1109 = scalar_lea.vmem %s2, %s1108
      // Predicated region
      $region33: #{dqn_forward.4} parent=27 // pred_check
        %p1110 = pneg %p80
      $region34: #{dqn_forward.4} parent=27 // pred_check_branch
        %1112 = sbr.rel (%p1110) target = $region36
      $region35: #{dqn_forward.4} parent=27 // pred_region
        %s1113 = smul.u32 64, %s15
      $region36: #{dqn_forward.4} parent=27 // pred_fallthru
        _
      // Predicated region
      $region37: #{dqn_forward.4} parent=27 // pred_check
        %p1114 = pneg %p101
      $region38: #{dqn_forward.4} parent=27 // pred_check_branch
        %1116 = sbr.rel (%p1114) target = $region40
      $region39: #{dqn_forward.4} parent=27 // pred_region
        _
      $region40: #{dqn_forward.4} parent=27 // pred_fallthru
        _
      // Predicated region
      $region41: #{dqn_forward.4} parent=27 // pred_check
        %p1117 = pneg %p101
      $region42: #{dqn_forward.4} parent=27 // pred_check_branch
        %1119 = sbr.rel (%p1117) target = $region44
      $region43: #{dqn_forward.4} parent=27 // pred_region
        _
      $region44: #{dqn_forward.4} parent=27 // pred_fallthru
        _
    $region28: #{dqn_forward.4} parent=5 // pred_fallthru
      _
    %p1120 = scmp.le.s32.totalorder 2, %s10
    // Predicated region
    $region45: #{dqn_forward.4} parent=5 // pred_check
      %p1121 = pneg %p1120
    $region46: #{dqn_forward.4} parent=5 // pred_check_branch
      %1123 = sbr.rel (%p1121) target = $region48
    $region47: #{dqn_forward.4} parent=5 // pred_region
      %s1124 = ssub.s32 %s10, 2
      // Predicated region
      $region49: #{dqn_forward.4} parent=47 // pred_check
        %p1125 = pneg %p86
      $region50: #{dqn_forward.4} parent=47 // pred_check_branch
        %1127 = sbr.rel (%p1125) target = $region52
      $region51: #{dqn_forward.4} parent=47 // pred_region
        %s1128 = smul.u32 64, %s16
        %p1129 = scmp.lt.s32.totalorder %s1128, 127
        %s1130 = scalar_select %p1129, %s1128, 127
        %s1131 = smul.addr %s1130, 8
        %s1132 = scalar_lea.vmem %s2, %s1131
      $region52: #{dqn_forward.4} parent=47 // pred_fallthru
        _
    $region48: #{dqn_forward.4} parent=5 // pred_fallthru
      _
  $region6: #{dqn_forward.4} parent=0 // loop_footer
    %s14 = sadd.s32 1, %s10
  $region7: #{dqn_forward.4} parent=0 // loop_footer_branch
    %9 = sbr.rel target = $region3
  $region8: #{dqn_forward.4} parent=0 // loop_exit
    _

// kernel: dqn_forward.5
$region0: #{dqn_forward.5}
  #allocation0 [shape = 'u32[]', space=smem, size = 0x4, offset = 0x4, fixed_abs, tag = 'smem constant byte address 0x4 - core index']
  #allocation1 [shape = 'u32[144,128]{1,0:T(1,128)}', space=vmem, size = 0x12000, scoped, tag = 'internal scratch']
  %s0 = inlined_call_operand.vmem [shape: f32[1024,128], index: 0, kind: input, shape index: {}]
  %s1 = inlined_call_operand.vmem [shape: f32[2,128], index: 1, kind: input, shape index: {}]
  %s2 = inlined_call_operand.vmem [shape: f32[2,128], index: 2, kind: input, shape index: {}]
  %s3 = inlined_call_operand.vmem [shape: bf16[1024,128], index: 3, kind: output, shape index: {}]
  %s4 = sld [smem:[#allocation0]]
  $region45: #{dqn_forward.5} parent=0
    _
  %s6 = ssub.s32 1, %s4
  %s7 = scalar_select 0, %s6, %s4
  loop: start=0, step=1, limit=4
  $region2: #{dqn_forward.5} parent=0 // loop_pre_header
    _
  $region3: #{dqn_forward.5} parent=0 // loop_header
    %s9 = sphi 0, %s13
    %p10 = scmp.ge.s32.totalorder %s9, 4
    %s19 = sphi 0, %s21
    %s22 = sphi 0, %s19
    %s23 = sphi 0, %s22
    %s39 = sphi 0, %s23
    %s43 = sphi 0, %s43
    %s45 = sphi 0, %s43
    %s46 = sphi 0, %s45
    %s60 = sphi 0, %s46
    %s64 = sphi 0, %s64
    %s66 = sphi 0, %s64
    %s67 = sphi 0, %s66
    %s81 = sphi 0, %s67
    %s87 = sphi 0, %s89
    %s90 = sphi 0, %s87
    %s91 = sphi 0, %s90
    %s107 = sphi 0, %s91
  $region4: #{dqn_forward.5} parent=0 // loop_header_branch
    %12 = sbr.rel (%p10) target = $region8
  $region5: #{dqn_forward.5} parent=0 // loop_body
    %s14 = ssub.s32 %s9, 1
    %s15 = ssub.s32 %s9, 2
    %s16 = sadd.s32 %s9, 1
    %s17 = ssub.s32 %s9, %s16
    %p18 = scmp.eq.s32.totalorder %s17, 0
    %s20 = sadd.s32 %s19, 1
    %s21 = scalar_select %p18, %s19, %s20
    %p24 = pneg %p18
    %p25 = scmp.eq.s32.totalorder %s9, 1
    %p26 = por %p24, %p25
    %p27 = scmp.ne.s32.totalorder %s19, %s22
    %p28 = scmp.eq.s32.totalorder %s9, 0
    %p29 = por %p27, %p28
    %p30 = scmp.ne.s32.totalorder %s19, %s22
    %p31 = scmp.eq.s32.totalorder %s14, 1
    %p32 = por %p30, %p31
    %p33 = scmp.ne.s32.totalorder %s22, %s23
    %p34 = scmp.eq.s32.totalorder %s14, 0
    %p35 = por %p33, %p34
    %p36 = scmp.ne.s32.totalorder %s22, %s23
    %p37 = scmp.eq.s32.totalorder %s15, 1
    %p38 = por %p36, %p37
    %p40 = scmp.ne.s32.totalorder %s23, %s39
    %p41 = scmp.eq.s32.totalorder %s15, 0
    %p42 = por %p40, %p41
    %s44 = sadd.s32 %s43, 1
    %p47 = scmp.eq.s32.totalorder %s9, 1
    %p48 = scmp.ne.s32.totalorder %s43, %s45
    %p49 = scmp.eq.s32.totalorder %s9, 0
    %p50 = por %p48, %p49
    %p51 = scmp.ne.s32.totalorder %s43, %s45
    %p52 = scmp.eq.s32.totalorder %s14, 1
    %p53 = por %p51, %p52
    %p54 = scmp.ne.s32.totalorder %s45, %s46
    %p55 = scmp.eq.s32.totalorder %s14, 0
    %p56 = por %p54, %p55
    %p57 = scmp.ne.s32.totalorder %s45, %s46
    %p58 = scmp.eq.s32.totalorder %s15, 1
    %p59 = por %p57, %p58
    %p61 = scmp.ne.s32.totalorder %s46, %s60
    %p62 = scmp.eq.s32.totalorder %s15, 0
    %p63 = por %p61, %p62
    %s65 = sadd.s32 %s64, 1
    %p68 = scmp.eq.s32.totalorder %s9, 1
    %p69 = scmp.ne.s32.totalorder %s64, %s66
    %p70 = scmp.eq.s32.totalorder %s9, 0
    %p71 = por %p69, %p70
    %p72 = scmp.ne.s32.totalorder %s64, %s66
    %p73 = scmp.eq.s32.totalorder %s14, 1
    %p74 = por %p72, %p73
    %p75 = scmp.ne.s32.totalorder %s66, %s67
    %p76 = scmp.eq.s32.totalorder %s14, 0
    %p77 = por %p75, %p76
    %p78 = scmp.ne.s32.totalorder %s66, %s67
    %p79 = scmp.eq.s32.totalorder %s15, 1
    %p80 = por %p78, %p79
    %p82 = scmp.ne.s32.totalorder %s67, %s81
    %p83 = scmp.eq.s32.totalorder %s15, 0
    %p84 = por %p82, %p83
    %s85 = ssub.s32 %s9, %s16
    %p86 = scmp.eq.s32.totalorder %s85, 0
    %s88 = sadd.s32 %s87, 1
    %s89 = scalar_select %p86, %s87, %s88
    %p92 = pneg %p86
    %p93 = scmp.eq.s32.totalorder %s9, 1
    %p94 = por %p92, %p93
    %p95 = scmp.ne.s32.totalorder %s87, %s90
    %p96 = scmp.eq.s32.totalorder %s9, 0
    %p97 = por %p95, %p96
    %p98 = scmp.ne.s32.totalorder %s87, %s90
    %p99 = scmp.eq.s32.totalorder %s14, 1
    %p100 = por %p98, %p99
    %p101 = scmp.ne.s32.totalorder %s90, %s91
    %p102 = scmp.eq.s32.totalorder %s14, 0
    %p103 = por %p101, %p102
    %p104 = scmp.ne.s32.totalorder %s90, %s91
    %p105 = scmp.eq.s32.totalorder %s15, 1
    %p106 = por %p104, %p105
    %p108 = scmp.ne.s32.totalorder %s91, %s107
    %p109 = scmp.eq.s32.totalorder %s15, 0
    %p110 = por %p108, %p109
    %p111 = scmp.le.s32.totalorder 1, %s9
    %p112 = scmp.lt.s32.totalorder %s9, 3
    %p113 = pnand %p111, %p112
    %p114 = pneg %p113
    // Predicated region
    $region9: #{dqn_forward.5} parent=5 // pred_check
      _
    $region10: #{dqn_forward.5} parent=5 // pred_check_branch
      %116 = sbr.rel (%p113) target = $region12
    $region11: #{dqn_forward.5} parent=5 // pred_region
      %s117 = ssub.s32 %s9, 1
      // Predicated region
      $region13: #{dqn_forward.5} parent=11 // pred_check
        %p118 = pneg %p56
      $region14: #{dqn_forward.5} parent=11 // pred_check_branch
        %120 = sbr.rel (%p118) target = $region16
      $region15: #{dqn_forward.5} parent=11 // pred_region
        _
      $region16: #{dqn_forward.5} parent=11 // pred_fallthru
        _
      // Predicated region
      $region17: #{dqn_forward.5} parent=11 // pred_check
        %p121 = pneg %p77
      $region18: #{dqn_forward.5} parent=11 // pred_check_branch
        %123 = sbr.rel (%p121) target = $region20
      $region19: #{dqn_forward.5} parent=11 // pred_region
        _
      $region20: #{dqn_forward.5} parent=11 // pred_fallthru
        _
    $region12: #{dqn_forward.5} parent=5 // pred_fallthru
      _
    %p124 = scmp.lt.s32.totalorder %s9, 2
    // Predicated region
    $region21: #{dqn_forward.5} parent=5 // pred_check
      %p125 = pneg %p124
    $region22: #{dqn_forward.5} parent=5 // pred_check_branch
      %127 = sbr.rel (%p125) target = $region24
    $region23: #{dqn_forward.5} parent=5 // pred_region
      // Predicated region
      $region25: #{dqn_forward.5} parent=23 // pred_check
        %p128 = pneg %p29
      $region26: #{dqn_forward.5} parent=23 // pred_check_branch
        %130 = sbr.rel (%p128) target = $region28
      $region27: #{dqn_forward.5} parent=23 // pred_region
        %s131 = smul.u32 64, %s9
        %p132 = scmp.lt.s32.totalorder %s131, 127
        %s133 = scalar_select %p132, %s131, 127
        %s134 = smul.addr %s133, 8
        %s135 = scalar_lea.vmem %s0, %s134
        %s136 = smul.u32 64, %s9
      $region28: #{dqn_forward.5} parent=23 // pred_fallthru
        _
    $region24: #{dqn_forward.5} parent=5 // pred_fallthru
      _
    %p137 = scmp.le.s32.totalorder 1, %s9
    %p138 = scmp.lt.s32.totalorder %s9, 3
    %p139 = pnand %p137, %p138
    %p140 = pneg %p139
    // Predicated region
    $region29: #{dqn_forward.5} parent=5 // pred_check
      _
    $region30: #{dqn_forward.5} parent=5 // pred_check_branch
      %142 = sbr.rel (%p139) target = $region32
    $region31: #{dqn_forward.5} parent=5 // pred_region
      %s143 = ssub.s32 %s9, 1
      %s144 = smul.u32 64, %s14
      %p145 = scmp.lt.s32.totalorder %s144, 127
      %s146 = scalar_select %p145, %s144, 127
      %s147 = smul.addr %s146, 8
      %s148 = scalar_lea.vmem %s0, %s147
      %p149 = pneg %p35
      %p150 = pneg %p32
      %p151 = pneg %p56
      %p152 = pneg %p53
      %p153 = pneg %p77
      %p154 = pneg %p74
      %p155 = pneg %p103
      %p156 = pneg %p100
      %s157 = smul.u32 64, %s14
      %p158 = scmp.lt.s32.totalorder %s157, 127
      %s159 = scalar_select %p158, %s157, 127
      %s160 = smul.addr %s159, 4
      %s161 = scalar_lea.vmem %s3, %s160
      %s162 = smul.u32 64, %s14
      %p163 = scmp.lt.s32.totalorder %s162, 127
      %s164 = scalar_select %p163, %s162, 127
      %s165 = smul.addr %s164, 8
      %s166 = scalar_lea.vmem %s0, %s165
      %s167 = smul.u32 64, %s14
      %s168 = smul.u32 64, %s14
      %p169 = scmp.lt.s32.totalorder %s168, 127
      %s170 = scalar_select %p169, %s168, 127
      %s171 = smul.addr %s170, 4
      %s172 = scalar_lea.vmem %s3, %s171
      %s173 = smul.u32 64, %s14
      %v174 = vld [vmem:[%s1] sm:$0x1]
      %v175 = vmul.f32 %v174, 0.0015432099
      %v176 = vld [vmem:[%s1 + $0x1] sm:$0x1]
      %v177 = vmul.f32 %v176, 0.0015432099
      %v178 = vmul.f32 %v175, %v175
      %v179 = vsub.f32 %v177, %v178
      %v180 = vmax.f32 %v179, 0.0
      %v181 = vld [vmem:[%s2] sm:$0x1]
      %v182 = vadd.f32 %v180, 1e-05
      %v183 = vrsqrt.pop %v182
      %v184 = vmul.f32 %v181, %v183
      %v185 = vld [vmem:[%s2 + $0x1] sm:$0x1]
      %v186 = vmul.f32 %v175, %v184
      %v187 = vsub.f32 %v185, %v186
      %v188 = vld [vmem:[%s166] sm:$0xff]
      %v189 = vld [vmem:[%s166 + $0x8] sm:$0xff]
      %v190 = vld [vmem:[%s166 + $0x10] sm:$0xff]
      %v191 = vld [vmem:[%s166 + $0x18] sm:$0xff]
      %v192 = vld [vmem:[%s166 + $0x20] sm:$0xff]
      %v193 = vld [vmem:[%s166 + $0x28] sm:$0xff]
      %v194 = vld [vmem:[%s166 + $0x30] sm:$0xff]
      %v195 = vld [vmem:[%s166 + $0x38] sm:$0xff]
      %v196 = vld [vmem:[%s166 + $0x40] sm:$0xff]
      %v197 = vld [vmem:[%s166 + $0x48] sm:$0xff]
      %v198 = vld [vmem:[%s166 + $0x50] sm:$0xff]
      %v199 = vld [vmem:[%s166 + $0x58] sm:$0xff]
      %v200 = vld [vmem:[%s166 + $0x60] sm:$0xff]
      %v201 = vld [vmem:[%s166 + $0x68] sm:$0xff]
      %v202 = vld [vmem:[%s166 + $0x70] sm:$0xff]
      %v203 = vld [vmem:[%s166 + $0x78] sm:$0xff]
      %v204 = vld [vmem:[%s166 + $0x80] sm:$0xff]
      %v205 = vld [vmem:[%s166 + $0x88] sm:$0xff]
      %v206 = vld [vmem:[%s166 + $0x90] sm:$0xff]
      %v207 = vld [vmem:[%s166 + $0x98] sm:$0xff]
      %v208 = vld [vmem:[%s166 + $0xa0] sm:$0xff]
      %v209 = vld [vmem:[%s166 + $0xa8] sm:$0xff]
      %v210 = vld [vmem:[%s166 + $0xb0] sm:$0xff]
      %v211 = vld [vmem:[%s166 + $0xb8] sm:$0xff]
      %v212 = vld [vmem:[%s166 + $0xc0] sm:$0xff]
      %v213 = vld [vmem:[%s166 + $0xc8] sm:$0xff]
      %v214 = vld [vmem:[%s166 + $0xd0] sm:$0xff]
      %v215 = vld [vmem:[%s166 + $0xd8] sm:$0xff]
      %v216 = vld [vmem:[%s166 + $0xe0] sm:$0xff]
      %v217 = vld [vmem:[%s166 + $0xe8] sm:$0xff]
      %v218 = vld [vmem:[%s166 + $0xf0] sm:$0xff]
      %v219 = vld [vmem:[%s166 + $0xf8] sm:$0xff]
      %v220 = vld [vmem:[%s166 + $0x100] sm:$0xff]
      %v221 = vld [vmem:[%s166 + $0x108] sm:$0xff]
      %v222 = vld [vmem:[%s166 + $0x110] sm:$0xff]
      %v223 = vld [vmem:[%s166 + $0x118] sm:$0xff]
      %v224 = vld [vmem:[%s166 + $0x120] sm:$0xff]
      %v225 = vld [vmem:[%s166 + $0x128] sm:$0xff]
      %v226 = vld [vmem:[%s166 + $0x130] sm:$0xff]
      %v227 = vld [vmem:[%s166 + $0x138] sm:$0xff]
      %v228 = vld [vmem:[%s166 + $0x140] sm:$0xff]
      %v229 = vld [vmem:[%s166 + $0x148] sm:$0xff]
      %v230 = vld [vmem:[%s166 + $0x150] sm:$0xff]
      %v231 = vld [vmem:[%s166 + $0x158] sm:$0xff]
      %v232 = vld [vmem:[%s166 + $0x160] sm:$0xff]
      %v233 = vld [vmem:[%s166 + $0x168] sm:$0xff]
      %v234 = vld [vmem:[%s166 + $0x170] sm:$0xff]
      %v235 = vld [vmem:[%s166 + $0x178] sm:$0xff]
      %v236 = vld [vmem:[%s166 + $0x180] sm:$0xff]
      %v237 = vld [vmem:[%s166 + $0x188] sm:$0xff]
      %v238 = vld [vmem:[%s166 + $0x190] sm:$0xff]
      %v239 = vld [vmem:[%s166 + $0x198] sm:$0xff]
      %v240 = vld [vmem:[%s166 + $0x1a0] sm:$0xff]
      %v241 = vld [vmem:[%s166 + $0x1a8] sm:$0xff]
      %v242 = vld [vmem:[%s166 + $0x1b0] sm:$0xff]
      %v243 = vld [vmem:[%s166 + $0x1b8] sm:$0xff]
      %v244 = vld [vmem:[%s166 + $0x1c0] sm:$0xff]
      %v245 = vld [vmem:[%s166 + $0x1c8] sm:$0xff]
      %v246 = vld [vmem:[%s166 + $0x1d0] sm:$0xff]
      %v247 = vld [vmem:[%s166 + $0x1d8] sm:$0xff]
      %v248 = vld [vmem:[%s166 + $0x1e0] sm:$0xff]
      %v249 = vld [vmem:[%s166 + $0x1e8] sm:$0xff]
      %v250 = vld [vmem:[%s166 + $0x1f0] sm:$0xff]
      %v251 = vld [vmem:[%s166 + $0x1f8] sm:$0xff]
      %v252 = vlaneseq
      %v253 = vshrl.u32 %v252, 7
      %v254 = vsub.s32 0, %v253
      %v255 = vrot.slane %v184, %v254
      %v256 = vmul.f32 %v188, %v255
      %v257 = vmul.f32 %v189, %v255
      %v258 = vmul.f32 %v190, %v255
      %v259 = vmul.f32 %v191, %v255
      %v260 = vmul.f32 %v192, %v255
      %v261 = vmul.f32 %v193, %v255
      %v262 = vmul.f32 %v194, %v255
      %v263 = vmul.f32 %v195, %v255
      %v264 = vmul.f32 %v196, %v255
      %v265 = vmul.f32 %v197, %v255
      %v266 = vmul.f32 %v198, %v255
      %v267 = vmul.f32 %v199, %v255
      %v268 = vmul.f32 %v200, %v255
      %v269 = vmul.f32 %v201, %v255
      %v270 = vmul.f32 %v202, %v255
      %v271 = vmul.f32 %v203, %v255
      %v272 = vmul.f32 %v204, %v255
      %v273 = vmul.f32 %v205, %v255
      %v274 = vmul.f32 %v206, %v255
      %v275 = vmul.f32 %v207, %v255
      %v276 = vmul.f32 %v208, %v255
      %v277 = vmul.f32 %v209, %v255
      %v278 = vmul.f32 %v210, %v255
      %v279 = vmul.f32 %v211, %v255
      %v280 = vmul.f32 %v212, %v255
      %v281 = vmul.f32 %v213, %v255
      %v282 = vmul.f32 %v214, %v255
      %v283 = vmul.f32 %v215, %v255
      %v284 = vmul.f32 %v216, %v255
      %v285 = vmul.f32 %v217, %v255
      %v286 = vmul.f32 %v218, %v255
      %v287 = vmul.f32 %v219, %v255
      %v288 = vmul.f32 %v220, %v255
      %v289 = vmul.f32 %v221, %v255
      %v290 = vmul.f32 %v222, %v255
      %v291 = vmul.f32 %v223, %v255
      %v292 = vmul.f32 %v224, %v255
      %v293 = vmul.f32 %v225, %v255
      %v294 = vmul.f32 %v226, %v255
      %v295 = vmul.f32 %v227, %v255
      %v296 = vmul.f32 %v228, %v255
      %v297 = vmul.f32 %v229, %v255
      %v298 = vmul.f32 %v230, %v255
      %v299 = vmul.f32 %v231, %v255
      %v300 = vmul.f32 %v232, %v255
      %v301 = vmul.f32 %v233, %v255
      %v302 = vmul.f32 %v234, %v255
      %v303 = vmul.f32 %v235, %v255
      %v304 = vmul.f32 %v236, %v255
      %v305 = vmul.f32 %v237, %v255
      %v306 = vmul.f32 %v238, %v255
      %v307 = vmul.f32 %v239, %v255
      %v308 = vmul.f32 %v240, %v255
      %v309 = vmul.f32 %v241, %v255
      %v310 = vmul.f32 %v242, %v255
      %v311 = vmul.f32 %v243, %v255
      %v312 = vmul.f32 %v244, %v255
      %v313 = vmul.f32 %v245, %v255
      %v314 = vmul.f32 %v246, %v255
      %v315 = vmul.f32 %v247, %v255
      %v316 = vmul.f32 %v248, %v255
      %v317 = vmul.f32 %v249, %v255
      %v318 = vmul.f32 %v250, %v255
      %v319 = vmul.f32 %v251, %v255
      %v320 = vlaneseq
      %v321 = vshrl.u32 %v320, 7
      %v322 = vsub.s32 0, %v321
      %v323 = vrot.slane %v187, %v322
      %v324 = vadd.f32 %v256, %v323
      %v325 = vadd.f32 %v257, %v323
      %v326 = vadd.f32 %v258, %v323
      %v327 = vadd.f32 %v259, %v323
      %v328 = vadd.f32 %v260, %v323
      %v329 = vadd.f32 %v261, %v323
      %v330 = vadd.f32 %v262, %v323
      %v331 = vadd.f32 %v263, %v323
      %v332 = vadd.f32 %v264, %v323
      %v333 = vadd.f32 %v265, %v323
      %v334 = vadd.f32 %v266, %v323
      %v335 = vadd.f32 %v267, %v323
      %v336 = vadd.f32 %v268, %v323
      %v337 = vadd.f32 %v269, %v323
      %v338 = vadd.f32 %v270, %v323
      %v339 = vadd.f32 %v271, %v323
      %v340 = vadd.f32 %v272, %v323
      %v341 = vadd.f32 %v273, %v323
      %v342 = vadd.f32 %v274, %v323
      %v343 = vadd.f32 %v275, %v323
      %v344 = vadd.f32 %v276, %v323
      %v345 = vadd.f32 %v277, %v323
      %v346 = vadd.f32 %v278, %v323
      %v347 = vadd.f32 %v279, %v323
      %v348 = vadd.f32 %v280, %v323
      %v349 = vadd.f32 %v281, %v323
      %v350 = vadd.f32 %v282, %v323
      %v351 = vadd.f32 %v283, %v323
      %v352 = vadd.f32 %v284, %v323
      %v353 = vadd.f32 %v285, %v323
      %v354 = vadd.f32 %v286, %v323
      %v355 = vadd.f32 %v287, %v323
      %v356 = vadd.f32 %v288, %v323
      %v357 = vadd.f32 %v289, %v323
      %v358 = vadd.f32 %v290, %v323
      %v359 = vadd.f32 %v291, %v323
      %v360 = vadd.f32 %v292, %v323
      %v361 = vadd.f32 %v293, %v323
      %v362 = vadd.f32 %v294, %v323
      %v363 = vadd.f32 %v295, %v323
      %v364 = vadd.f32 %v296, %v323
      %v365 = vadd.f32 %v297, %v323
      %v366 = vadd.f32 %v298, %v323
      %v367 = vadd.f32 %v299, %v323
      %v368 = vadd.f32 %v300, %v323
      %v369 = vadd.f32 %v301, %v323
      %v370 = vadd.f32 %v302, %v323
      %v371 = vadd.f32 %v303, %v323
      %v372 = vadd.f32 %v304, %v323
      %v373 = vadd.f32 %v305, %v323
      %v374 = vadd.f32 %v306, %v323
      %v375 = vadd.f32 %v307, %v323
      %v376 = vadd.f32 %v308, %v323
      %v377 = vadd.f32 %v309, %v323
      %v378 = vadd.f32 %v310, %v323
      %v379 = vadd.f32 %v311, %v323
      %v380 = vadd.f32 %v312, %v323
      %v381 = vadd.f32 %v313, %v323
      %v382 = vadd.f32 %v314, %v323
      %v383 = vadd.f32 %v315, %v323
      %v384 = vadd.f32 %v316, %v323
      %v385 = vadd.f32 %v317, %v323
      %v386 = vadd.f32 %v318, %v323
      %v387 = vadd.f32 %v319, %v323
      %v388 = vmax.f32 %v324, 0.0
      %v389 = vmax.f32 %v325, 0.0
      %v390 = vmax.f32 %v326, 0.0
      %v391 = vmax.f32 %v327, 0.0
      %v392 = vmax.f32 %v328, 0.0
      %v393 = vmax.f32 %v329, 0.0
      %v394 = vmax.f32 %v330, 0.0
      %v395 = vmax.f32 %v331, 0.0
      %v396 = vmax.f32 %v332, 0.0
      %v397 = vmax.f32 %v333, 0.0
      %v398 = vmax.f32 %v334, 0.0
      %v399 = vmax.f32 %v335, 0.0
      %v400 = vmax.f32 %v336, 0.0
      %v401 = vmax.f32 %v337, 0.0
      %v402 = vmax.f32 %v338, 0.0
      %v403 = vmax.f32 %v339, 0.0
      %v404 = vmax.f32 %v340, 0.0
      %v405 = vmax.f32 %v341, 0.0
      %v406 = vmax.f32 %v342, 0.0
      %v407 = vmax.f32 %v343, 0.0
      %v408 = vmax.f32 %v344, 0.0
      %v409 = vmax.f32 %v345, 0.0
      %v410 = vmax.f32 %v346, 0.0
      %v411 = vmax.f32 %v347, 0.0
      %v412 = vmax.f32 %v348, 0.0
      %v413 = vmax.f32 %v349, 0.0
      %v414 = vmax.f32 %v350, 0.0
      %v415 = vmax.f32 %v351, 0.0
      %v416 = vmax.f32 %v352, 0.0
      %v417 = vmax.f32 %v353, 0.0
      %v418 = vmax.f32 %v354, 0.0
      %v419 = vmax.f32 %v355, 0.0
      %v420 = vmax.f32 %v356, 0.0
      %v421 = vmax.f32 %v357, 0.0
      %v422 = vmax.f32 %v358, 0.0
      %v423 = vmax.f32 %v359, 0.0
      %v424 = vmax.f32 %v360, 0.0
      %v425 = vmax.f32 %v361, 0.0
      %v426 = vmax.f32 %v362, 0.0
      %v427 = vmax.f32 %v363, 0.0
      %v428 = vmax.f32 %v364, 0.0
      %v429 = vmax.f32 %v365, 0.0
      %v430 = vmax.f32 %v366, 0.0
      %v431 = vmax.f32 %v367, 0.0
      %v432 = vmax.f32 %v368, 0.0
      %v433 = vmax.f32 %v369, 0.0
      %v434 = vmax.f32 %v370, 0.0
      %v435 = vmax.f32 %v371, 0.0
      %v436 = vmax.f32 %v372, 0.0
      %v437 = vmax.f32 %v373, 0.0
      %v438 = vmax.f32 %v374, 0.0
      %v439 = vmax.f32 %v375, 0.0
      %v440 = vmax.f32 %v376, 0.0
      %v441 = vmax.f32 %v377, 0.0
      %v442 = vmax.f32 %v378, 0.0
      %v443 = vmax.f32 %v379, 0.0
      %v444 = vmax.f32 %v380, 0.0
      %v445 = vmax.f32 %v381, 0.0
      %v446 = vmax.f32 %v382, 0.0
      %v447 = vmax.f32 %v383, 0.0
      %v448 = vmax.f32 %v384, 0.0
      %v449 = vmax.f32 %v385, 0.0
      %v450 = vmax.f32 %v386, 0.0
      %v451 = vmax.f32 %v387, 0.0
      %v452 = vpack.c.bf16 %v389, %v388
      %v453 = vpack.c.bf16 %v391, %v390
      %v454 = vpack.c.bf16 %v393, %v392
      %v455 = vpack.c.bf16 %v395, %v394
      %v456 = vpack.c.bf16 %v397, %v396
      %v457 = vpack.c.bf16 %v399, %v398
      %v458 = vpack.c.bf16 %v401, %v400
      %v459 = vpack.c.bf16 %v403, %v402
      %v460 = vpack.c.bf16 %v405, %v404
      %v461 = vpack.c.bf16 %v407, %v406
      %v462 = vpack.c.bf16 %v409, %v408
      %v463 = vpack.c.bf16 %v411, %v410
      %v464 = vpack.c.bf16 %v413, %v412
      %v465 = vpack.c.bf16 %v415, %v414
      %v466 = vpack.c.bf16 %v417, %v416
      %v467 = vpack.c.bf16 %v419, %v418
      %v468 = vpack.c.bf16 %v421, %v420
      %v469 = vpack.c.bf16 %v423, %v422
      %v470 = vpack.c.bf16 %v425, %v424
      %v471 = vpack.c.bf16 %v427, %v426
      %v472 = vpack.c.bf16 %v429, %v428
      %v473 = vpack.c.bf16 %v431, %v430
      %v474 = vpack.c.bf16 %v433, %v432
      %v475 = vpack.c.bf16 %v435, %v434
      %v476 = vpack.c.bf16 %v437, %v436
      %v477 = vpack.c.bf16 %v439, %v438
      %v478 = vpack.c.bf16 %v441, %v440
      %v479 = vpack.c.bf16 %v443, %v442
      %v480 = vpack.c.bf16 %v445, %v444
      %v481 = vpack.c.bf16 %v447, %v446
      %v482 = vpack.c.bf16 %v449, %v448
      %v483 = vpack.c.bf16 %v451, %v450
      %v516 = vunpack.c.l.b16 %v452
      %v517 = vunpack.c.h.b16 %v452
      %v518 = vunpack.c.l.b16 %v453
      %v519 = vunpack.c.h.b16 %v453
      %v520 = vunpack.c.l.b16 %v454
      %v521 = vunpack.c.h.b16 %v454
      %v522 = vunpack.c.l.b16 %v455
      %v523 = vunpack.c.h.b16 %v455
      %v524 = vunpack.c.l.b16 %v456
      %v525 = vunpack.c.h.b16 %v456
      %v526 = vunpack.c.l.b16 %v457
      %v527 = vunpack.c.h.b16 %v457
      %v528 = vunpack.c.l.b16 %v458
      %v529 = vunpack.c.h.b16 %v458
      %v530 = vunpack.c.l.b16 %v459
      %v531 = vunpack.c.h.b16 %v459
      %v532 = vunpack.c.l.b16 %v460
      %v533 = vunpack.c.h.b16 %v460
      %v534 = vunpack.c.l.b16 %v461
      %v535 = vunpack.c.h.b16 %v461
      %v536 = vunpack.c.l.b16 %v462
      %v537 = vunpack.c.h.b16 %v462
      %v538 = vunpack.c.l.b16 %v463
      %v539 = vunpack.c.h.b16 %v463
      %v540 = vunpack.c.l.b16 %v464
      %v541 = vunpack.c.h.b16 %v464
      %v542 = vunpack.c.l.b16 %v465
      %v543 = vunpack.c.h.b16 %v465
      %v544 = vunpack.c.l.b16 %v466
      %v545 = vunpack.c.h.b16 %v466
      %v546 = vunpack.c.l.b16 %v467
      %v547 = vunpack.c.h.b16 %v467
      %v548 = vunpack.c.l.b16 %v468
      %v549 = vunpack.c.h.b16 %v468
      %v550 = vunpack.c.l.b16 %v469
      %v551 = vunpack.c.h.b16 %v469
      %v552 = vunpack.c.l.b16 %v470
      %v553 = vunpack.c.h.b16 %v470
      %v554 = vunpack.c.l.b16 %v471
      %v555 = vunpack.c.h.b16 %v471
      %v556 = vunpack.c.l.b16 %v472
      %v557 = vunpack.c.h.b16 %v472
      %v558 = vunpack.c.l.b16 %v473
      %v559 = vunpack.c.h.b16 %v473
      %v560 = vunpack.c.l.b16 %v474
      %v561 = vunpack.c.h.b16 %v474
      %v562 = vunpack.c.l.b16 %v475
      %v563 = vunpack.c.h.b16 %v475
      %v564 = vunpack.c.l.b16 %v476
      %v565 = vunpack.c.h.b16 %v476
      %v566 = vunpack.c.l.b16 %v477
      %v567 = vunpack.c.h.b16 %v477
      %v568 = vunpack.c.l.b16 %v478
      %v569 = vunpack.c.h.b16 %v478
      %v570 = vunpack.c.l.b16 %v479
      %v571 = vunpack.c.h.b16 %v479
      %v572 = vunpack.c.l.b16 %v480
      %v573 = vunpack.c.h.b16 %v480
      %v574 = vunpack.c.l.b16 %v481
      %v575 = vunpack.c.h.b16 %v481
      %v576 = vunpack.c.l.b16 %v482
      %v577 = vunpack.c.h.b16 %v482
      %v578 = vunpack.c.l.b16 %v483
      %v579 = vunpack.c.h.b16 %v483
      %v580 = vpack.c.b16 %v516, %v516
      %v581 = vpack.c.b16 %v517, %v517
      %v582 = vpack.c.b16 %v518, %v518
      %v583 = vpack.c.b16 %v519, %v519
      %v584 = vpack.c.b16 %v520, %v520
      %v585 = vpack.c.b16 %v521, %v521
      %v586 = vpack.c.b16 %v522, %v522
      %v587 = vpack.c.b16 %v523, %v523
      %v588 = vpack.c.b16 %v524, %v524
      %v589 = vpack.c.b16 %v525, %v525
      %v590 = vpack.c.b16 %v526, %v526
      %v591 = vpack.c.b16 %v527, %v527
      %v592 = vpack.c.b16 %v528, %v528
      %v593 = vpack.c.b16 %v529, %v529
      %v594 = vpack.c.b16 %v530, %v530
      %v595 = vpack.c.b16 %v531, %v531
      %v596 = vpack.c.b16 %v532, %v532
      %v597 = vpack.c.b16 %v533, %v533
      %v598 = vpack.c.b16 %v534, %v534
      %v599 = vpack.c.b16 %v535, %v535
      %v600 = vpack.c.b16 %v536, %v536
      %v601 = vpack.c.b16 %v537, %v537
      %v602 = vpack.c.b16 %v538, %v538
      %v603 = vpack.c.b16 %v539, %v539
      %v604 = vpack.c.b16 %v540, %v540
      %v605 = vpack.c.b16 %v541, %v541
      %v606 = vpack.c.b16 %v542, %v542
      %v607 = vpack.c.b16 %v543, %v543
      %v608 = vpack.c.b16 %v544, %v544
      %v609 = vpack.c.b16 %v545, %v545
      %v610 = vpack.c.b16 %v546, %v546
      %v611 = vpack.c.b16 %v547, %v547
      %v612 = vpack.c.b16 %v548, %v548
      %v613 = vpack.c.b16 %v549, %v549
      %v614 = vpack.c.b16 %v550, %v550
      %v615 = vpack.c.b16 %v551, %v551
      %v616 = vpack.c.b16 %v552, %v552
      %v617 = vpack.c.b16 %v553, %v553
      %v618 = vpack.c.b16 %v554, %v554
      %v619 = vpack.c.b16 %v555, %v555
      %v620 = vpack.c.b16 %v556, %v556
      %v621 = vpack.c.b16 %v557, %v557
      %v622 = vpack.c.b16 %v558, %v558
      %v623 = vpack.c.b16 %v559, %v559
      %v624 = vpack.c.b16 %v560, %v560
      %v625 = vpack.c.b16 %v561, %v561
      %v626 = vpack.c.b16 %v562, %v562
      %v627 = vpack.c.b16 %v563, %v563
      %v628 = vpack.c.b16 %v564, %v564
      %v629 = vpack.c.b16 %v565, %v565
      %v630 = vpack.c.b16 %v566, %v566
      %v631 = vpack.c.b16 %v567, %v567
      %v632 = vpack.c.b16 %v568, %v568
      %v633 = vpack.c.b16 %v569, %v569
      %v634 = vpack.c.b16 %v570, %v570
      %v635 = vpack.c.b16 %v571, %v571
      %v636 = vpack.c.b16 %v572, %v572
      %v637 = vpack.c.b16 %v573, %v573
      %v638 = vpack.c.b16 %v574, %v574
      %v639 = vpack.c.b16 %v575, %v575
      %v640 = vpack.c.b16 %v576, %v576
      %v641 = vpack.c.b16 %v577, %v577
      %v642 = vpack.c.b16 %v578, %v578
      %v643 = vpack.c.b16 %v579, %v579
      %708 = vst [vmem:[%s172] sm:$0xf] %v580
      %709 = vst [vmem:[%s172 + $0x4] sm:$0xf] %v581
      %710 = vst [vmem:[%s172 + $0x8] sm:$0xf] %v582
      %711 = vst [vmem:[%s172 + $0xc] sm:$0xf] %v583
      %712 = vst [vmem:[%s172 + $0x10] sm:$0xf] %v584
      %713 = vst [vmem:[%s172 + $0x14] sm:$0xf] %v585
      %714 = vst [vmem:[%s172 + $0x18] sm:$0xf] %v586
      %715 = vst [vmem:[%s172 + $0x1c] sm:$0xf] %v587
      %716 = vst [vmem:[%s172 + $0x20] sm:$0xf] %v588
      %717 = vst [vmem:[%s172 + $0x24] sm:$0xf] %v589
      %718 = vst [vmem:[%s172 + $0x28] sm:$0xf] %v590
      %719 = vst [vmem:[%s172 + $0x2c] sm:$0xf] %v591
      %720 = vst [vmem:[%s172 + $0x30] sm:$0xf] %v592
      %721 = vst [vmem:[%s172 + $0x34] sm:$0xf] %v593
      %722 = vst [vmem:[%s172 + $0x38] sm:$0xf] %v594
      %723 = vst [vmem:[%s172 + $0x3c] sm:$0xf] %v595
      %724 = vst [vmem:[%s172 + $0x40] sm:$0xf] %v596
      %725 = vst [vmem:[%s172 + $0x44] sm:$0xf] %v597
      %726 = vst [vmem:[%s172 + $0x48] sm:$0xf] %v598
      %727 = vst [vmem:[%s172 + $0x4c] sm:$0xf] %v599
      %728 = vst [vmem:[%s172 + $0x50] sm:$0xf] %v600
      %729 = vst [vmem:[%s172 + $0x54] sm:$0xf] %v601
      %730 = vst [vmem:[%s172 + $0x58] sm:$0xf] %v602
      %731 = vst [vmem:[%s172 + $0x5c] sm:$0xf] %v603
      %732 = vst [vmem:[%s172 + $0x60] sm:$0xf] %v604
      %733 = vst [vmem:[%s172 + $0x64] sm:$0xf] %v605
      %734 = vst [vmem:[%s172 + $0x68] sm:$0xf] %v606
      %735 = vst [vmem:[%s172 + $0x6c] sm:$0xf] %v607
      %736 = vst [vmem:[%s172 + $0x70] sm:$0xf] %v608
      %737 = vst [vmem:[%s172 + $0x74] sm:$0xf] %v609
      %738 = vst [vmem:[%s172 + $0x78] sm:$0xf] %v610
      %739 = vst [vmem:[%s172 + $0x7c] sm:$0xf] %v611
      %740 = vst [vmem:[%s172 + $0x80] sm:$0xf] %v612
      %741 = vst [vmem:[%s172 + $0x84] sm:$0xf] %v613
      %742 = vst [vmem:[%s172 + $0x88] sm:$0xf] %v614
      %743 = vst [vmem:[%s172 + $0x8c] sm:$0xf] %v615
      %744 = vst [vmem:[%s172 + $0x90] sm:$0xf] %v616
      %745 = vst [vmem:[%s172 + $0x94] sm:$0xf] %v617
      %746 = vst [vmem:[%s172 + $0x98] sm:$0xf] %v618
      %747 = vst [vmem:[%s172 + $0x9c] sm:$0xf] %v619
      %748 = vst [vmem:[%s172 + $0xa0] sm:$0xf] %v620
      %749 = vst [vmem:[%s172 + $0xa4] sm:$0xf] %v621
      %750 = vst [vmem:[%s172 + $0xa8] sm:$0xf] %v622
      %751 = vst [vmem:[%s172 + $0xac] sm:$0xf] %v623
      %752 = vst [vmem:[%s172 + $0xb0] sm:$0xf] %v624
      %753 = vst [vmem:[%s172 + $0xb4] sm:$0xf] %v625
      %754 = vst [vmem:[%s172 + $0xb8] sm:$0xf] %v626
      %755 = vst [vmem:[%s172 + $0xbc] sm:$0xf] %v627
      %756 = vst [vmem:[%s172 + $0xc0] sm:$0xf] %v628
      %757 = vst [vmem:[%s172 + $0xc4] sm:$0xf] %v629
      %758 = vst [vmem:[%s172 + $0xc8] sm:$0xf] %v630
      %759 = vst [vmem:[%s172 + $0xcc] sm:$0xf] %v631
      %760 = vst [vmem:[%s172 + $0xd0] sm:$0xf] %v632
      %761 = vst [vmem:[%s172 + $0xd4] sm:$0xf] %v633
      %762 = vst [vmem:[%s172 + $0xd8] sm:$0xf] %v634
      %763 = vst [vmem:[%s172 + $0xdc] sm:$0xf] %v635
      %764 = vst [vmem:[%s172 + $0xe0] sm:$0xf] %v636
      %765 = vst [vmem:[%s172 + $0xe4] sm:$0xf] %v637
      %766 = vst [vmem:[%s172 + $0xe8] sm:$0xf] %v638
      %767 = vst [vmem:[%s172 + $0xec] sm:$0xf] %v639
      %768 = vst [vmem:[%s172 + $0xf0] sm:$0xf] %v640
      %769 = vst [vmem:[%s172 + $0xf4] sm:$0xf] %v641
      %770 = vst [vmem:[%s172 + $0xf8] sm:$0xf] %v642
      %771 = vst [vmem:[%s172 + $0xfc] sm:$0xf] %v643
      %s772 = smul.u32 64, %s14
      %p773 = scmp.lt.s32.totalorder %s772, 127
      %s774 = scalar_select %p773, %s772, 127
      %s775 = smul.addr %s774, 4
      %s776 = scalar_lea.vmem %s3, %s775
      // Predicated region
      $region33: #{dqn_forward.5} parent=31 // pred_check
        %p777 = pneg %p100
      $region34: #{dqn_forward.5} parent=31 // pred_check_branch
        %779 = sbr.rel (%p777) target = $region36
      $region35: #{dqn_forward.5} parent=31 // pred_region
        %s780 = smul.u32 64, %s14
      $region36: #{dqn_forward.5} parent=31 // pred_fallthru
        _
    $region32: #{dqn_forward.5} parent=5 // pred_fallthru
      _
    %p781 = scmp.le.s32.totalorder 2, %s9
    // Predicated region
    $region37: #{dqn_forward.5} parent=5 // pred_check
      %p782 = pneg %p781
    $region38: #{dqn_forward.5} parent=5 // pred_check_branch
      %784 = sbr.rel (%p782) target = $region40
    $region39: #{dqn_forward.5} parent=5 // pred_region
      %s785 = ssub.s32 %s9, 2
      // Predicated region
      $region41: #{dqn_forward.5} parent=39 // pred_check
        %p786 = pneg %p106
      $region42: #{dqn_forward.5} parent=39 // pred_check_branch
        %788 = sbr.rel (%p786) target = $region44
      $region43: #{dqn_forward.5} parent=39 // pred_region
        %s789 = smul.u32 64, %s15
        %p790 = scmp.lt.s32.totalorder %s789, 127
        %s791 = scalar_select %p790, %s789, 127
        %s792 = smul.addr %s791, 4
        %s793 = scalar_lea.vmem %s3, %s792
      $region44: #{dqn_forward.5} parent=39 // pred_fallthru
        _
    $region40: #{dqn_forward.5} parent=5 // pred_fallthru
      _
  $region6: #{dqn_forward.5} parent=0 // loop_footer
    %s13 = sadd.s32 1, %s9
  $region7: #{dqn_forward.5} parent=0 // loop_footer_branch
    %8 = sbr.rel target = $region3
  $region8: #{dqn_forward.5} parent=0 // loop_exit
    _

// kernel: dqn_forward.6
$region0: #{dqn_forward.6}
  #allocation0 [shape = 'u32[]', space=smem, size = 0x4, offset = 0x4, fixed_abs, tag = 'smem constant byte address 0x4 - core index']
  #allocation1 [shape = 'u32[144,128]{1,0:T(1,128)}', space=vmem, size = 0x12000, scoped, tag = 'internal scratch']
  %s0 = inlined_call_operand.vmem [shape: bf16[2,144,80], index: 0, kind: input, shape index: {}]
  %s1 = inlined_call_operand.vmem [shape: bf16[5,80,128], index: 1, kind: input, shape index: {}]
  %s2 = inlined_call_operand.vmem [shape: f32[2,128], index: 2, kind: input, shape index: {}]
  %s3 = inlined_call_operand.vmem [shape: bf16[112,128], index: 3, kind: output, shape index: {}]
  %s4 = sld [smem:[#allocation0]]
  $region22: #{dqn_forward.6} parent=0
    _
  %s6 = ssub.s32 1, %s4
  %s7 = scalar_select 0, %s6, %s4
  // Predicated region
  $region2: #{dqn_forward.6} parent=0 // pred_check
    _
  $region3: #{dqn_forward.6} parent=0 // pred_check_branch
    %9 = sbr.rel (0) target = $region5
  $region4: #{dqn_forward.6} parent=0 // pred_region
    _
  $region5: #{dqn_forward.6} parent=0 // pred_fallthru
    _
  // Predicated region
  $region6: #{dqn_forward.6} parent=0 // pred_check
    _
  $region7: #{dqn_forward.6} parent=0 // pred_check_branch
    %11 = sbr.rel (0) target = $region9
  $region8: #{dqn_forward.6} parent=0 // pred_region
    _
  $region9: #{dqn_forward.6} parent=0 // pred_fallthru
    _
  // Predicated region
  $region10: #{dqn_forward.6} parent=0 // pred_check
    _
  $region11: #{dqn_forward.6} parent=0 // pred_check_branch
    %13 = sbr.rel (0) target = $region13
  $region12: #{dqn_forward.6} parent=0 // pred_region
    _
  $region13: #{dqn_forward.6} parent=0 // pred_fallthru
    _
  %v15 = vld [vmem:[%s0] sm:$0xf]
  %v16 = vld [vmem:[%s0 + $0x4] sm:$0xf]
  %v17 = vld [vmem:[%s0 + $0x8] sm:$0xf]
  %v18 = vld [vmem:[%s0 + $0xc] sm:$0xf]
  %v19 = vld [vmem:[%s0 + $0x10] sm:$0xf]
  %v20 = vld [vmem:[%s0 + $0x14] sm:$0xf]
  %v21 = vld [vmem:[%s0 + $0x18] sm:$0xf]
  %v22 = vld [vmem:[%s0 + $0x1c] sm:$0xf]
  %v23 = vld [vmem:[%s0 + $0x20] sm:$0xf]
  %v24 = vld [vmem:[%s0 + $0x24] sm:$0xf]
  %v25 = vld [vmem:[%s0 + $0x28] sm:$0xf]
  %v26 = vld [vmem:[%s0 + $0x2c] sm:$0xf]
  %v27 = vld [vmem:[%s0 + $0x30] sm:$0xf]
  %v28 = vld [vmem:[%s0 + $0x34] sm:$0xf]
  %v29 = vld [vmem:[%s1] sm:$0xf]
  %v30 = vld [vmem:[%s1 + $0x4] sm:$0xf]
  %v31 = vld [vmem:[%s1 + $0x8] sm:$0xf]
  %v32 = vld [vmem:[%s1 + $0xc] sm:$0xf]
  %v33 = vld [vmem:[%s1 + $0x10] sm:$0xf]
  %v34 = vld [vmem:[%s1 + $0x14] sm:$0xf]
  %v35 = vld [vmem:[%s1 + $0x18] sm:$0xf]
  %v36 = vld [vmem:[%s1 + $0x1c] sm:$0xf]
  %v37 = vld [vmem:[%s1 + $0x20] sm:$0xf]
  %v38 = vld [vmem:[%s1 + $0x24] sm:$0xf]
  %s39 = scalar_lea.vmem %s0, 72
  %v40 = vld [vmem:[%s39] sm:$0xf]
  %v41 = vld [vmem:[%s39 + $0x4] sm:$0xf]
  %v42 = vld [vmem:[%s39 + $0x8] sm:$0xf]
  %v43 = vld [vmem:[%s39 + $0xc] sm:$0xf]
  %v44 = vld [vmem:[%s39 + $0x10] sm:$0xf]
  %v45 = vld [vmem:[%s39 + $0x14] sm:$0xf]
  %v46 = vld [vmem:[%s39 + $0x18] sm:$0xf]
  %v47 = vld [vmem:[%s39 + $0x1c] sm:$0xf]
  %v48 = vld [vmem:[%s39 + $0x20] sm:$0xf]
  %v49 = vld [vmem:[%s39 + $0x24] sm:$0xf]
  %v50 = vld [vmem:[%s39 + $0x28] sm:$0xf]
  %v51 = vld [vmem:[%s39 + $0x2c] sm:$0xf]
  %v52 = vld [vmem:[%s39 + $0x30] sm:$0xf]
  %v53 = vld [vmem:[%s39 + $0x34] sm:$0xf]
  %s54 = scalar_lea.vmem %s1, 40
  %v55 = vld [vmem:[%s54] sm:$0xf]
  %v56 = vld [vmem:[%s54 + $0x4] sm:$0xf]
  %v57 = vld [vmem:[%s54 + $0x8] sm:$0xf]
  %v58 = vld [vmem:[%s54 + $0xc] sm:$0xf]
  %v59 = vld [vmem:[%s54 + $0x10] sm:$0xf]
  %v60 = vld [vmem:[%s54 + $0x14] sm:$0xf]
  %v61 = vld [vmem:[%s54 + $0x18] sm:$0xf]
  %v62 = vld [vmem:[%s54 + $0x1c] sm:$0xf]
  %v63 = vld [vmem:[%s54 + $0x20] sm:$0xf]
  %v64 = vld [vmem:[%s54 + $0x24] sm:$0xf]
  %v79 = vunpack.c.l.b16 %v40
  %v80 = vunpack.c.l.b16 %v41
  %v81 = vunpack.c.l.b16 %v42
  %v82 = vunpack.c.l.b16 %v43
  %v83 = vunpack.c.l.b16 %v44
  %v84 = vunpack.c.l.b16 %v45
  %v85 = vunpack.c.l.b16 %v46
  %v86 = vunpack.c.l.b16 %v47
  %v87 = vunpack.c.l.b16 %v48
  %v88 = vunpack.c.l.b16 %v49
  %v89 = vunpack.c.l.b16 %v50
  %v90 = vunpack.c.l.b16 %v51
  %v91 = vunpack.c.l.b16 %v52
  %v92 = vunpack.c.l.b16 %v53
  %v93 = vpack.c.b16 %v80, %v79
  %v94 = vpack.c.b16 %v82, %v81
  %v95 = vpack.c.b16 %v84, %v83
  %v96 = vpack.c.b16 %v86, %v85
  %v97 = vpack.c.b16 %v88, %v87
  %v98 = vpack.c.b16 %v90, %v89
  %v99 = vpack.c.b16 %v92, %v91
  %v110 = vunpack.c.l.b16 %v55
  %v111 = vunpack.c.l.b16 %v56
  %v112 = vunpack.c.l.b16 %v57
  %v113 = vunpack.c.l.b16 %v58
  %v114 = vunpack.c.l.b16 %v59
  %v115 = vunpack.c.l.b16 %v60
  %v116 = vunpack.c.l.b16 %v61
  %v117 = vunpack.c.l.b16 %v62
  %v118 = vunpack.c.l.b16 %v63
  %v119 = vunpack.c.l.b16 %v64
  %v120 = vpack.c.b16 %v111, %v110
  %v121 = vpack.c.b16 %v113, %v112
  %v122 = vpack.c.b16 %v115, %v114
  %v123 = vpack.c.b16 %v117, %v116
  %v124 = vpack.c.b16 %v119, %v118
  %vm130 = vcmask 654336
  %v132 = vsel %vm130, %v93, 0
  %v135 = vsel %vm130, %v94, 0
  %v138 = vsel %vm130, %v95, 0
  %v141 = vsel %vm130, %v96, 0
  %v144 = vsel %vm130, %v97, 0
  %v147 = vsel %vm130, %v98, 0
  %v150 = vsel %vm130, %v99, 0
  %152 = vmatprep.subr.bf16.mxu0 0
  %153 = vmatpush1.bf16.msra.mxu0 %v120
  %154 = vmatprep.subr.bf16.mxu0 0
  %155 = vmatpush1.bf16.msra.mxu0 %v121
  %156 = vmatprep.subr.bf16.mxu0 0
  %157 = vmatpush1.bf16.msra.mxu0 %v122
  %158 = vmatprep.subr.bf16.mxu0 0
  %159 = vmatpush1.bf16.msra.mxu0 %v123
  %160 = vmatprep.subr.bf16.mxu0 0
  %161 = vmatpush1.bf16.msra.mxu0 %v124
  %162 = vmatprep.subr.bf16.mxu0 0
  %163 = vmatpush1.bf16.msra.mxu0 0
  %164 = vmatprep.subr.bf16.mxu0 0
  %165 = vmatpush1.bf16.msra.mxu0 0
  %166 = vmatprep.subr.bf16.mxu0 0
  %167 = vmatpush1.bf16.msra.mxu0 0
  %168 = vmatprep.subr.bf16.mxu0 0
  %169 = vmatpush1.bf16.msra.mxu0 0
  %170 = vmatprep.subr.bf16.mxu0 0
  %171 = vmatpush1.bf16.msra.mxu0 0
  %172 = vmatprep.subr.bf16.mxu0 0
  %173 = vmatpush1.bf16.msra.mxu0 0
  %174 = vmatprep.subr.bf16.mxu0 0
  %175 = vmatpush1.bf16.msra.mxu0 0
  %176 = vmatprep.subr.bf16.mxu0 0
  %177 = vmatpush1.bf16.msra.mxu0 0
  %178 = vmatprep.subr.bf16.mxu0 0
  %179 = vmatpush1.bf16.msra.mxu0 0
  %180 = vmatprep.subr.bf16.mxu0 0
  %181 = vmatpush1.bf16.msra.mxu0 0
  %182 = vmatprep.subr.bf16.mxu0 0
  %183 = vmatpush1.bf16.msra.mxu0 0
  %184 = vmatprep.mubr.bf16.mxu0 0
  %185 = vmatmul.mubr.bf16.gmra.mrb[0].mxu0 %v132
  %v186 = vpop.f32.mrb[0].mxu0
  %v187 = vadd.f32 0.0, %v186
  %v188 = vpop.f32.mrb[0].mxu0
  %v189 = vpop.f32.mrb[0].mxu0
  %v190 = vadd.f32 0.0, %v189
  %v191 = vpop.f32.mrb[0].mxu0
  %192 = vmatprep.mubr.bf16.mxu0 0
  %193 = vmatmul.mubr.bf16.gmra.mrb[0].mxu0 %v135
  %v194 = vpop.f32.mrb[0].mxu0
  %v195 = vadd.f32 0.0, %v194
  %v196 = vpop.f32.mrb[0].mxu0
  %v197 = vpop.f32.mrb[0].mxu0
  %v198 = vadd.f32 0.0, %v197
  %v199 = vpop.f32.mrb[0].mxu0
  %200 = vmatprep.mubr.bf16.mxu0 0
  %201 = vmatmul.mubr.bf16.gmra.mrb[0].mxu0 %v138
  %v202 = vpop.f32.mrb[0].mxu0
  %v203 = vadd.f32 0.0, %v202
  %v204 = vpop.f32.mrb[0].mxu0
  %v205 = vpop.f32.mrb[0].mxu0
  %v206 = vadd.f32 0.0, %v205
  %v207 = vpop.f32.mrb[0].mxu0
  %208 = vmatprep.mubr.bf16.mxu0 0
  %209 = vmatmul.mubr.bf16.gmra.mrb[0].mxu0 %v141
  %v210 = vpop.f32.mrb[0].mxu0
  %v211 = vadd.f32 0.0, %v210
  %v212 = vpop.f32.mrb[0].mxu0
  %v213 = vpop.f32.mrb[0].mxu0
  %v214 = vadd.f32 0.0, %v213
  %v215 = vpop.f32.mrb[0].mxu0
  %216 = vmatprep.mubr.bf16.mxu0 0
  %217 = vmatmul.mubr.bf16.gmra.mrb[0].mxu0 %v144
  %v218 = vpop.f32.mrb[0].mxu0
  %v219 = vadd.f32 0.0, %v218
  %v220 = vpop.f32.mrb[0].mxu0
  %v221 = vpop.f32.mrb[0].mxu0
  %v222 = vadd.f32 0.0, %v221
  %v223 = vpop.f32.mrb[0].mxu0
  %224 = vmatprep.mubr.bf16.mxu0 0
  %225 = vmatmul.mubr.bf16.gmra.mrb[0].mxu0 %v147
  %v226 = vpop.f32.mrb[0].mxu0
  %v227 = vadd.f32 0.0, %v226
  %v228 = vpop.f32.mrb[0].mxu0
  %v229 = vpop.f32.mrb[0].mxu0
  %v230 = vadd.f32 0.0, %v229
  %v231 = vpop.f32.mrb[0].mxu0
  %232 = vmatprep.mubr.bf16.mxu0 0
  %233 = vmatmul.mubr.bf16.gmra.mrb[0].mxu0 %v150
  %v234 = vpop.f32.mrb[0].mxu0
  %v235 = vadd.f32 0.0, %v234
  %v236 = vpop.f32.mrb[0].mxu0
  %v237 = vpop.f32.mrb[0].mxu0
  %v238 = vadd.f32 0.0, %v237
  %v239 = vpop.f32.mrb[0].mxu0
  %240 = vdwg.mxu0
  %v255 = vunpack.c.l.b16 %v15
  %v256 = vunpack.c.l.b16 %v16
  %v257 = vunpack.c.l.b16 %v17
  %v258 = vunpack.c.l.b16 %v18
  %v259 = vunpack.c.l.b16 %v19
  %v260 = vunpack.c.l.b16 %v20
  %v261 = vunpack.c.l.b16 %v21
  %v262 = vunpack.c.l.b16 %v22
  %v263 = vunpack.c.l.b16 %v23
  %v264 = vunpack.c.l.b16 %v24
  %v265 = vunpack.c.l.b16 %v25
  %v266 = vunpack.c.l.b16 %v26
  %v267 = vunpack.c.l.b16 %v27
  %v268 = vunpack.c.l.b16 %v28
  %v269 = vpack.c.b16 %v256, %v255
  %v270 = vpack.c.b16 %v258, %v257
  %v271 = vpack.c.b16 %v260, %v259
  %v272 = vpack.c.b16 %v262, %v261
  %v273 = vpack.c.b16 %v264, %v263
  %v274 = vpack.c.b16 %v266, %v265
  %v275 = vpack.c.b16 %v268, %v267
  %v286 = vunpack.c.l.b16 %v29
  %v287 = vunpack.c.l.b16 %v30
  %v288 = vunpack.c.l.b16 %v31
  %v289 = vunpack.c.l.b16 %v32
  %v290 = vunpack.c.l.b16 %v33
  %v291 = vunpack.c.l.b16 %v34
  %v292 = vunpack.c.l.b16 %v35
  %v293 = vunpack.c.l.b16 %v36
  %v294 = vunpack.c.l.b16 %v37
  %v295 = vunpack.c.l.b16 %v38
  %v296 = vpack.c.b16 %v287, %v286
  %v297 = vpack.c.b16 %v289, %v288
  %v298 = vpack.c.b16 %v291, %v290
  %v299 = vpack.c.b16 %v293, %v292
  %v300 = vpack.c.b16 %v295, %v294
  %v307 = vsel %vm130, %v269, 0
  %v310 = vsel %vm130, %v270, 0
  %v313 = vsel %vm130, %v271, 0
  %v316 = vsel %vm130, %v272, 0
  %v319 = vsel %vm130, %v273, 0
  %v322 = vsel %vm130, %v274, 0
  %v325 = vsel %vm130, %v275, 0
  %327 = vmatprep.subr.bf16.mxu0 0
  %328 = vmatpush1.bf16.msra.mxu0 %v296
  %329 = vmatprep.subr.bf16.mxu0 0
  %330 = vmatpush1.bf16.msra.mxu0 %v297
  %331 = vmatprep.subr.bf16.mxu0 0
  %332 = vmatpush1.bf16.msra.mxu0 %v298
  %333 = vmatprep.subr.bf16.mxu0 0
  %334 = vmatpush1.bf16.msra.mxu0 %v299
  %335 = vmatprep.subr.bf16.mxu0 0
  %336 = vmatpush1.bf16.msra.mxu0 %v300
  %337 = vmatprep.subr.bf16.mxu0 0
  %338 = vmatpush1.bf16.msra.mxu0 0
  %339 = vmatprep.subr.bf16.mxu0 0
  %340 = vmatpush1.bf16.msra.mxu0 0
  %341 = vmatprep.subr.bf16.mxu0 0
  %342 = vmatpush1.bf16.msra.mxu0 0
  %343 = vmatprep.subr.bf16.mxu0 0
  %344 = vmatpush1.bf16.msra.mxu0 0
  %345 = vmatprep.subr.bf16.mxu0 0
  %346 = vmatpush1.bf16.msra.mxu0 0
  %347 = vmatprep.subr.bf16.mxu0 0
  %348 = vmatpush1.bf16.msra.mxu0 0
  %349 = vmatprep.subr.bf16.mxu0 0
  %350 = vmatpush1.bf16.msra.mxu0 0
  %351 = vmatprep.subr.bf16.mxu0 0
  %352 = vmatpush1.bf16.msra.mxu0 0
  %353 = vmatprep.subr.bf16.mxu0 0
  %354 = vmatpush1.bf16.msra.mxu0 0
  %355 = vmatprep.subr.bf16.mxu0 0
  %356 = vmatpush1.bf16.msra.mxu0 0
  %357 = vmatprep.subr.bf16.mxu0 0
  %358 = vmatpush1.bf16.msra.mxu0 0
  %359 = vmatprep.mubr.bf16.mxu0 0
  %360 = vmatmul.mubr.bf16.gmra.mrb[0].mxu0 %v307
  %v361 = vpop.f32.mrb[0].mxu0
  %v362 = vadd.f32 %v187, %v361
  %v363 = vpop.f32.mrb[0].mxu0
  %v364 = vpop.f32.mrb[0].mxu0
  %v365 = vadd.f32 %v190, %v364
  %v366 = vpop.f32.mrb[0].mxu0
  %367 = vmatprep.mubr.bf16.mxu0 0
  %368 = vmatmul.mubr.bf16.gmra.mrb[0].mxu0 %v310
  %v369 = vpop.f32.mrb[0].mxu0
  %v370 = vadd.f32 %v195, %v369
  %v371 = vpop.f32.mrb[0].mxu0
  %v372 = vpop.f32.mrb[0].mxu0
  %v373 = vadd.f32 %v198, %v372
  %v374 = vpop.f32.mrb[0].mxu0
  %375 = vmatprep.mubr.bf16.mxu0 0
  %376 = vmatmul.mubr.bf16.gmra.mrb[0].mxu0 %v313
  %v377 = vpop.f32.mrb[0].mxu0
  %v378 = vadd.f32 %v203, %v377
  %v379 = vpop.f32.mrb[0].mxu0
  %v380 = vpop.f32.mrb[0].mxu0
  %v381 = vadd.f32 %v206, %v380
  %v382 = vpop.f32.mrb[0].mxu0
  %383 = vmatprep.mubr.bf16.mxu0 0
  %384 = vmatmul.mubr.bf16.gmra.mrb[0].mxu0 %v316
  %v385 = vpop.f32.mrb[0].mxu0
  %v386 = vadd.f32 %v211, %v385
  %v387 = vpop.f32.mrb[0].mxu0
  %v388 = vpop.f32.mrb[0].mxu0
  %v389 = vadd.f32 %v214, %v388
  %v390 = vpop.f32.mrb[0].mxu0
  %391 = vmatprep.mubr.bf16.mxu0 0
  %392 = vmatmul.mubr.bf16.gmra.mrb[0].mxu0 %v319
  %v393 = vpop.f32.mrb[0].mxu0
  %v394 = vadd.f32 %v219, %v393
  %v395 = vpop.f32.mrb[0].mxu0
  %v396 = vpop.f32.mrb[0].mxu0
  %v397 = vadd.f32 %v222, %v396
  %v398 = vpop.f32.mrb[0].mxu0
  %399 = vmatprep.mubr.bf16.mxu0 0
  %400 = vmatmul.mubr.bf16.gmra.mrb[0].mxu0 %v322
  %v401 = vpop.f32.mrb[0].mxu0
  %v402 = vadd.f32 %v227, %v401
  %v403 = vpop.f32.mrb[0].mxu0
  %v404 = vpop.f32.mrb[0].mxu0
  %v405 = vadd.f32 %v230, %v404
  %v406 = vpop.f32.mrb[0].mxu0
  %407 = vmatprep.mubr.bf16.mxu0 0
  %408 = vmatmul.mubr.bf16.gmra.mrb[0].mxu0 %v325
  %v409 = vpop.f32.mrb[0].mxu0
  %v410 = vadd.f32 %v235, %v409
  %v411 = vpop.f32.mrb[0].mxu0
  %v412 = vpop.f32.mrb[0].mxu0
  %v413 = vadd.f32 %v238, %v412
  %v414 = vpop.f32.mrb[0].mxu0
  %415 = vdwg.mxu0
  %v416 = vld [vmem:[%s0 + $0x8] sm:$0xf]
  %v417 = vld [vmem:[%s0 + $0xc] sm:$0xf]
  %v418 = vld [vmem:[%s0 + $0x10] sm:$0xf]
  %v419 = vld [vmem:[%s0 + $0x14] sm:$0xf]
  %v420 = vld [vmem:[%s0 + $0x18] sm:$0xf]
  %v421 = vld [vmem:[%s0 + $0x1c] sm:$0xf]
  %v422 = vld [vmem:[%s0 + $0x20] sm:$0xf]
  %v423 = vld [vmem:[%s0 + $0x24] sm:$0xf]
  %v424 = vld [vmem:[%s0 + $0x28] sm:$0xf]
  %v425 = vld [vmem:[%s0 + $0x2c] sm:$0xf]
  %v426 = vld [vmem:[%s0 + $0x30] sm:$0xf]
  %v427 = vld [vmem:[%s0 + $0x34] sm:$0xf]
  %v428 = vld [vmem:[%s0 + $0x38] sm:$0xf]
  %v429 = vld [vmem:[%s0 + $0x3c] sm:$0xf]
  %s430 = scalar_lea.vmem %s1, 80
  %v431 = vld [vmem:[%s430] sm:$0xf]
  %v432 = vld [vmem:[%s430 + $0x4] sm:$0xf]
  %v433 = vld [vmem:[%s430 + $0x8] sm:$0xf]
  %v434 = vld [vmem:[%s430 + $0xc] sm:$0xf]
  %v435 = vld [vmem:[%s430 + $0x10] sm:$0xf]
  %v436 = vld [vmem:[%s430 + $0x14] sm:$0xf]
  %v437 = vld [vmem:[%s430 + $0x18] sm:$0xf]
  %v438 = vld [vmem:[%s430 + $0x1c] sm:$0xf]
  %v439 = vld [vmem:[%s430 + $0x20] sm:$0xf]
  %v440 = vld [vmem:[%s430 + $0x24] sm:$0xf]
  %v455 = vunpack.c.l.b16 %v416
  %v456 = vunpack.c.l.b16 %v417
  %v457 = vunpack.c.l.b16 %v418
  %v458 = vunpack.c.l.b16 %v419
  %v459 = vunpack.c.l.b16 %v420
  %v460 = vunpack.c.l.b16 %v421
  %v461 = vunpack.c.l.b16 %v422
  %v462 = vunpack.c.l.b16 %v423
  %v463 = vunpack.c.l.b16 %v424
  %v464 = vunpack.c.l.b16 %v425
  %v465 = vunpack.c.l.b16 %v426
  %v466 = vunpack.c.l.b16 %v427
  %v467 = vunpack.c.l.b16 %v428
  %v468 = vunpack.c.l.b16 %v429
  %v469 = vpack.c.b16 %v456, %v455
  %v470 = vpack.c.b16 %v458, %v457
  %v471 = vpack.c.b16 %v460, %v459
  %v472 = vpack.c.b16 %v462, %v461
  %v473 = vpack.c.b16 %v464, %v463
  %v474 = vpack.c.b16 %v466, %v465
  %v475 = vpack.c.b16 %v468, %v467
  %v486 = vunpack.c.l.b16 %v431
  %v487 = vunpack.c.l.b16 %v432
  %v488 = vunpack.c.l.b16 %v433
  %v489 = vunpack.c.l.b16 %v434
  %v490 = vunpack.c.l.b16 %v435
  %v491 = vunpack.c.l.b16 %v436
  %v492 = vunpack.c.l.b16 %v437
  %v493 = vunpack.c.l.b16 %v438
  %v494 = vunpack.c.l.b16 %v439
  %v495 = vunpack.c.l.b16 %v440
  %v496 = vpack.c.b16 %v487, %v486
  %v497 = vpack.c.b16 %v489, %v488
  %v498 = vpack.c.b16 %v491, %v490
  %v499 = vpack.c.b16 %v493, %v492
  %v500 = vpack.c.b16 %v495, %v494
  %v507 = vsel %vm130, %v469, 0
  %v510 = vsel %vm130, %v470, 0
  %v513 = vsel %vm130, %v471, 0
  %v516 = vsel %vm130, %v472, 0
  %v519 = vsel %vm130, %v473, 0
  %v522 = vsel %vm130, %v474, 0
  %v525 = vsel %vm130, %v475, 0
  %527 = vmatprep.subr.bf16.mxu0 0
  %528 = vmatpush1.bf16.msra.mxu0 %v496
  %529 = vmatprep.subr.bf16.mxu0 0
  %530 = vmatpush1.bf16.msra.mxu0 %v497
  %531 = vmatprep.subr.bf16.mxu0 0
  %532 = vmatpush1.bf16.msra.mxu0 %v498
  %533 = vmatprep.subr.bf16.mxu0 0
  %534 = vmatpush1.bf16.msra.mxu0 %v499
  %535 = vmatprep.subr.bf16.mxu0 0
  %536 = vmatpush1.bf16.msra.mxu0 %v500
  %537 = vmatprep.subr.bf16.mxu0 0
  %538 = vmatpush1.bf16.msra.mxu0 0
  %539 = vmatprep.subr.bf16.mxu0 0
  %540 = vmatpush1.bf16.msra.mxu0 0
  %541 = vmatprep.subr.bf16.mxu0 0
  %542 = vmatpush1.bf16.msra.mxu0 0
  %543 = vmatprep.subr.bf16.mxu0 0
  %544 = vmatpush1.bf16.msra.mxu0 0
  %545 = vmatprep.subr.bf16.mxu0 0
  %546 = vmatpush1.bf16.msra.mxu0 0
  %547 = vmatprep.subr.bf16.mxu0 0
  %548 = vmatpush1.bf16.msra.mxu0 0
  %549 = vmatprep.subr.bf16.mxu0 0
  %550 = vmatpush1.bf16.msra.mxu0 0
  %551 = vmatprep.subr.bf16.mxu0 0
  %552 = vmatpush1.bf16.msra.mxu0 0
  %553 = vmatprep.subr.bf16.mxu0 0
  %554 = vmatpush1.bf16.msra.mxu0 0
  %555 = vmatprep.subr.bf16.mxu0 0
  %556 = vmatpush1.bf16.msra.mxu0 0
  %557 = vmatprep.subr.bf16.mxu0 0
  %558 = vmatpush1.bf16.msra.mxu0 0
  %559 = vmatprep.mubr.bf16.mxu0 0
  %560 = vmatmul.mubr.bf16.gmra.mrb[0].mxu0 %v507
  %v561 = vpop.f32.mrb[0].mxu0
  %v562 = vadd.f32 0.0, %v561
  %v563 = vpop.f32.mrb[0].mxu0
  %v564 = vpop.f32.mrb[0].mxu0
  %v565 = vadd.f32 0.0, %v564
  %v566 = vpop.f32.mrb[0].mxu0
  %567 = vmatprep.mubr.bf16.mxu0 0
  %568 = vmatmul.mubr.bf16.gmra.mrb[0].mxu0 %v510
  %v569 = vpop.f32.mrb[0].mxu0
  %v570 = vadd.f32 0.0, %v569
  %v571 = vpop.f32.mrb[0].mxu0
  %v572 = vpop.f32.mrb[0].mxu0
  %v573 = vadd.f32 0.0, %v572
  %v574 = vpop.f32.mrb[0].mxu0
  %575 = vmatprep.mubr.bf16.mxu0 0
  %576 = vmatmul.mubr.bf16.gmra.mrb[0].mxu0 %v513
  %v577 = vpop.f32.mrb[0].mxu0
  %v578 = vadd.f32 0.0, %v577
  %v579 = vpop.f32.mrb[0].mxu0
  %v580 = vpop.f32.mrb[0].mxu0
  %v581 = vadd.f32 0.0, %v580
  %v582 = vpop.f32.mrb[0].mxu0
  %583 = vmatprep.mubr.bf16.mxu0 0
  %584 = vmatmul.mubr.bf16.gmra.mrb[0].mxu0 %v516
  %v585 = vpop.f32.mrb[0].mxu0
  %v586 = vadd.f32 0.0, %v585
  %v587 = vpop.f32.mrb[0].mxu0
  %v588 = vpop.f32.mrb[0].mxu0
  %v589 = vadd.f32 0.0, %v588
  %v590 = vpop.f32.mrb[0].mxu0
  %591 = vmatprep.mubr.bf16.mxu0 0
  %592 = vmatmul.mubr.bf16.gmra.mrb[0].mxu0 %v519
  %v593 = vpop.f32.mrb[0].mxu0
  %v594 = vadd.f32 0.0, %v593
  %v595 = vpop.f32.mrb[0].mxu0
  %v596 = vpop.f32.mrb[0].mxu0
  %v597 = vadd.f32 0.0, %v596
  %v598 = vpop.f32.mrb[0].mxu0
  %599 = vmatprep.mubr.bf16.mxu0 0
  %600 = vmatmul.mubr.bf16.gmra.mrb[0].mxu0 %v522
  %v601 = vpop.f32.mrb[0].mxu0
  %v602 = vadd.f32 0.0, %v601
  %v603 = vpop.f32.mrb[0].mxu0
  %v604 = vpop.f32.mrb[0].mxu0
  %v605 = vadd.f32 0.0, %v604
  %v606 = vpop.f32.mrb[0].mxu0
  %607 = vmatprep.mubr.bf16.mxu0 0
  %608 = vmatmul.mubr.bf16.gmra.mrb[0].mxu0 %v525
  %v609 = vpop.f32.mrb[0].mxu0
  %v610 = vadd.f32 0.0, %v609
  %v611 = vpop.f32.mrb[0].mxu0
  %v612 = vpop.f32.mrb[0].mxu0
  %v613 = vadd.f32 0.0, %v612
  %v614 = vpop.f32.mrb[0].mxu0
  %615 = vdwg.mxu0
  %v616 = vadd.f32 %v362, %v562
  %v617 = vadd.f32 %v365, %v565
  %v618 = vadd.f32 %v370, %v570
  %v619 = vadd.f32 %v373, %v573
  %v620 = vadd.f32 %v378, %v578
  %v621 = vadd.f32 %v381, %v581
  %v622 = vadd.f32 %v386, %v586
  %v623 = vadd.f32 %v389, %v589
  %v624 = vadd.f32 %v394, %v594
  %v625 = vadd.f32 %v397, %v597
  %v626 = vadd.f32 %v402, %v602
  %v627 = vadd.f32 %v405, %v605
  %v628 = vadd.f32 %v410, %v610
  %v629 = vadd.f32 %v413, %v613
  %v630 = vld [vmem:[%s39 + $0x8] sm:$0xf]
  %v631 = vld [vmem:[%s39 + $0xc] sm:$0xf]
  %v632 = vld [vmem:[%s39 + $0x10] sm:$0xf]
  %v633 = vld [vmem:[%s39 + $0x14] sm:$0xf]
  %v634 = vld [vmem:[%s39 + $0x18] sm:$0xf]
  %v635 = vld [vmem:[%s39 + $0x1c] sm:$0xf]
  %v636 = vld [vmem:[%s39 + $0x20] sm:$0xf]
  %v637 = vld [vmem:[%s39 + $0x24] sm:$0xf]
  %v638 = vld [vmem:[%s39 + $0x28] sm:$0xf]
  %v639 = vld [vmem:[%s39 + $0x2c] sm:$0xf]
  %v640 = vld [vmem:[%s39 + $0x30] sm:$0xf]
  %v641 = vld [vmem:[%s39 + $0x34] sm:$0xf]
  %v642 = vld [vmem:[%s39 + $0x38] sm:$0xf]
  %v643 = vld [vmem:[%s39 + $0x3c] sm:$0xf]
  %s644 = scalar_lea.vmem %s1, 120
  %v645 = vld [vmem:[%s644] sm:$0xf]
  %v646 = vld [vmem:[%s644 + $0x4] sm:$0xf]
  %v647 = vld [vmem:[%s644 + $0x8] sm:$0xf]
  %v648 = vld [vmem:[%s644 + $0xc] sm:$0xf]
  %v649 = vld [vmem:[%s644 + $0x10] sm:$0xf]
  %v650 = vld [vmem:[%s644 + $0x14] sm:$0xf]
  %v651 = vld [vmem:[%s644 + $0x18] sm:$0xf]
  %v652 = vld [vmem:[%s644 + $0x1c] sm:$0xf]
  %v653 = vld [vmem:[%s644 + $0x20] sm:$0xf]
  %v654 = vld [vmem:[%s644 + $0x24] sm:$0xf]
  %v669 = vunpack.c.l.b16 %v630
  %v670 = vunpack.c.l.b16 %v631
  %v671 = vunpack.c.l.b16 %v632
  %v672 = vunpack.c.l.b16 %v633
  %v673 = vunpack.c.l.b16 %v634
  %v674 = vunpack.c.l.b16 %v635
  %v675 = vunpack.c.l.b16 %v636
  %v676 = vunpack.c.l.b16 %v637
  %v677 = vunpack.c.l.b16 %v638
  %v678 = vunpack.c.l.b16 %v639
  %v679 = vunpack.c.l.b16 %v640
  %v680 = vunpack.c.l.b16 %v641
  %v681 = vunpack.c.l.b16 %v642
  %v682 = vunpack.c.l.b16 %v643
  %v683 = vpack.c.b16 %v670, %v669
  %v684 = vpack.c.b16 %v672, %v671
  %v685 = vpack.c.b16 %v674, %v673
  %v686 = vpack.c.b16 %v676, %v675
  %v687 = vpack.c.b16 %v678, %v677
  %v688 = vpack.c.b16 %v680, %v679
  %v689 = vpack.c.b16 %v682, %v681
  %v700 = vunpack.c.l.b16 %v645
  %v701 = vunpack.c.l.b16 %v646
  %v702 = vunpack.c.l.b16 %v647
  %v703 = vunpack.c.l.b16 %v648
  %v704 = vunpack.c.l.b16 %v649
  %v705 = vunpack.c.l.b16 %v650
  %v706 = vunpack.c.l.b16 %v651
  %v707 = vunpack.c.l.b16 %v652
  %v708 = vunpack.c.l.b16 %v653
  %v709 = vunpack.c.l.b16 %v654
  %v710 = vpack.c.b16 %v701, %v700
  %v711 = vpack.c.b16 %v703, %v702
  %v712 = vpack.c.b16 %v705, %v704
  %v713 = vpack.c.b16 %v707, %v706
  %v714 = vpack.c.b16 %v709, %v708
  %v721 = vsel %vm130, %v683, 0
  %v724 = vsel %vm130, %v684, 0
  %v727 = vsel %vm130, %v685, 0
  %v730 = vsel %vm130, %v686, 0
  %v733 = vsel %vm130, %v687, 0
  %v736 = vsel %vm130, %v688, 0
  %v739 = vsel %vm130, %v689, 0
  %741 = vmatprep.subr.bf16.mxu0 0
  %742 = vmatpush1.bf16.msra.mxu0 %v710
  %743 = vmatprep.subr.bf16.mxu0 0
  %744 = vmatpush1.bf16.msra.mxu0 %v711
  %745 = vmatprep.subr.bf16.mxu0 0
  %746 = vmatpush1.bf16.msra.mxu0 %v712
  %747 = vmatprep.subr.bf16.mxu0 0
  %748 = vmatpush1.bf16.msra.mxu0 %v713
  %749 = vmatprep.subr.bf16.mxu0 0
  %750 = vmatpush1.bf16.msra.mxu0 %v714
  %751 = vmatprep.subr.bf16.mxu0 0
  %752 = vmatpush1.bf16.msra.mxu0 0
  %753 = vmatprep.subr.bf16.mxu0 0
  %754 = vmatpush1.bf16.msra.mxu0 0
  %755 = vmatprep.subr.bf16.mxu0 0
  %756 = vmatpush1.bf16.msra.mxu0 0
  %757 = vmatprep.subr.bf16.mxu0 0
  %758 = vmatpush1.bf16.msra.mxu0 0
  %759 = vmatprep.subr.bf16.mxu0 0
  %760 = vmatpush1.bf16.msra.mxu0 0
  %761 = vmatprep.subr.bf16.mxu0 0
  %762 = vmatpush1.bf16.msra.mxu0 0
  %763 = vmatprep.subr.bf16.mxu0 0
  %764 = vmatpush1.bf16.msra.mxu0 0
  %765 = vmatprep.subr.bf16.mxu0 0
  %766 = vmatpush1.bf16.msra.mxu0 0
  %767 = vmatprep.subr.bf16.mxu0 0
  %768 = vmatpush1.bf16.msra.mxu0 0
  %769 = vmatprep.subr.bf16.mxu0 0
  %770 = vmatpush1.bf16.msra.mxu0 0
  %771 = vmatprep.subr.bf16.mxu0 0
  %772 = vmatpush1.bf16.msra.mxu0 0
  %773 = vmatprep.mubr.bf16.mxu0 0
  %774 = vmatmul.mubr.bf16.gmra.mrb[0].mxu0 %v721
  %v775 = vpop.f32.mrb[0].mxu0
  %v776 = vadd.f32 0.0, %v775
  %v777 = vpop.f32.mrb[0].mxu0
  %v778 = vpop.f32.mrb[0].mxu0
  %v779 = vadd.f32 0.0, %v778
  %v780 = vpop.f32.mrb[0].mxu0
  %781 = vmatprep.mubr.bf16.mxu0 0
  %782 = vmatmul.mubr.bf16.gmra.mrb[0].mxu0 %v724
  %v783 = vpop.f32.mrb[0].mxu0
  %v784 = vadd.f32 0.0, %v783
  %v785 = vpop.f32.mrb[0].mxu0
  %v786 = vpop.f32.mrb[0].mxu0
  %v787 = vadd.f32 0.0, %v786
  %v788 = vpop.f32.mrb[0].mxu0
  %789 = vmatprep.mubr.bf16.mxu0 0
  %790 = vmatmul.mubr.bf16.gmra.mrb[0].mxu0 %v727
  %v791 = vpop.f32.mrb[0].mxu0
  %v792 = vadd.f32 0.0, %v791
  %v793 = vpop.f32.mrb[0].mxu0
  %v794 = vpop.f32.mrb[0].mxu0
  %v795 = vadd.f32 0.0, %v794
  %v796 = vpop.f32.mrb[0].mxu0
  %797 = vmatprep.mubr.bf16.mxu0 0
  %798 = vmatmul.mubr.bf16.gmra.mrb[0].mxu0 %v730
  %v799 = vpop.f32.mrb[0].mxu0
  %v800 = vadd.f32 0.0, %v799
  %v801 = vpop.f32.mrb[0].mxu0
  %v802 = vpop.f32.mrb[0].mxu0
  %v803 = vadd.f32 0.0, %v802
  %v804 = vpop.f32.mrb[0].mxu0
  %805 = vmatprep.mubr.bf16.mxu0 0
  %806 = vmatmul.mubr.bf16.gmra.mrb[0].mxu0 %v733
  %v807 = vpop.f32.mrb[0].mxu0
  %v808 = vadd.f32 0.0, %v807
  %v809 = vpop.f32.mrb[0].mxu0
  %v810 = vpop.f32.mrb[0].mxu0
  %v811 = vadd.f32 0.0, %v810
  %v812 = vpop.f32.mrb[0].mxu0
  %813 = vmatprep.mubr.bf16.mxu0 0
  %814 = vmatmul.mubr.bf16.gmra.mrb[0].mxu0 %v736
  %v815 = vpop.f32.mrb[0].mxu0
  %v816 = vadd.f32 0.0, %v815
  %v817 = vpop.f32.mrb[0].mxu0
  %v818 = vpop.f32.mrb[0].mxu0
  %v819 = vadd.f32 0.0, %v818
  %v820 = vpop.f32.mrb[0].mxu0
  %821 = vmatprep.mubr.bf16.mxu0 0
  %822 = vmatmul.mubr.bf16.gmra.mrb[0].mxu0 %v739
  %v823 = vpop.f32.mrb[0].mxu0
  %v824 = vadd.f32 0.0, %v823
  %v825 = vpop.f32.mrb[0].mxu0
  %v826 = vpop.f32.mrb[0].mxu0
  %v827 = vadd.f32 0.0, %v826
  %v828 = vpop.f32.mrb[0].mxu0
  %829 = vdwg.mxu0
  %v830 = vadd.f32 %v616, %v776
  %v831 = vadd.f32 %v617, %v779
  %v832 = vadd.f32 %v618, %v784
  %v833 = vadd.f32 %v619, %v787
  %v834 = vadd.f32 %v620, %v792
  %v835 = vadd.f32 %v621, %v795
  %v836 = vadd.f32 %v622, %v800
  %v837 = vadd.f32 %v623, %v803
  %v838 = vadd.f32 %v624, %v808
  %v839 = vadd.f32 %v625, %v811
  %v840 = vadd.f32 %v626, %v816
  %v841 = vadd.f32 %v627, %v819
  %v842 = vadd.f32 %v628, %v824
  %v843 = vadd.f32 %v629, %v827
  %v844 = vld [vmem:[%s0 + $0x10] sm:$0xf]
  %v845 = vld [vmem:[%s0 + $0x14] sm:$0xf]
  %v846 = vld [vmem:[%s0 + $0x18] sm:$0xf]
  %v847 = vld [vmem:[%s0 + $0x1c] sm:$0xf]
  %v848 = vld [vmem:[%s0 + $0x20] sm:$0xf]
  %v849 = vld [vmem:[%s0 + $0x24] sm:$0xf]
  %v850 = vld [vmem:[%s0 + $0x28] sm:$0xf]
  %v851 = vld [vmem:[%s0 + $0x2c] sm:$0xf]
  %v852 = vld [vmem:[%s0 + $0x30] sm:$0xf]
  %v853 = vld [vmem:[%s0 + $0x34] sm:$0xf]
  %v854 = vld [vmem:[%s0 + $0x38] sm:$0xf]
  %v855 = vld [vmem:[%s0 + $0x3c] sm:$0xf]
  %v856 = vld [vmem:[%s0 + $0x40] sm:$0xf]
  %v857 = vld [vmem:[%s0 + $0x44] sm:$0xf]
  %s858 = scalar_lea.vmem %s1, 160
  %v859 = vld [vmem:[%s858] sm:$0xf]
  %v860 = vld [vmem:[%s858 + $0x4] sm:$0xf]
  %v861 = vld [vmem:[%s858 + $0x8] sm:$0xf]
  %v862 = vld [vmem:[%s858 + $0xc] sm:$0xf]
  %v863 = vld [vmem:[%s858 + $0x10] sm:$0xf]
  %v864 = vld [vmem:[%s858 + $0x14] sm:$0xf]
  %v865 = vld [vmem:[%s858 + $0x18] sm:$0xf]
  %v866 = vld [vmem:[%s858 + $0x1c] sm:$0xf]
  %v867 = vld [vmem:[%s858 + $0x20] sm:$0xf]
  %v868 = vld [vmem:[%s858 + $0x24] sm:$0xf]
  %v883 = vunpack.c.l.b16 %v844
  %v884 = vunpack.c.l.b16 %v845
  %v885 = vunpack.c.l.b16 %v846
  %v886 = vunpack.c.l.b16 %v847
  %v887 = vunpack.c.l.b16 %v848
  %v888 = vunpack.c.l.b16 %v849
  %v889 = vunpack.c.l.b16 %v850
  %v890 = vunpack.c.l.b16 %v851
  %v891 = vunpack.c.l.b16 %v852
  %v892 = vunpack.c.l.b16 %v853
  %v893 = vunpack.c.l.b16 %v854
  %v894 = vunpack.c.l.b16 %v855
  %v895 = vunpack.c.l.b16 %v856
  %v896 = vunpack.c.l.b16 %v857
  %v897 = vpack.c.b16 %v884, %v883
  %v898 = vpack.c.b16 %v886, %v885
  %v899 = vpack.c.b16 %v888, %v887
  %v900 = vpack.c.b16 %v890, %v889
  %v901 = vpack.c.b16 %v892, %v891
  %v902 = vpack.c.b16 %v894, %v893
  %v903 = vpack.c.b16 %v896, %v895
  %v914 = vunpack.c.l.b16 %v859
  %v915 = vunpack.c.l.b16 %v860
  %v916 = vunpack.c.l.b16 %v861
  %v917 = vunpack.c.l.b16 %v862
  %v918 = vunpack.c.l.b16 %v863
  %v919 = vunpack.c.l.b16 %v864
  %v920 = vunpack.c.l.b16 %v865
  %v921 = vunpack.c.l.b16 %v866
  %v922 = vunpack.c.l.b16 %v867
  %v923 = vunpack.c.l.b16 %v868
  %v924 = vpack.c.b16 %v915, %v914
  %v925 = vpack.c.b16 %v917, %v916
  %v926 = vpack.c.b16 %v919, %v918
  %v927 = vpack.c.b16 %v921, %v920
  %v928 = vpack.c.b16 %v923, %v922
  %v935 = vsel %vm130, %v897, 0
  %v938 = vsel %vm130, %v898, 0
  %v941 = vsel %vm130, %v899, 0
  %v944 = vsel %vm130, %v900, 0
  %v947 = vsel %vm130, %v901, 0
  %v950 = vsel %vm130, %v902, 0
  %v953 = vsel %vm130, %v903, 0
  %955 = vmatprep.subr.bf16.mxu0 0
  %956 = vmatpush1.bf16.msra.mxu0 %v924
  %957 = vmatprep.subr.bf16.mxu0 0
  %958 = vmatpush1.bf16.msra.mxu0 %v925
  %959 = vmatprep.subr.bf16.mxu0 0
  %960 = vmatpush1.bf16.msra.mxu0 %v926
  %961 = vmatprep.subr.bf16.mxu0 0
  %962 = vmatpush1.bf16.msra.mxu0 %v927
  %963 = vmatprep.subr.bf16.mxu0 0
  %964 = vmatpush1.bf16.msra.mxu0 %v928
  %965 = vmatprep.subr.bf16.mxu0 0
  %966 = vmatpush1.bf16.msra.mxu0 0
  %967 = vmatprep.subr.bf16.mxu0 0
  %968 = vmatpush1.bf16.msra.mxu0 0
  %969 = vmatprep.subr.bf16.mxu0 0
  %970 = vmatpush1.bf16.msra.mxu0 0
  %971 = vmatprep.subr.bf16.mxu0 0
  %972 = vmatpush1.bf16.msra.mxu0 0
  %973 = vmatprep.subr.bf16.mxu0 0
  %974 = vmatpush1.bf16.msra.mxu0 0
  %975 = vmatprep.subr.bf16.mxu0 0
  %976 = vmatpush1.bf16.msra.mxu0 0
  %977 = vmatprep.subr.bf16.mxu0 0
  %978 = vmatpush1.bf16.msra.mxu0 0
  %979 = vmatprep.subr.bf16.mxu0 0
  %980 = vmatpush1.bf16.msra.mxu0 0
  %981 = vmatprep.subr.bf16.mxu0 0
  %982 = vmatpush1.bf16.msra.mxu0 0
  %983 = vmatprep.subr.bf16.mxu0 0
  %984 = vmatpush1.bf16.msra.mxu0 0
  %985 = vmatprep.subr.bf16.mxu0 0
  %986 = vmatpush1.bf16.msra.mxu0 0
  %987 = vmatprep.mubr.bf16.mxu0 0
  %988 = vmatmul.mubr.bf16.gmra.mrb[0].mxu0 %v935
  %v989 = vpop.f32.mrb[0].mxu0
  %v990 = vadd.f32 0.0, %v989
  %v991 = vpop.f32.mrb[0].mxu0
  %v992 = vpop.f32.mrb[0].mxu0
  %v993 = vadd.f32 0.0, %v992
  %v994 = vpop.f32.mrb[0].mxu0
  %995 = vmatprep.mubr.bf16.mxu0 0
  %996 = vmatmul.mubr.bf16.gmra.mrb[0].mxu0 %v938
  %v997 = vpop.f32.mrb[0].mxu0
  %v998 = vadd.f32 0.0, %v997
  %v999 = vpop.f32.mrb[0].mxu0
  %v1000 = vpop.f32.mrb[0].mxu0
  %v1001 = vadd.f32 0.0, %v1000
  %v1002 = vpop.f32.mrb[0].mxu0
  %1003 = vmatprep.mubr.bf16.mxu0 0
  %1004 = vmatmul.mubr.bf16.gmra.mrb[0].mxu0 %v941
  %v1005 = vpop.f32.mrb[0].mxu0
  %v1006 = vadd.f32 0.0, %v1005
  %v1007 = vpop.f32.mrb[0].mxu0
  %v1008 = vpop.f32.mrb[0].mxu0
  %v1009 = vadd.f32 0.0, %v1008
  %v1010 = vpop.f32.mrb[0].mxu0
  %1011 = vmatprep.mubr.bf16.mxu0 0
  %1012 = vmatmul.mubr.bf16.gmra.mrb[0].mxu0 %v944
  %v1013 = vpop.f32.mrb[0].mxu0
  %v1014 = vadd.f32 0.0, %v1013
  %v1015 = vpop.f32.mrb[0].mxu0
  %v1016 = vpop.f32.mrb[0].mxu0
  %v1017 = vadd.f32 0.0, %v1016
  %v1018 = vpop.f32.mrb[0].mxu0
  %1019 = vmatprep.mubr.bf16.mxu0 0
  %1020 = vmatmul.mubr.bf16.gmra.mrb[0].mxu0 %v947
  %v1021 = vpop.f32.mrb[0].mxu0
  %v1022 = vadd.f32 0.0, %v1021
  %v1023 = vpop.f32.mrb[0].mxu0
  %v1024 = vpop.f32.mrb[0].mxu0
  %v1025 = vadd.f32 0.0, %v1024
  %v1026 = vpop.f32.mrb[0].mxu0
  %1027 = vmatprep.mubr.bf16.mxu0 0
  %1028 = vmatmul.mubr.bf16.gmra.mrb[0].mxu0 %v950
  %v1029 = vpop.f32.mrb[0].mxu0
  %v1030 = vadd.f32 0.0, %v1029
  %v1031 = vpop.f32.mrb[0].mxu0
  %v1032 = vpop.f32.mrb[0].mxu0
  %v1033 = vadd.f32 0.0, %v1032
  %v1034 = vpop.f32.mrb[0].mxu0
  %1035 = vmatprep.mubr.bf16.mxu0 0
  %1036 = vmatmul.mubr.bf16.gmra.mrb[0].mxu0 %v953
  %v1037 = vpop.f32.mrb[0].mxu0
  %v1038 = vadd.f32 0.0, %v1037
  %v1039 = vpop.f32.mrb[0].mxu0
  %v1040 = vpop.f32.mrb[0].mxu0
  %v1041 = vadd.f32 0.0, %v1040
  %v1042 = vpop.f32.mrb[0].mxu0
  %1043 = vdwg.mxu0
  %v1044 = vadd.f32 %v830, %v990
  %v1045 = vadd.f32 %v831, %v993
  %v1046 = vadd.f32 %v832, %v998
  %v1047 = vadd.f32 %v833, %v1001
  %v1048 = vadd.f32 %v834, %v1006
  %v1049 = vadd.f32 %v835, %v1009
  %v1050 = vadd.f32 %v836, %v1014
  %v1051 = vadd.f32 %v837, %v1017
  %v1052 = vadd.f32 %v838, %v1022
  %v1053 = vadd.f32 %v839, %v1025
  %v1054 = vadd.f32 %v840, %v1030
  %v1055 = vadd.f32 %v841, %v1033
  %v1056 = vadd.f32 %v842, %v1038
  %v1057 = vadd.f32 %v843, %v1041
  %v1058 = vadd.f32 %v1044, %v1045
  %v1059 = vadd.f32 %v1058, %v1046
  %v1060 = vadd.f32 %v1059, %v1047
  %v1061 = vadd.f32 %v1060, %v1048
  %v1062 = vadd.f32 %v1061, %v1049
  %v1063 = vadd.f32 %v1062, %v1050
  %v1064 = vadd.f32 %v1063, %v1051
  %v1065 = vadd.f32 %v1064, %v1052
  %v1066 = vadd.f32 %v1065, %v1053
  %v1067 = vadd.f32 %v1066, %v1054
  %v1068 = vadd.f32 %v1067, %v1055
  %v1069 = vadd.f32 %v1068, %v1056
  %v1070 = vadd.f32 %v1069, %v1057
  %v1071 = vrot.slane %v1070, 4
  %v1072 = vadd.f32 %v1070, %v1071
  %v1073 = vrot.slane %v1072, 2
  %v1074 = vadd.f32 %v1072, %v1073
  %v1075 = vrot.slane %v1074, 1
  %v1076 = vadd.f32 %v1074, %v1075
  %v1077 = vmul.f32 %v1044, %v1044
  %v1078 = vmul.f32 %v1045, %v1045
  %v1079 = vmul.f32 %v1046, %v1046
  %v1080 = vmul.f32 %v1047, %v1047
  %v1081 = vmul.f32 %v1048, %v1048
  %v1082 = vmul.f32 %v1049, %v1049
  %v1083 = vmul.f32 %v1050, %v1050
  %v1084 = vmul.f32 %v1051, %v1051
  %v1085 = vmul.f32 %v1052, %v1052
  %v1086 = vmul.f32 %v1053, %v1053
  %v1087 = vmul.f32 %v1054, %v1054
  %v1088 = vmul.f32 %v1055, %v1055
  %v1089 = vmul.f32 %v1056, %v1056
  %v1090 = vmul.f32 %v1057, %v1057
  %v1091 = vadd.f32 %v1077, %v1078
  %v1092 = vadd.f32 %v1091, %v1079
  %v1093 = vadd.f32 %v1092, %v1080
  %v1094 = vadd.f32 %v1093, %v1081
  %v1095 = vadd.f32 %v1094, %v1082
  %v1096 = vadd.f32 %v1095, %v1083
  %v1097 = vadd.f32 %v1096, %v1084
  %v1098 = vadd.f32 %v1097, %v1085
  %v1099 = vadd.f32 %v1098, %v1086
  %v1100 = vadd.f32 %v1099, %v1087
  %v1101 = vadd.f32 %v1100, %v1088
  %v1102 = vadd.f32 %v1101, %v1089
  %v1103 = vadd.f32 %v1102, %v1090
  %v1104 = vrot.slane %v1103, 4
  %v1105 = vadd.f32 %v1103, %v1104
  %v1106 = vrot.slane %v1105, 2
  %v1107 = vadd.f32 %v1105, %v1106
  %v1108 = vrot.slane %v1107, 1
  %v1109 = vadd.f32 %v1107, %v1108
  %v1110 = vmul.f32 %v1076, 0.010204081
  %v1111 = vmul.f32 %v1109, 0.010204081
  %v1112 = vmul.f32 %v1110, %v1110
  %v1113 = vsub.f32 %v1111, %v1112
  %v1114 = vmax.f32 %v1113, 0.0
  %v1115 = vld [vmem:[%s2] sm:$0x1]
  %v1116 = vadd.f32 %v1114, 1e-05
  %v1117 = vrsqrt.pop %v1116
  %v1118 = vmul.f32 %v1115, %v1117
  %v1119 = vld [vmem:[%s2 + $0x1] sm:$0x1]
  %v1120 = vmul.f32 %v1110, %v1118
  %v1121 = vsub.f32 %v1119, %v1120
  %v1122 = vlaneseq
  %v1123 = vshrl.u32 %v1122, 7
  %v1124 = vsub.s32 0, %v1123
  %v1125 = vrot.slane %v1118, %v1124
  %v1126 = vmul.f32 %v1044, %v1125
  %v1127 = vmul.f32 %v1045, %v1125
  %v1128 = vmul.f32 %v1046, %v1125
  %v1129 = vmul.f32 %v1047, %v1125
  %v1130 = vmul.f32 %v1048, %v1125
  %v1131 = vmul.f32 %v1049, %v1125
  %v1132 = vmul.f32 %v1050, %v1125
  %v1133 = vmul.f32 %v1051, %v1125
  %v1134 = vmul.f32 %v1052, %v1125
  %v1135 = vmul.f32 %v1053, %v1125
  %v1136 = vmul.f32 %v1054, %v1125
  %v1137 = vmul.f32 %v1055, %v1125
  %v1138 = vmul.f32 %v1056, %v1125
  %v1139 = vmul.f32 %v1057, %v1125
  %v1140 = vlaneseq
  %v1141 = vshrl.u32 %v1140, 7
  %v1142 = vsub.s32 0, %v1141
  %v1143 = vrot.slane %v1121, %v1142
  %v1144 = vadd.f32 %v1126, %v1143
  %v1145 = vadd.f32 %v1127, %v1143
  %v1146 = vadd.f32 %v1128, %v1143
  %v1147 = vadd.f32 %v1129, %v1143
  %v1148 = vadd.f32 %v1130, %v1143
  %v1149 = vadd.f32 %v1131, %v1143
  %v1150 = vadd.f32 %v1132, %v1143
  %v1151 = vadd.f32 %v1133, %v1143
  %v1152 = vadd.f32 %v1134, %v1143
  %v1153 = vadd.f32 %v1135, %v1143
  %v1154 = vadd.f32 %v1136, %v1143
  %v1155 = vadd.f32 %v1137, %v1143
  %v1156 = vadd.f32 %v1138, %v1143
  %v1157 = vadd.f32 %v1139, %v1143
  %v1158 = vmax.f32 %v1144, 0.0
  %v1159 = vmax.f32 %v1145, 0.0
  %v1160 = vmax.f32 %v1146, 0.0
  %v1161 = vmax.f32 %v1147, 0.0
  %v1162 = vmax.f32 %v1148, 0.0
  %v1163 = vmax.f32 %v1149, 0.0
  %v1164 = vmax.f32 %v1150, 0.0
  %v1165 = vmax.f32 %v1151, 0.0
  %v1166 = vmax.f32 %v1152, 0.0
  %v1167 = vmax.f32 %v1153, 0.0
  %v1168 = vmax.f32 %v1154, 0.0
  %v1169 = vmax.f32 %v1155, 0.0
  %v1170 = vmax.f32 %v1156, 0.0
  %v1171 = vmax.f32 %v1157, 0.0
  %v1172 = vpack.c.bf16 %v1159, %v1158
  %v1173 = vpack.c.bf16 %v1161, %v1160
  %v1174 = vpack.c.bf16 %v1163, %v1162
  %v1175 = vpack.c.bf16 %v1165, %v1164
  %v1176 = vpack.c.bf16 %v1167, %v1166
  %v1177 = vpack.c.bf16 %v1169, %v1168
  %v1178 = vpack.c.bf16 %v1171, %v1170
  %v1186 = vunpack.c.l.b16 %v1172
  %v1187 = vunpack.c.h.b16 %v1172
  %v1188 = vunpack.c.l.b16 %v1173
  %v1189 = vunpack.c.h.b16 %v1173
  %v1190 = vunpack.c.l.b16 %v1174
  %v1191 = vunpack.c.h.b16 %v1174
  %v1192 = vunpack.c.l.b16 %v1175
  %v1193 = vunpack.c.h.b16 %v1175
  %v1194 = vunpack.c.l.b16 %v1176
  %v1195 = vunpack.c.h.b16 %v1176
  %v1196 = vunpack.c.l.b16 %v1177
  %v1197 = vunpack.c.h.b16 %v1177
  %v1198 = vunpack.c.l.b16 %v1178
  %v1199 = vunpack.c.h.b16 %v1178
  %v1200 = vpack.c.b16 %v1186, %v1186
  %v1201 = vpack.c.b16 %v1187, %v1187
  %v1202 = vpack.c.b16 %v1188, %v1188
  %v1203 = vpack.c.b16 %v1189, %v1189
  %v1204 = vpack.c.b16 %v1190, %v1190
  %v1205 = vpack.c.b16 %v1191, %v1191
  %v1206 = vpack.c.b16 %v1192, %v1192
  %v1207 = vpack.c.b16 %v1193, %v1193
  %v1208 = vpack.c.b16 %v1194, %v1194
  %v1209 = vpack.c.b16 %v1195, %v1195
  %v1210 = vpack.c.b16 %v1196, %v1196
  %v1211 = vpack.c.b16 %v1197, %v1197
  %v1212 = vpack.c.b16 %v1198, %v1198
  %v1213 = vpack.c.b16 %v1199, %v1199
  %1228 = vst [vmem:[%s3] sm:$0xf] %v1200
  %1229 = vst [vmem:[%s3 + $0x4] sm:$0xf] %v1201
  %1230 = vst [vmem:[%s3 + $0x8] sm:$0xf] %v1202
  %1231 = vst [vmem:[%s3 + $0xc] sm:$0xf] %v1203
  %1232 = vst [vmem:[%s3 + $0x10] sm:$0xf] %v1204
  %1233 = vst [vmem:[%s3 + $0x14] sm:$0xf] %v1205
  %1234 = vst [vmem:[%s3 + $0x18] sm:$0xf] %v1206
  %1235 = vst [vmem:[%s3 + $0x1c] sm:$0xf] %v1207
  %1236 = vst [vmem:[%s3 + $0x20] sm:$0xf] %v1208
  %1237 = vst [vmem:[%s3 + $0x24] sm:$0xf] %v1209
  %1238 = vst [vmem:[%s3 + $0x28] sm:$0xf] %v1210
  %1239 = vst [vmem:[%s3 + $0x2c] sm:$0xf] %v1211
  %1240 = vst [vmem:[%s3 + $0x30] sm:$0xf] %v1212
  %1241 = vst [vmem:[%s3 + $0x34] sm:$0xf] %v1213
  // Predicated region
  $region14: #{dqn_forward.6} parent=0 // pred_check
    _
  $region15: #{dqn_forward.6} parent=0 // pred_check_branch
    %1243 = sbr.rel (0) target = $region17
  $region16: #{dqn_forward.6} parent=0 // pred_region
    _
  $region17: #{dqn_forward.6} parent=0 // pred_fallthru
    _
  // Predicated region
  $region18: #{dqn_forward.6} parent=0 // pred_check
    _
  $region19: #{dqn_forward.6} parent=0 // pred_check_branch
    %1245 = sbr.rel (0) target = $region21
  $region20: #{dqn_forward.6} parent=0 // pred_region
    _
  $region21: #{dqn_forward.6} parent=0 // pred_fallthru
    _

// kernel: dqn_forward.7
$region0: #{dqn_forward.7}
  #allocation0 [shape = 'u32[]', space=smem, size = 0x4, offset = 0x4, fixed_abs, tag = 'smem constant byte address 0x4 - core index']
  #allocation1 [shape = 'u32[144,128]{1,0:T(1,128)}', space=vmem, size = 0x12000, scoped, tag = 'internal scratch']
  %s0 = inlined_call_operand.vmem [shape: bf16[2,32,160], index: 0, kind: input, shape index: {}]
  %s1 = inlined_call_operand.vmem [shape: bf16[5,160,128], index: 1, kind: input, shape index: {}]
  %s2 = inlined_call_operand.vmem [shape: f32[2,128], index: 2, kind: input, shape index: {}]
  %s3 = inlined_call_operand.vmem [shape: bf16[4,128,128], index: 3, kind: input, shape index: {}]
  %s4 = inlined_call_operand.vmem [shape: f32[1,128], index: 4, kind: input, shape index: {}]
  %s5 = inlined_call_operand.hbm [shape: f32[2,128], index: 5, kind: output, shape index: {}]
  %s6 = sld [smem:[#allocation0]]
  $region30: #{dqn_forward.7} parent=0
    _
  %s8 = ssub.s32 1, %s6
  %s9 = scalar_select 0, %s8, %s6
  $region1: #{dqn_forward.7} parent=0
    #allocation2 [shape = 'u8[1024]{0}', space=vmem, size = 0x400, scoped, tag = 'output window, operand 0, single buffered']
    #allocation3 [shape = 's32[1]{0}', space=sflag, size = 0x4, scoped, tag = 'scoped memory for dqn_forward.7']
    %10 = vsyncpa [#allocation3], 0
    // Predicated region
    $region2: #{dqn_forward.7} parent=1 // pred_check
      _
    $region3: #{dqn_forward.7} parent=1 // pred_check_branch
      %12 = sbr.rel (0) target = $region5
    $region4: #{dqn_forward.7} parent=1 // pred_region
      _
    $region5: #{dqn_forward.7} parent=1 // pred_fallthru
      _
    // Predicated region
    $region6: #{dqn_forward.7} parent=1 // pred_check
      _
    $region7: #{dqn_forward.7} parent=1 // pred_check_branch
      %14 = sbr.rel (0) target = $region9
    $region8: #{dqn_forward.7} parent=1 // pred_region
      _
    $region9: #{dqn_forward.7} parent=1 // pred_fallthru
      _
    // Predicated region
    $region10: #{dqn_forward.7} parent=1 // pred_check
      _
    $region11: #{dqn_forward.7} parent=1 // pred_check_branch
      %16 = sbr.rel (0) target = $region13
    $region12: #{dqn_forward.7} parent=1 // pred_region
      _
    $region13: #{dqn_forward.7} parent=1 // pred_fallthru
      _
    // Predicated region
    $region14: #{dqn_forward.7} parent=1 // pred_check
      _
    $region15: #{dqn_forward.7} parent=1 // pred_check_branch
      %18 = sbr.rel (0) target = $region17
    $region16: #{dqn_forward.7} parent=1 // pred_region
      _
    $region17: #{dqn_forward.7} parent=1 // pred_fallthru
      _
    // Predicated region
    $region18: #{dqn_forward.7} parent=1 // pred_check
      _
    $region19: #{dqn_forward.7} parent=1 // pred_check_branch
      %20 = sbr.rel (0) target = $region21
    $region20: #{dqn_forward.7} parent=1 // pred_region
      _
    $region21: #{dqn_forward.7} parent=1 // pred_fallthru
      _
    %v22 = vld [vmem:[%s0] sm:$0xff]
    %v23 = vld [vmem:[%s0 + $0x8] sm:$0xff]
    %v24 = vld [vmem:[%s1] sm:$0xf]
    %v25 = vld [vmem:[%s1 + $0x4] sm:$0xf]
    %v26 = vld [vmem:[%s1 + $0x8] sm:$0xf]
    %v27 = vld [vmem:[%s1 + $0xc] sm:$0xf]
    %v28 = vld [vmem:[%s1 + $0x10] sm:$0xf]
    %v29 = vld [vmem:[%s1 + $0x14] sm:$0xf]
    %v30 = vld [vmem:[%s1 + $0x18] sm:$0xf]
    %v31 = vld [vmem:[%s1 + $0x1c] sm:$0xf]
    %v32 = vld [vmem:[%s1 + $0x20] sm:$0xf]
    %v33 = vld [vmem:[%s1 + $0x24] sm:$0xf]
    %v34 = vld [vmem:[%s1 + $0x28] sm:$0xf]
    %v35 = vld [vmem:[%s1 + $0x2c] sm:$0xf]
    %v36 = vld [vmem:[%s1 + $0x30] sm:$0xf]
    %v37 = vld [vmem:[%s1 + $0x34] sm:$0xf]
    %v38 = vld [vmem:[%s1 + $0x38] sm:$0xf]
    %v39 = vld [vmem:[%s1 + $0x3c] sm:$0xf]
    %v40 = vld [vmem:[%s1 + $0x40] sm:$0xf]
    %v41 = vld [vmem:[%s1 + $0x44] sm:$0xf]
    %v42 = vld [vmem:[%s1 + $0x48] sm:$0xf]
    %v43 = vld [vmem:[%s1 + $0x4c] sm:$0xf]
    %s44 = scalar_lea.vmem %s0, 32
    %v45 = vld [vmem:[%s44] sm:$0xff]
    %v46 = vld [vmem:[%s44 + $0x8] sm:$0xff]
    %s47 = scalar_lea.vmem %s1, 80
    %v48 = vld [vmem:[%s47] sm:$0xf]
    %v49 = vld [vmem:[%s47 + $0x4] sm:$0xf]
    %v50 = vld [vmem:[%s47 + $0x8] sm:$0xf]
    %v51 = vld [vmem:[%s47 + $0xc] sm:$0xf]
    %v52 = vld [vmem:[%s47 + $0x10] sm:$0xf]
    %v53 = vld [vmem:[%s47 + $0x14] sm:$0xf]
    %v54 = vld [vmem:[%s47 + $0x18] sm:$0xf]
    %v55 = vld [vmem:[%s47 + $0x1c] sm:$0xf]
    %v56 = vld [vmem:[%s47 + $0x20] sm:$0xf]
    %v57 = vld [vmem:[%s47 + $0x24] sm:$0xf]
    %v58 = vld [vmem:[%s47 + $0x28] sm:$0xf]
    %v59 = vld [vmem:[%s47 + $0x2c] sm:$0xf]
    %v60 = vld [vmem:[%s47 + $0x30] sm:$0xf]
    %v61 = vld [vmem:[%s47 + $0x34] sm:$0xf]
    %v62 = vld [vmem:[%s47 + $0x38] sm:$0xf]
    %v63 = vld [vmem:[%s47 + $0x3c] sm:$0xf]
    %v64 = vld [vmem:[%s47 + $0x40] sm:$0xf]
    %v65 = vld [vmem:[%s47 + $0x44] sm:$0xf]
    %v66 = vld [vmem:[%s47 + $0x48] sm:$0xf]
    %v67 = vld [vmem:[%s47 + $0x4c] sm:$0xf]
    %v70 = vunpack.c.l.b16 %v45
    %v71 = vunpack.c.h.b16 %v45
    %v72 = vunpack.c.l.b16 %v46
    %v73 = vunpack.c.h.b16 %v46
    %v74 = vpack.c.b16 %v72, %v70
    %v75 = vpack.c.b16 %v73, %v71
    %v97 = vunpack.c.l.b16 %v48
    %v98 = vunpack.c.l.b16 %v49
    %v99 = vunpack.c.l.b16 %v50
    %v100 = vunpack.c.l.b16 %v51
    %v101 = vunpack.c.l.b16 %v52
    %v102 = vunpack.c.l.b16 %v53
    %v103 = vunpack.c.l.b16 %v54
    %v104 = vunpack.c.l.b16 %v55
    %v105 = vunpack.c.l.b16 %v56
    %v106 = vunpack.c.l.b16 %v57
    %v107 = vunpack.c.l.b16 %v58
    %v108 = vunpack.c.l.b16 %v59
    %v109 = vunpack.c.l.b16 %v60
    %v110 = vunpack.c.l.b16 %v61
    %v111 = vunpack.c.l.b16 %v62
    %v112 = vunpack.c.l.b16 %v63
    %v113 = vunpack.c.l.b16 %v64
    %v114 = vunpack.c.l.b16 %v65
    %v115 = vunpack.c.l.b16 %v66
    %v116 = vunpack.c.l.b16 %v67
    %v117 = vpack.c.b16 %v98, %v97
    %v118 = vpack.c.b16 %v100, %v99
    %v119 = vpack.c.b16 %v102, %v101
    %v120 = vpack.c.b16 %v104, %v103
    %v121 = vpack.c.b16 %v106, %v105
    %v122 = vpack.c.b16 %v108, %v107
    %v123 = vpack.c.b16 %v110, %v109
    %v124 = vpack.c.b16 %v112, %v111
    %v125 = vpack.c.b16 %v114, %v113
    %v126 = vpack.c.b16 %v116, %v115
    %vm137 = vcmask 261120
    %v139 = vsel %vm137, %v75, 0
    %141 = vmatprep.subr.bf16.mxu0 0
    %142 = vmatpush1.bf16.msra.mxu0 %v117
    %143 = vmatprep.subr.bf16.mxu0 0
    %144 = vmatpush1.bf16.msra.mxu0 %v118
    %145 = vmatprep.subr.bf16.mxu0 0
    %146 = vmatpush1.bf16.msra.mxu0 %v119
    %147 = vmatprep.subr.bf16.mxu0 0
    %148 = vmatpush1.bf16.msra.mxu0 %v120
    %149 = vmatprep.subr.bf16.mxu0 0
    %150 = vmatpush1.bf16.msra.mxu0 %v121
    %151 = vmatprep.subr.bf16.mxu0 0
    %152 = vmatpush1.bf16.msra.mxu0 %v122
    %153 = vmatprep.subr.bf16.mxu0 0
    %154 = vmatpush1.bf16.msra.mxu0 %v123
    %155 = vmatprep.subr.bf16.mxu0 0
    %156 = vmatpush1.bf16.msra.mxu0 %v124
    %157 = vmatprep.subr.bf16.mxu0 0
    %158 = vmatpush1.bf16.msra.mxu0 %v125
    %159 = vmatprep.subr.bf16.mxu0 0
    %160 = vmatpush1.bf16.msra.mxu0 %v126
    %161 = vmatprep.subr.bf16.mxu0 0
    %162 = vmatpush1.bf16.msra.mxu0 0
    %163 = vmatprep.subr.bf16.mxu0 0
    %164 = vmatpush1.bf16.msra.mxu0 0
    %165 = vmatprep.subr.bf16.mxu0 0
    %166 = vmatpush1.bf16.msra.mxu0 0
    %167 = vmatprep.subr.bf16.mxu0 0
    %168 = vmatpush1.bf16.msra.mxu0 0
    %169 = vmatprep.subr.bf16.mxu0 0
    %170 = vmatpush1.bf16.msra.mxu0 0
    %171 = vmatprep.subr.bf16.mxu0 0
    %172 = vmatpush1.bf16.msra.mxu0 0
    %173 = vmatprep.mubr.bf16.mxu0 %v139
    %174 = vmatmul.mubr.bf16.gmra.mrb[0].mxu0 %v74
    %v175 = vpop.f32.mrb[0].mxu0
    %v176 = vadd.f32 0.0, %v175
    %v177 = vpop.f32.mrb[0].mxu0
    %v178 = vpop.f32.mrb[0].mxu0
    %v179 = vadd.f32 0.0, %v178
    %v180 = vpop.f32.mrb[0].mxu0
    %181 = vdwg.mxu0
    %v184 = vunpack.c.l.b16 %v22
    %v185 = vunpack.c.h.b16 %v22
    %v186 = vunpack.c.l.b16 %v23
    %v187 = vunpack.c.h.b16 %v23
    %v188 = vpack.c.b16 %v186, %v184
    %v189 = vpack.c.b16 %v187, %v185
    %v211 = vunpack.c.l.b16 %v24
    %v212 = vunpack.c.l.b16 %v25
    %v213 = vunpack.c.l.b16 %v26
    %v214 = vunpack.c.l.b16 %v27
    %v215 = vunpack.c.l.b16 %v28
    %v216 = vunpack.c.l.b16 %v29
    %v217 = vunpack.c.l.b16 %v30
    %v218 = vunpack.c.l.b16 %v31
    %v219 = vunpack.c.l.b16 %v32
    %v220 = vunpack.c.l.b16 %v33
    %v221 = vunpack.c.l.b16 %v34
    %v222 = vunpack.c.l.b16 %v35
    %v223 = vunpack.c.l.b16 %v36
    %v224 = vunpack.c.l.b16 %v37
    %v225 = vunpack.c.l.b16 %v38
    %v226 = vunpack.c.l.b16 %v39
    %v227 = vunpack.c.l.b16 %v40
    %v228 = vunpack.c.l.b16 %v41
    %v229 = vunpack.c.l.b16 %v42
    %v230 = vunpack.c.l.b16 %v43
    %v231 = vpack.c.b16 %v212, %v211
    %v232 = vpack.c.b16 %v214, %v213
    %v233 = vpack.c.b16 %v216, %v215
    %v234 = vpack.c.b16 %v218, %v217
    %v235 = vpack.c.b16 %v220, %v219
    %v236 = vpack.c.b16 %v222, %v221
    %v237 = vpack.c.b16 %v224, %v223
    %v238 = vpack.c.b16 %v226, %v225
    %v239 = vpack.c.b16 %v228, %v227
    %v240 = vpack.c.b16 %v230, %v229
    %v252 = vsel %vm137, %v189, 0
    %254 = vmatprep.subr.bf16.mxu0 0
    %255 = vmatpush1.bf16.msra.mxu0 %v231
    %256 = vmatprep.subr.bf16.mxu0 0
    %257 = vmatpush1.bf16.msra.mxu0 %v232
    %258 = vmatprep.subr.bf16.mxu0 0
    %259 = vmatpush1.bf16.msra.mxu0 %v233
    %260 = vmatprep.subr.bf16.mxu0 0
    %261 = vmatpush1.bf16.msra.mxu0 %v234
    %262 = vmatprep.subr.bf16.mxu0 0
    %263 = vmatpush1.bf16.msra.mxu0 %v235
    %264 = vmatprep.subr.bf16.mxu0 0
    %265 = vmatpush1.bf16.msra.mxu0 %v236
    %266 = vmatprep.subr.bf16.mxu0 0
    %267 = vmatpush1.bf16.msra.mxu0 %v237
    %268 = vmatprep.subr.bf16.mxu0 0
    %269 = vmatpush1.bf16.msra.mxu0 %v238
    %270 = vmatprep.subr.bf16.mxu0 0
    %271 = vmatpush1.bf16.msra.mxu0 %v239
    %272 = vmatprep.subr.bf16.mxu0 0
    %273 = vmatpush1.bf16.msra.mxu0 %v240
    %274 = vmatprep.subr.bf16.mxu0 0
    %275 = vmatpush1.bf16.msra.mxu0 0
    %276 = vmatprep.subr.bf16.mxu0 0
    %277 = vmatpush1.bf16.msra.mxu0 0
    %278 = vmatprep.subr.bf16.mxu0 0
    %279 = vmatpush1.bf16.msra.mxu0 0
    %280 = vmatprep.subr.bf16.mxu0 0
    %281 = vmatpush1.bf16.msra.mxu0 0
    %282 = vmatprep.subr.bf16.mxu0 0
    %283 = vmatpush1.bf16.msra.mxu0 0
    %284 = vmatprep.subr.bf16.mxu0 0
    %285 = vmatpush1.bf16.msra.mxu0 0
    %286 = vmatprep.mubr.bf16.mxu0 %v252
    %287 = vmatmul.mubr.bf16.gmra.mrb[0].mxu0 %v188
    %v288 = vpop.f32.mrb[0].mxu0
    %v289 = vadd.f32 %v176, %v288
    %v290 = vpop.f32.mrb[0].mxu0
    %v291 = vpop.f32.mrb[0].mxu0
    %v292 = vadd.f32 %v179, %v291
    %v293 = vpop.f32.mrb[0].mxu0
    %294 = vdwg.mxu0
    %v295 = vld [vmem:[%s0 + $0x8] sm:$0xff]
    %v296 = vld [vmem:[%s0 + $0x10] sm:$0xff]
    %s297 = scalar_lea.vmem %s1, 160
    %v298 = vld [vmem:[%s297] sm:$0xf]
    %v299 = vld [vmem:[%s297 + $0x4] sm:$0xf]
    %v300 = vld [vmem:[%s297 + $0x8] sm:$0xf]
    %v301 = vld [vmem:[%s297 + $0xc] sm:$0xf]
    %v302 = vld [vmem:[%s297 + $0x10] sm:$0xf]
    %v303 = vld [vmem:[%s297 + $0x14] sm:$0xf]
    %v304 = vld [vmem:[%s297 + $0x18] sm:$0xf]
    %v305 = vld [vmem:[%s297 + $0x1c] sm:$0xf]
    %v306 = vld [vmem:[%s297 + $0x20] sm:$0xf]
    %v307 = vld [vmem:[%s297 + $0x24] sm:$0xf]
    %v308 = vld [vmem:[%s297 + $0x28] sm:$0xf]
    %v309 = vld [vmem:[%s297 + $0x2c] sm:$0xf]
    %v310 = vld [vmem:[%s297 + $0x30] sm:$0xf]
    %v311 = vld [vmem:[%s297 + $0x34] sm:$0xf]
    %v312 = vld [vmem:[%s297 + $0x38] sm:$0xf]
    %v313 = vld [vmem:[%s297 + $0x3c] sm:$0xf]
    %v314 = vld [vmem:[%s297 + $0x40] sm:$0xf]
    %v315 = vld [vmem:[%s297 + $0x44] sm:$0xf]
    %v316 = vld [vmem:[%s297 + $0x48] sm:$0xf]
    %v317 = vld [vmem:[%s297 + $0x4c] sm:$0xf]
    %v320 = vunpack.c.l.b16 %v295
    %v321 = vunpack.c.h.b16 %v295
    %v322 = vunpack.c.l.b16 %v296
    %v323 = vunpack.c.h.b16 %v296
    %v324 = vpack.c.b16 %v322, %v320
    %v325 = vpack.c.b16 %v323, %v321
    %v347 = vunpack.c.l.b16 %v298
    %v348 = vunpack.c.l.b16 %v299
    %v349 = vunpack.c.l.b16 %v300
    %v350 = vunpack.c.l.b16 %v301
    %v351 = vunpack.c.l.b16 %v302
    %v352 = vunpack.c.l.b16 %v303
    %v353 = vunpack.c.l.b16 %v304
    %v354 = vunpack.c.l.b16 %v305
    %v355 = vunpack.c.l.b16 %v306
    %v356 = vunpack.c.l.b16 %v307
    %v357 = vunpack.c.l.b16 %v308
    %v358 = vunpack.c.l.b16 %v309
    %v359 = vunpack.c.l.b16 %v310
    %v360 = vunpack.c.l.b16 %v311
    %v361 = vunpack.c.l.b16 %v312
    %v362 = vunpack.c.l.b16 %v313
    %v363 = vunpack.c.l.b16 %v314
    %v364 = vunpack.c.l.b16 %v315
    %v365 = vunpack.c.l.b16 %v316
    %v366 = vunpack.c.l.b16 %v317
    %v367 = vpack.c.b16 %v348, %v347
    %v368 = vpack.c.b16 %v350, %v349
    %v369 = vpack.c.b16 %v352, %v351
    %v370 = vpack.c.b16 %v354, %v353
    %v371 = vpack.c.b16 %v356, %v355
    %v372 = vpack.c.b16 %v358, %v357
    %v373 = vpack.c.b16 %v360, %v359
    %v374 = vpack.c.b16 %v362, %v361
    %v375 = vpack.c.b16 %v364, %v363
    %v376 = vpack.c.b16 %v366, %v365
    %v388 = vsel %vm137, %v325, 0
    %390 = vmatprep.subr.bf16.mxu0 0
    %391 = vmatpush1.bf16.msra.mxu0 %v367
    %392 = vmatprep.subr.bf16.mxu0 0
    %393 = vmatpush1.bf16.msra.mxu0 %v368
    %394 = vmatprep.subr.bf16.mxu0 0
    %395 = vmatpush1.bf16.msra.mxu0 %v369
    %396 = vmatprep.subr.bf16.mxu0 0
    %397 = vmatpush1.bf16.msra.mxu0 %v370
    %398 = vmatprep.subr.bf16.mxu0 0
    %399 = vmatpush1.bf16.msra.mxu0 %v371
    %400 = vmatprep.subr.bf16.mxu0 0
    %401 = vmatpush1.bf16.msra.mxu0 %v372
    %402 = vmatprep.subr.bf16.mxu0 0
    %403 = vmatpush1.bf16.msra.mxu0 %v373
    %404 = vmatprep.subr.bf16.mxu0 0
    %405 = vmatpush1.bf16.msra.mxu0 %v374
    %406 = vmatprep.subr.bf16.mxu0 0
    %407 = vmatpush1.bf16.msra.mxu0 %v375
    %408 = vmatprep.subr.bf16.mxu0 0
    %409 = vmatpush1.bf16.msra.mxu0 %v376
    %410 = vmatprep.subr.bf16.mxu0 0
    %411 = vmatpush1.bf16.msra.mxu0 0
    %412 = vmatprep.subr.bf16.mxu0 0
    %413 = vmatpush1.bf16.msra.mxu0 0
    %414 = vmatprep.subr.bf16.mxu0 0
    %415 = vmatpush1.bf16.msra.mxu0 0
    %416 = vmatprep.subr.bf16.mxu0 0
    %417 = vmatpush1.bf16.msra.mxu0 0
    %418 = vmatprep.subr.bf16.mxu0 0
    %419 = vmatpush1.bf16.msra.mxu0 0
    %420 = vmatprep.subr.bf16.mxu0 0
    %421 = vmatpush1.bf16.msra.mxu0 0
    %422 = vmatprep.mubr.bf16.mxu0 %v388
    %423 = vmatmul.mubr.bf16.gmra.mrb[0].mxu0 %v324
    %v424 = vpop.f32.mrb[0].mxu0
    %v425 = vadd.f32 0.0, %v424
    %v426 = vpop.f32.mrb[0].mxu0
    %v427 = vpop.f32.mrb[0].mxu0
    %v428 = vadd.f32 0.0, %v427
    %v429 = vpop.f32.mrb[0].mxu0
    %430 = vdwg.mxu0
    %v431 = vadd.f32 %v289, %v425
    %v432 = vadd.f32 %v292, %v428
    %v433 = vld [vmem:[%s44 + $0x8] sm:$0xff]
    %v434 = vld [vmem:[%s44 + $0x10] sm:$0xff]
    %s435 = scalar_lea.vmem %s1, 240
    %v436 = vld [vmem:[%s435] sm:$0xf]
    %v437 = vld [vmem:[%s435 + $0x4] sm:$0xf]
    %v438 = vld [vmem:[%s435 + $0x8] sm:$0xf]
    %v439 = vld [vmem:[%s435 + $0xc] sm:$0xf]
    %v440 = vld [vmem:[%s435 + $0x10] sm:$0xf]
    %v441 = vld [vmem:[%s435 + $0x14] sm:$0xf]
    %v442 = vld [vmem:[%s435 + $0x18] sm:$0xf]
    %v443 = vld [vmem:[%s435 + $0x1c] sm:$0xf]
    %v444 = vld [vmem:[%s435 + $0x20] sm:$0xf]
    %v445 = vld [vmem:[%s435 + $0x24] sm:$0xf]
    %v446 = vld [vmem:[%s435 + $0x28] sm:$0xf]
    %v447 = vld [vmem:[%s435 + $0x2c] sm:$0xf]
    %v448 = vld [vmem:[%s435 + $0x30] sm:$0xf]
    %v449 = vld [vmem:[%s435 + $0x34] sm:$0xf]
    %v450 = vld [vmem:[%s435 + $0x38] sm:$0xf]
    %v451 = vld [vmem:[%s435 + $0x3c] sm:$0xf]
    %v452 = vld [vmem:[%s435 + $0x40] sm:$0xf]
    %v453 = vld [vmem:[%s435 + $0x44] sm:$0xf]
    %v454 = vld [vmem:[%s435 + $0x48] sm:$0xf]
    %v455 = vld [vmem:[%s435 + $0x4c] sm:$0xf]
    %v458 = vunpack.c.l.b16 %v433
    %v459 = vunpack.c.h.b16 %v433
    %v460 = vunpack.c.l.b16 %v434
    %v461 = vunpack.c.h.b16 %v434
    %v462 = vpack.c.b16 %v460, %v458
    %v463 = vpack.c.b16 %v461, %v459
    %v485 = vunpack.c.l.b16 %v436
    %v486 = vunpack.c.l.b16 %v437
    %v487 = vunpack.c.l.b16 %v438
    %v488 = vunpack.c.l.b16 %v439
    %v489 = vunpack.c.l.b16 %v440
    %v490 = vunpack.c.l.b16 %v441
    %v491 = vunpack.c.l.b16 %v442
    %v492 = vunpack.c.l.b16 %v443
    %v493 = vunpack.c.l.b16 %v444
    %v494 = vunpack.c.l.b16 %v445
    %v495 = vunpack.c.l.b16 %v446
    %v496 = vunpack.c.l.b16 %v447
    %v497 = vunpack.c.l.b16 %v448
    %v498 = vunpack.c.l.b16 %v449
    %v499 = vunpack.c.l.b16 %v450
    %v500 = vunpack.c.l.b16 %v451
    %v501 = vunpack.c.l.b16 %v452
    %v502 = vunpack.c.l.b16 %v453
    %v503 = vunpack.c.l.b16 %v454
    %v504 = vunpack.c.l.b16 %v455
    %v505 = vpack.c.b16 %v486, %v485
    %v506 = vpack.c.b16 %v488, %v487
    %v507 = vpack.c.b16 %v490, %v489
    %v508 = vpack.c.b16 %v492, %v491
    %v509 = vpack.c.b16 %v494, %v493
    %v510 = vpack.c.b16 %v496, %v495
    %v511 = vpack.c.b16 %v498, %v497
    %v512 = vpack.c.b16 %v500, %v499
    %v513 = vpack.c.b16 %v502, %v501
    %v514 = vpack.c.b16 %v504, %v503
    %v526 = vsel %vm137, %v463, 0
    %528 = vmatprep.subr.bf16.mxu0 0
    %529 = vmatpush1.bf16.msra.mxu0 %v505
    %530 = vmatprep.subr.bf16.mxu0 0
    %531 = vmatpush1.bf16.msra.mxu0 %v506
    %532 = vmatprep.subr.bf16.mxu0 0
    %533 = vmatpush1.bf16.msra.mxu0 %v507
    %534 = vmatprep.subr.bf16.mxu0 0
    %535 = vmatpush1.bf16.msra.mxu0 %v508
    %536 = vmatprep.subr.bf16.mxu0 0
    %537 = vmatpush1.bf16.msra.mxu0 %v509
    %538 = vmatprep.subr.bf16.mxu0 0
    %539 = vmatpush1.bf16.msra.mxu0 %v510
    %540 = vmatprep.subr.bf16.mxu0 0
    %541 = vmatpush1.bf16.msra.mxu0 %v511
    %542 = vmatprep.subr.bf16.mxu0 0
    %543 = vmatpush1.bf16.msra.mxu0 %v512
    %544 = vmatprep.subr.bf16.mxu0 0
    %545 = vmatpush1.bf16.msra.mxu0 %v513
    %546 = vmatprep.subr.bf16.mxu0 0
    %547 = vmatpush1.bf16.msra.mxu0 %v514
    %548 = vmatprep.subr.bf16.mxu0 0
    %549 = vmatpush1.bf16.msra.mxu0 0
    %550 = vmatprep.subr.bf16.mxu0 0
    %551 = vmatpush1.bf16.msra.mxu0 0
    %552 = vmatprep.subr.bf16.mxu0 0
    %553 = vmatpush1.bf16.msra.mxu0 0
    %554 = vmatprep.subr.bf16.mxu0 0
    %555 = vmatpush1.bf16.msra.mxu0 0
    %556 = vmatprep.subr.bf16.mxu0 0
    %557 = vmatpush1.bf16.msra.mxu0 0
    %558 = vmatprep.subr.bf16.mxu0 0
    %559 = vmatpush1.bf16.msra.mxu0 0
    %560 = vmatprep.mubr.bf16.mxu0 %v526
    %561 = vmatmul.mubr.bf16.gmra.mrb[0].mxu0 %v462
    %v562 = vpop.f32.mrb[0].mxu0
    %v563 = vadd.f32 0.0, %v562
    %v564 = vpop.f32.mrb[0].mxu0
    %v565 = vpop.f32.mrb[0].mxu0
    %v566 = vadd.f32 0.0, %v565
    %v567 = vpop.f32.mrb[0].mxu0
    %568 = vdwg.mxu0
    %v569 = vadd.f32 %v431, %v563
    %v570 = vadd.f32 %v432, %v566
    %v571 = vld [vmem:[%s0 + $0x10] sm:$0xff]
    %v572 = vld [vmem:[%s0 + $0x18] sm:$0xff]
    %s573 = scalar_lea.vmem %s1, 320
    %v574 = vld [vmem:[%s573] sm:$0xf]
    %v575 = vld [vmem:[%s573 + $0x4] sm:$0xf]
    %v576 = vld [vmem:[%s573 + $0x8] sm:$0xf]
    %v577 = vld [vmem:[%s573 + $0xc] sm:$0xf]
    %v578 = vld [vmem:[%s573 + $0x10] sm:$0xf]
    %v579 = vld [vmem:[%s573 + $0x14] sm:$0xf]
    %v580 = vld [vmem:[%s573 + $0x18] sm:$0xf]
    %v581 = vld [vmem:[%s573 + $0x1c] sm:$0xf]
    %v582 = vld [vmem:[%s573 + $0x20] sm:$0xf]
    %v583 = vld [vmem:[%s573 + $0x24] sm:$0xf]
    %v584 = vld [vmem:[%s573 + $0x28] sm:$0xf]
    %v585 = vld [vmem:[%s573 + $0x2c] sm:$0xf]
    %v586 = vld [vmem:[%s573 + $0x30] sm:$0xf]
    %v587 = vld [vmem:[%s573 + $0x34] sm:$0xf]
    %v588 = vld [vmem:[%s573 + $0x38] sm:$0xf]
    %v589 = vld [vmem:[%s573 + $0x3c] sm:$0xf]
    %v590 = vld [vmem:[%s573 + $0x40] sm:$0xf]
    %v591 = vld [vmem:[%s573 + $0x44] sm:$0xf]
    %v592 = vld [vmem:[%s573 + $0x48] sm:$0xf]
    %v593 = vld [vmem:[%s573 + $0x4c] sm:$0xf]
    %v596 = vunpack.c.l.b16 %v571
    %v597 = vunpack.c.h.b16 %v571
    %v598 = vunpack.c.l.b16 %v572
    %v599 = vunpack.c.h.b16 %v572
    %v600 = vpack.c.b16 %v598, %v596
    %v601 = vpack.c.b16 %v599, %v597
    %v623 = vunpack.c.l.b16 %v574
    %v624 = vunpack.c.l.b16 %v575
    %v625 = vunpack.c.l.b16 %v576
    %v626 = vunpack.c.l.b16 %v577
    %v627 = vunpack.c.l.b16 %v578
    %v628 = vunpack.c.l.b16 %v579
    %v629 = vunpack.c.l.b16 %v580
    %v630 = vunpack.c.l.b16 %v581
    %v631 = vunpack.c.l.b16 %v582
    %v632 = vunpack.c.l.b16 %v583
    %v633 = vunpack.c.l.b16 %v584
    %v634 = vunpack.c.l.b16 %v585
    %v635 = vunpack.c.l.b16 %v586
    %v636 = vunpack.c.l.b16 %v587
    %v637 = vunpack.c.l.b16 %v588
    %v638 = vunpack.c.l.b16 %v589
    %v639 = vunpack.c.l.b16 %v590
    %v640 = vunpack.c.l.b16 %v591
    %v641 = vunpack.c.l.b16 %v592
    %v642 = vunpack.c.l.b16 %v593
    %v643 = vpack.c.b16 %v624, %v623
    %v644 = vpack.c.b16 %v626, %v625
    %v645 = vpack.c.b16 %v628, %v627
    %v646 = vpack.c.b16 %v630, %v629
    %v647 = vpack.c.b16 %v632, %v631
    %v648 = vpack.c.b16 %v634, %v633
    %v649 = vpack.c.b16 %v636, %v635
    %v650 = vpack.c.b16 %v638, %v637
    %v651 = vpack.c.b16 %v640, %v639
    %v652 = vpack.c.b16 %v642, %v641
    %v664 = vsel %vm137, %v601, 0
    %666 = vmatprep.subr.bf16.mxu0 0
    %667 = vmatpush1.bf16.msra.mxu0 %v643
    %668 = vmatprep.subr.bf16.mxu0 0
    %669 = vmatpush1.bf16.msra.mxu0 %v644
    %670 = vmatprep.subr.bf16.mxu0 0
    %671 = vmatpush1.bf16.msra.mxu0 %v645
    %672 = vmatprep.subr.bf16.mxu0 0
    %673 = vmatpush1.bf16.msra.mxu0 %v646
    %674 = vmatprep.subr.bf16.mxu0 0
    %675 = vmatpush1.bf16.msra.mxu0 %v647
    %676 = vmatprep.subr.bf16.mxu0 0
    %677 = vmatpush1.bf16.msra.mxu0 %v648
    %678 = vmatprep.subr.bf16.mxu0 0
    %679 = vmatpush1.bf16.msra.mxu0 %v649
    %680 = vmatprep.subr.bf16.mxu0 0
    %681 = vmatpush1.bf16.msra.mxu0 %v650
    %682 = vmatprep.subr.bf16.mxu0 0
    %683 = vmatpush1.bf16.msra.mxu0 %v651
    %684 = vmatprep.subr.bf16.mxu0 0
    %685 = vmatpush1.bf16.msra.mxu0 %v652
    %686 = vmatprep.subr.bf16.mxu0 0
    %687 = vmatpush1.bf16.msra.mxu0 0
    %688 = vmatprep.subr.bf16.mxu0 0
    %689 = vmatpush1.bf16.msra.mxu0 0
    %690 = vmatprep.subr.bf16.mxu0 0
    %691 = vmatpush1.bf16.msra.mxu0 0
    %692 = vmatprep.subr.bf16.mxu0 0
    %693 = vmatpush1.bf16.msra.mxu0 0
    %694 = vmatprep.subr.bf16.mxu0 0
    %695 = vmatpush1.bf16.msra.mxu0 0
    %696 = vmatprep.subr.bf16.mxu0 0
    %697 = vmatpush1.bf16.msra.mxu0 0
    %698 = vmatprep.mubr.bf16.mxu0 %v664
    %699 = vmatmul.mubr.bf16.gmra.mrb[0].mxu0 %v600
    %v700 = vpop.f32.mrb[0].mxu0
    %v701 = vadd.f32 0.0, %v700
    %v702 = vpop.f32.mrb[0].mxu0
    %v703 = vpop.f32.mrb[0].mxu0
    %v704 = vadd.f32 0.0, %v703
    %v705 = vpop.f32.mrb[0].mxu0
    %706 = vdwg.mxu0
    %v707 = vadd.f32 %v569, %v701
    %v708 = vadd.f32 %v570, %v704
    %v709 = vadd.f32 %v707, %v708
    %v710 = vrot.slane %v709, 4
    %v711 = vadd.f32 %v709, %v710
    %v712 = vrot.slane %v711, 2
    %v713 = vadd.f32 %v711, %v712
    %v714 = vrot.slane %v713, 1
    %v715 = vadd.f32 %v713, %v714
    %v716 = vmul.f32 %v707, %v707
    %v717 = vmul.f32 %v708, %v708
    %v718 = vadd.f32 %v716, %v717
    %v719 = vrot.slane %v718, 4
    %v720 = vadd.f32 %v718, %v719
    %v721 = vrot.slane %v720, 2
    %v722 = vadd.f32 %v720, %v721
    %v723 = vrot.slane %v722, 1
    %v724 = vadd.f32 %v722, %v723
    %v725 = vmul.f32 %v715, 0.125
    %v726 = vmul.f32 %v724, 0.125
    %v727 = vmul.f32 %v725, %v725
    %v728 = vsub.f32 %v726, %v727
    %v729 = vmax.f32 %v728, 0.0
    %v730 = vld [vmem:[%s2] sm:$0x1]
    %v731 = vadd.f32 %v729, 1e-05
    %v732 = vrsqrt.pop %v731
    %v733 = vmul.f32 %v730, %v732
    %v734 = vld [vmem:[%s2 + $0x1] sm:$0x1]
    %v735 = vmul.f32 %v725, %v733
    %v736 = vsub.f32 %v734, %v735
    %v737 = vlaneseq
    %v738 = vshrl.u32 %v737, 7
    %v739 = vsub.s32 0, %v738
    %v740 = vrot.slane %v733, %v739
    %v741 = vmul.f32 %v707, %v740
    %v742 = vmul.f32 %v708, %v740
    %v743 = vlaneseq
    %v744 = vshrl.u32 %v743, 7
    %v745 = vsub.s32 0, %v744
    %v746 = vrot.slane %v736, %v745
    %v747 = vadd.f32 %v741, %v746
    %v748 = vadd.f32 %v742, %v746
    %v749 = vmax.f32 %v747, 0.0
    %v750 = vmax.f32 %v748, 0.0
    %v751 = vpack.c.bf16 %v750, %v749
    %v752 = vld [vmem:[%s3] sm:$0xf]
    %v753 = vld [vmem:[%s3 + $0x4] sm:$0xf]
    %v754 = vld [vmem:[%s3 + $0x8] sm:$0xf]
    %v755 = vld [vmem:[%s3 + $0xc] sm:$0xf]
    %v756 = vld [vmem:[%s3 + $0x10] sm:$0xf]
    %v757 = vld [vmem:[%s3 + $0x14] sm:$0xf]
    %v758 = vld [vmem:[%s3 + $0x18] sm:$0xf]
    %v759 = vld [vmem:[%s3 + $0x1c] sm:$0xf]
    %v760 = vld [vmem:[%s3 + $0x20] sm:$0xf]
    %v761 = vld [vmem:[%s3 + $0x24] sm:$0xf]
    %v762 = vld [vmem:[%s3 + $0x28] sm:$0xf]
    %v763 = vld [vmem:[%s3 + $0x2c] sm:$0xf]
    %v764 = vld [vmem:[%s3 + $0x30] sm:$0xf]
    %v765 = vld [vmem:[%s3 + $0x34] sm:$0xf]
    %v766 = vld [vmem:[%s3 + $0x38] sm:$0xf]
    %v767 = vld [vmem:[%s3 + $0x3c] sm:$0xf]
    %s768 = scalar_lea.vmem %s3, 64
    %v769 = vld [vmem:[%s768] sm:$0xf]
    %v770 = vld [vmem:[%s768 + $0x4] sm:$0xf]
    %v771 = vld [vmem:[%s768 + $0x8] sm:$0xf]
    %v772 = vld [vmem:[%s768 + $0xc] sm:$0xf]
    %v773 = vld [vmem:[%s768 + $0x10] sm:$0xf]
    %v774 = vld [vmem:[%s768 + $0x14] sm:$0xf]
    %v775 = vld [vmem:[%s768 + $0x18] sm:$0xf]
    %v776 = vld [vmem:[%s768 + $0x1c] sm:$0xf]
    %v777 = vld [vmem:[%s768 + $0x20] sm:$0xf]
    %v778 = vld [vmem:[%s768 + $0x24] sm:$0xf]
    %v779 = vld [vmem:[%s768 + $0x28] sm:$0xf]
    %v780 = vld [vmem:[%s768 + $0x2c] sm:$0xf]
    %v781 = vld [vmem:[%s768 + $0x30] sm:$0xf]
    %v782 = vld [vmem:[%s768 + $0x34] sm:$0xf]
    %v783 = vld [vmem:[%s768 + $0x38] sm:$0xf]
    %v784 = vld [vmem:[%s768 + $0x3c] sm:$0xf]
    %v786 = vrot.slane %v751, 1
    %v804 = vunpack.c.l.b16 %v769
    %v805 = vunpack.c.l.b16 %v770
    %v806 = vunpack.c.l.b16 %v771
    %v807 = vunpack.c.l.b16 %v772
    %v808 = vunpack.c.l.b16 %v773
    %v809 = vunpack.c.l.b16 %v774
    %v810 = vunpack.c.l.b16 %v775
    %v811 = vunpack.c.l.b16 %v776
    %v812 = vunpack.c.l.b16 %v777
    %v813 = vunpack.c.l.b16 %v778
    %v814 = vunpack.c.l.b16 %v779
    %v815 = vunpack.c.l.b16 %v780
    %v816 = vunpack.c.l.b16 %v781
    %v817 = vunpack.c.l.b16 %v782
    %v818 = vunpack.c.l.b16 %v783
    %v819 = vunpack.c.l.b16 %v784
    %v820 = vpack.c.b16 %v805, %v804
    %v821 = vpack.c.b16 %v807, %v806
    %v822 = vpack.c.b16 %v809, %v808
    %v823 = vpack.c.b16 %v811, %v810
    %v824 = vpack.c.b16 %v813, %v812
    %v825 = vpack.c.b16 %v815, %v814
    %v826 = vpack.c.b16 %v817, %v816
    %v827 = vpack.c.b16 %v819, %v818
    %836 = vmatprep.subr.bf16.mxu0 0
    %837 = vmatpush1.bf16.msra.mxu0 %v820
    %838 = vmatprep.subr.bf16.mxu0 0
    %839 = vmatpush1.bf16.msra.mxu0 %v821
    %840 = vmatprep.subr.bf16.mxu0 0
    %841 = vmatpush1.bf16.msra.mxu0 %v822
    %842 = vmatprep.subr.bf16.mxu0 0
    %843 = vmatpush1.bf16.msra.mxu0 %v823
    %844 = vmatprep.subr.bf16.mxu0 0
    %845 = vmatpush1.bf16.msra.mxu0 %v824
    %846 = vmatprep.subr.bf16.mxu0 0
    %847 = vmatpush1.bf16.msra.mxu0 %v825
    %848 = vmatprep.subr.bf16.mxu0 0
    %849 = vmatpush1.bf16.msra.mxu0 %v826
    %850 = vmatprep.subr.bf16.mxu0 0
    %851 = vmatpush1.bf16.msra.mxu0 %v827
    %852 = vmatprep.subr.bf16.mxu0 0
    %853 = vmatpush1.bf16.msra.mxu0 0
    %854 = vmatprep.subr.bf16.mxu0 0
    %855 = vmatpush1.bf16.msra.mxu0 0
    %856 = vmatprep.subr.bf16.mxu0 0
    %857 = vmatpush1.bf16.msra.mxu0 0
    %858 = vmatprep.subr.bf16.mxu0 0
    %859 = vmatpush1.bf16.msra.mxu0 0
    %860 = vmatprep.subr.bf16.mxu0 0
    %861 = vmatpush1.bf16.msra.mxu0 0
    %862 = vmatprep.subr.bf16.mxu0 0
    %863 = vmatpush1.bf16.msra.mxu0 0
    %864 = vmatprep.subr.bf16.mxu0 0
    %865 = vmatpush1.bf16.msra.mxu0 0
    %866 = vmatprep.subr.bf16.mxu0 0
    %867 = vmatpush1.bf16.msra.mxu0 0
    %868 = vmatprep.mubr.bf16.mxu0 0
    %869 = vmatmul.mubr.bf16.gmra.mrb[0].mxu0 %v786
    %v870 = vpop.f32.mrb[0].mxu0
    %v871 = vadd.f32 0.0, %v870
    %v872 = vpop.f32.mrb[0].mxu0
    %v873 = vpop.f32.mrb[0].mxu0
    %v874 = vpop.f32.mrb[0].mxu0
    %875 = vdwg.mxu0
    %v892 = vunpack.c.l.b16 %v752
    %v893 = vunpack.c.l.b16 %v753
    %v894 = vunpack.c.l.b16 %v754
    %v895 = vunpack.c.l.b16 %v755
    %v896 = vunpack.c.l.b16 %v756
    %v897 = vunpack.c.l.b16 %v757
    %v898 = vunpack.c.l.b16 %v758
    %v899 = vunpack.c.l.b16 %v759
    %v900 = vunpack.c.l.b16 %v760
    %v901 = vunpack.c.l.b16 %v761
    %v902 = vunpack.c.l.b16 %v762
    %v903 = vunpack.c.l.b16 %v763
    %v904 = vunpack.c.l.b16 %v764
    %v905 = vunpack.c.l.b16 %v765
    %v906 = vunpack.c.l.b16 %v766
    %v907 = vunpack.c.l.b16 %v767
    %v908 = vpack.c.b16 %v893, %v892
    %v909 = vpack.c.b16 %v895, %v894
    %v910 = vpack.c.b16 %v897, %v896
    %v911 = vpack.c.b16 %v899, %v898
    %v912 = vpack.c.b16 %v901, %v900
    %v913 = vpack.c.b16 %v903, %v902
    %v914 = vpack.c.b16 %v905, %v904
    %v915 = vpack.c.b16 %v907, %v906
    %924 = vmatprep.subr.bf16.mxu0 0
    %925 = vmatpush1.bf16.msra.mxu0 %v908
    %926 = vmatprep.subr.bf16.mxu0 0
    %927 = vmatpush1.bf16.msra.mxu0 %v909
    %928 = vmatprep.subr.bf16.mxu0 0
    %929 = vmatpush1.bf16.msra.mxu0 %v910
    %930 = vmatprep.subr.bf16.mxu0 0
    %931 = vmatpush1.bf16.msra.mxu0 %v911
    %932 = vmatprep.subr.bf16.mxu0 0
    %933 = vmatpush1.bf16.msra.mxu0 %v912
    %934 = vmatprep.subr.bf16.mxu0 0
    %935 = vmatpush1.bf16.msra.mxu0 %v913
    %936 = vmatprep.subr.bf16.mxu0 0
    %937 = vmatpush1.bf16.msra.mxu0 %v914
    %938 = vmatprep.subr.bf16.mxu0 0
    %939 = vmatpush1.bf16.msra.mxu0 %v915
    %940 = vmatprep.subr.bf16.mxu0 0
    %941 = vmatpush1.bf16.msra.mxu0 0
    %942 = vmatprep.subr.bf16.mxu0 0
    %943 = vmatpush1.bf16.msra.mxu0 0
    %944 = vmatprep.subr.bf16.mxu0 0
    %945 = vmatpush1.bf16.msra.mxu0 0
    %946 = vmatprep.subr.bf16.mxu0 0
    %947 = vmatpush1.bf16.msra.mxu0 0
    %948 = vmatprep.subr.bf16.mxu0 0
    %949 = vmatpush1.bf16.msra.mxu0 0
    %950 = vmatprep.subr.bf16.mxu0 0
    %951 = vmatpush1.bf16.msra.mxu0 0
    %952 = vmatprep.subr.bf16.mxu0 0
    %953 = vmatpush1.bf16.msra.mxu0 0
    %954 = vmatprep.subr.bf16.mxu0 0
    %955 = vmatpush1.bf16.msra.mxu0 0
    %956 = vmatprep.mubr.bf16.mxu0 0
    %957 = vmatmul.mubr.bf16.gmra.mrb[0].mxu0 %v751
    %v958 = vpop.f32.mrb[0].mxu0
    %v959 = vadd.f32 %v871, %v958
    %v960 = vpop.f32.mrb[0].mxu0
    %v961 = vpop.f32.mrb[0].mxu0
    %v962 = vpop.f32.mrb[0].mxu0
    %963 = vdwg.mxu0
    %s964 = scalar_lea.vmem %s3, 128
    %v965 = vld [vmem:[%s964] sm:$0xf]
    %v966 = vld [vmem:[%s964 + $0x4] sm:$0xf]
    %v967 = vld [vmem:[%s964 + $0x8] sm:$0xf]
    %v968 = vld [vmem:[%s964 + $0xc] sm:$0xf]
    %v969 = vld [vmem:[%s964 + $0x10] sm:$0xf]
    %v970 = vld [vmem:[%s964 + $0x14] sm:$0xf]
    %v971 = vld [vmem:[%s964 + $0x18] sm:$0xf]
    %v972 = vld [vmem:[%s964 + $0x1c] sm:$0xf]
    %v973 = vld [vmem:[%s964 + $0x20] sm:$0xf]
    %v974 = vld [vmem:[%s964 + $0x24] sm:$0xf]
    %v975 = vld [vmem:[%s964 + $0x28] sm:$0xf]
    %v976 = vld [vmem:[%s964 + $0x2c] sm:$0xf]
    %v977 = vld [vmem:[%s964 + $0x30] sm:$0xf]
    %v978 = vld [vmem:[%s964 + $0x34] sm:$0xf]
    %v979 = vld [vmem:[%s964 + $0x38] sm:$0xf]
    %v980 = vld [vmem:[%s964 + $0x3c] sm:$0xf]
    %v981 = vrot.slane %v751, 4
    %v999 = vunpack.c.l.b16 %v965
    %v1000 = vunpack.c.l.b16 %v966
    %v1001 = vunpack.c.l.b16 %v967
    %v1002 = vunpack.c.l.b16 %v968
    %v1003 = vunpack.c.l.b16 %v969
    %v1004 = vunpack.c.l.b16 %v970
    %v1005 = vunpack.c.l.b16 %v971
    %v1006 = vunpack.c.l.b16 %v972
    %v1007 = vunpack.c.l.b16 %v973
    %v1008 = vunpack.c.l.b16 %v974
    %v1009 = vunpack.c.l.b16 %v975
    %v1010 = vunpack.c.l.b16 %v976
    %v1011 = vunpack.c.l.b16 %v977
    %v1012 = vunpack.c.l.b16 %v978
    %v1013 = vunpack.c.l.b16 %v979
    %v1014 = vunpack.c.l.b16 %v980
    %v1015 = vpack.c.b16 %v1000, %v999
    %v1016 = vpack.c.b16 %v1002, %v1001
    %v1017 = vpack.c.b16 %v1004, %v1003
    %v1018 = vpack.c.b16 %v1006, %v1005
    %v1019 = vpack.c.b16 %v1008, %v1007
    %v1020 = vpack.c.b16 %v1010, %v1009
    %v1021 = vpack.c.b16 %v1012, %v1011
    %v1022 = vpack.c.b16 %v1014, %v1013
    %1031 = vmatprep.subr.bf16.mxu0 0
    %1032 = vmatpush1.bf16.msra.mxu0 %v1015
    %1033 = vmatprep.subr.bf16.mxu0 0
    %1034 = vmatpush1.bf16.msra.mxu0 %v1016
    %1035 = vmatprep.subr.bf16.mxu0 0
    %1036 = vmatpush1.bf16.msra.mxu0 %v1017
    %1037 = vmatprep.subr.bf16.mxu0 0
    %1038 = vmatpush1.bf16.msra.mxu0 %v1018
    %1039 = vmatprep.subr.bf16.mxu0 0
    %1040 = vmatpush1.bf16.msra.mxu0 %v1019
    %1041 = vmatprep.subr.bf16.mxu0 0
    %1042 = vmatpush1.bf16.msra.mxu0 %v1020
    %1043 = vmatprep.subr.bf16.mxu0 0
    %1044 = vmatpush1.bf16.msra.mxu0 %v1021
    %1045 = vmatprep.subr.bf16.mxu0 0
    %1046 = vmatpush1.bf16.msra.mxu0 %v1022
    %1047 = vmatprep.subr.bf16.mxu0 0
    %1048 = vmatpush1.bf16.msra.mxu0 0
    %1049 = vmatprep.subr.bf16.mxu0 0
    %1050 = vmatpush1.bf16.msra.mxu0 0
    %1051 = vmatprep.subr.bf16.mxu0 0
    %1052 = vmatpush1.bf16.msra.mxu0 0
    %1053 = vmatprep.subr.bf16.mxu0 0
    %1054 = vmatpush1.bf16.msra.mxu0 0
    %1055 = vmatprep.subr.bf16.mxu0 0
    %1056 = vmatpush1.bf16.msra.mxu0 0
    %1057 = vmatprep.subr.bf16.mxu0 0
    %1058 = vmatpush1.bf16.msra.mxu0 0
    %1059 = vmatprep.subr.bf16.mxu0 0
    %1060 = vmatpush1.bf16.msra.mxu0 0
    %1061 = vmatprep.subr.bf16.mxu0 0
    %1062 = vmatpush1.bf16.msra.mxu0 0
    %1063 = vmatprep.mubr.bf16.mxu0 0
    %1064 = vmatmul.mubr.bf16.gmra.mrb[0].mxu0 %v981
    %v1065 = vpop.f32.mrb[0].mxu0
    %v1066 = vadd.f32 0.0, %v1065
    %v1067 = vpop.f32.mrb[0].mxu0
    %v1068 = vpop.f32.mrb[0].mxu0
    %v1069 = vpop.f32.mrb[0].mxu0
    %1070 = vdwg.mxu0
    %v1071 = vadd.f32 %v959, %v1066
    %s1072 = scalar_lea.vmem %s3, 192
    %v1073 = vld [vmem:[%s1072] sm:$0xf]
    %v1074 = vld [vmem:[%s1072 + $0x4] sm:$0xf]
    %v1075 = vld [vmem:[%s1072 + $0x8] sm:$0xf]
    %v1076 = vld [vmem:[%s1072 + $0xc] sm:$0xf]
    %v1077 = vld [vmem:[%s1072 + $0x10] sm:$0xf]
    %v1078 = vld [vmem:[%s1072 + $0x14] sm:$0xf]
    %v1079 = vld [vmem:[%s1072 + $0x18] sm:$0xf]
    %v1080 = vld [vmem:[%s1072 + $0x1c] sm:$0xf]
    %v1081 = vld [vmem:[%s1072 + $0x20] sm:$0xf]
    %v1082 = vld [vmem:[%s1072 + $0x24] sm:$0xf]
    %v1083 = vld [vmem:[%s1072 + $0x28] sm:$0xf]
    %v1084 = vld [vmem:[%s1072 + $0x2c] sm:$0xf]
    %v1085 = vld [vmem:[%s1072 + $0x30] sm:$0xf]
    %v1086 = vld [vmem:[%s1072 + $0x34] sm:$0xf]
    %v1087 = vld [vmem:[%s1072 + $0x38] sm:$0xf]
    %v1088 = vld [vmem:[%s1072 + $0x3c] sm:$0xf]
    %v1089 = vrot.slane %v751, 5
    %v1107 = vunpack.c.l.b16 %v1073
    %v1108 = vunpack.c.l.b16 %v1074
    %v1109 = vunpack.c.l.b16 %v1075
    %v1110 = vunpack.c.l.b16 %v1076
    %v1111 = vunpack.c.l.b16 %v1077
    %v1112 = vunpack.c.l.b16 %v1078
    %v1113 = vunpack.c.l.b16 %v1079
    %v1114 = vunpack.c.l.b16 %v1080
    %v1115 = vunpack.c.l.b16 %v1081
    %v1116 = vunpack.c.l.b16 %v1082
    %v1117 = vunpack.c.l.b16 %v1083
    %v1118 = vunpack.c.l.b16 %v1084
    %v1119 = vunpack.c.l.b16 %v1085
    %v1120 = vunpack.c.l.b16 %v1086
    %v1121 = vunpack.c.l.b16 %v1087
    %v1122 = vunpack.c.l.b16 %v1088
    %v1123 = vpack.c.b16 %v1108, %v1107
    %v1124 = vpack.c.b16 %v1110, %v1109
    %v1125 = vpack.c.b16 %v1112, %v1111
    %v1126 = vpack.c.b16 %v1114, %v1113
    %v1127 = vpack.c.b16 %v1116, %v1115
    %v1128 = vpack.c.b16 %v1118, %v1117
    %v1129 = vpack.c.b16 %v1120, %v1119
    %v1130 = vpack.c.b16 %v1122, %v1121
    %1139 = vmatprep.subr.bf16.mxu0 0
    %1140 = vmatpush1.bf16.msra.mxu0 %v1123
    %1141 = vmatprep.subr.bf16.mxu0 0
    %1142 = vmatpush1.bf16.msra.mxu0 %v1124
    %1143 = vmatprep.subr.bf16.mxu0 0
    %1144 = vmatpush1.bf16.msra.mxu0 %v1125
    %1145 = vmatprep.subr.bf16.mxu0 0
    %1146 = vmatpush1.bf16.msra.mxu0 %v1126
    %1147 = vmatprep.subr.bf16.mxu0 0
    %1148 = vmatpush1.bf16.msra.mxu0 %v1127
    %1149 = vmatprep.subr.bf16.mxu0 0
    %1150 = vmatpush1.bf16.msra.mxu0 %v1128
    %1151 = vmatprep.subr.bf16.mxu0 0
    %1152 = vmatpush1.bf16.msra.mxu0 %v1129
    %1153 = vmatprep.subr.bf16.mxu0 0
    %1154 = vmatpush1.bf16.msra.mxu0 %v1130
    %1155 = vmatprep.subr.bf16.mxu0 0
    %1156 = vmatpush1.bf16.msra.mxu0 0
    %1157 = vmatprep.subr.bf16.mxu0 0
    %1158 = vmatpush1.bf16.msra.mxu0 0
    %1159 = vmatprep.subr.bf16.mxu0 0
    %1160 = vmatpush1.bf16.msra.mxu0 0
    %1161 = vmatprep.subr.bf16.mxu0 0
    %1162 = vmatpush1.bf16.msra.mxu0 0
    %1163 = vmatprep.subr.bf16.mxu0 0
    %1164 = vmatpush1.bf16.msra.mxu0 0
    %1165 = vmatprep.subr.bf16.mxu0 0
    %1166 = vmatpush1.bf16.msra.mxu0 0
    %1167 = vmatprep.subr.bf16.mxu0 0
    %1168 = vmatpush1.bf16.msra.mxu0 0
    %1169 = vmatprep.subr.bf16.mxu0 0
    %1170 = vmatpush1.bf16.msra.mxu0 0
    %1171 = vmatprep.mubr.bf16.mxu0 0
    %1172 = vmatmul.mubr.bf16.gmra.mrb[0].mxu0 %v1089
    %v1173 = vpop.f32.mrb[0].mxu0
    %v1174 = vadd.f32 0.0, %v1173
    %v1175 = vpop.f32.mrb[0].mxu0
    %v1176 = vpop.f32.mrb[0].mxu0
    %v1177 = vpop.f32.mrb[0].mxu0
    %1178 = vdwg.mxu0
    %v1179 = vadd.f32 %v1071, %v1174
    %v1180 = vld [vmem:[%s4] sm:$0x1]
    %v1182 = vlaneseq
    %v1183 = vshrl.u32 %v1182, 7
    %v1184 = vsub.s32 0, %v1183
    %v1185 = vrot.slane %v1180, %v1184
    %v1187 = vadd.f32 %v1179, %v1185
    %1188 = vst [vmem:[#allocation2] sm:$0x3] %v1187
    // Predicated region
    $region22: #{dqn_forward.7} parent=1 // pred_check
      _
    $region23: #{dqn_forward.7} parent=1 // pred_check_branch
      %1190 = sbr.rel (0) target = $region25
    $region24: #{dqn_forward.7} parent=1 // pred_region
      %s1192 = ssub.s32 32, 32
      %1193 = vsyncadd [#allocation3], %s1192
      %s1195 = sshll.u32 [#allocation2], 4
      %s1196 = int_to_ptr.vmem [resolvable:$true] %s1195
      %1198 = dma.vmem_to_hbm [thread:$0]  %s1196, 32, %s5, [#allocation3]
    $region25: #{dqn_forward.7} parent=1 // pred_fallthru
      _
    // Predicated region
    $region26: #{dqn_forward.7} parent=1 // pred_check
      _
    $region27: #{dqn_forward.7} parent=1 // pred_check_branch
      %1200 = sbr.rel (0) target = $region29
    $region28: #{dqn_forward.7} parent=1 // pred_region
      %1201 = dma.done [#allocation3], 32
    $region29: #{dqn_forward.7} parent=1 // pred_fallthru
      _
    %1202 = vsyncpa [#allocation3], 1

</llo_original>
